<compile_context>
chip_gen: v7x
topology: tpu7x:2x2x1
jax: 0.10.0
libtpu: 0.0.40
codegen_flags: <defaults>
</compile_context>

<pallas_src>
import math
from functools import partial

import jax
import jax.numpy as jnp
import numpy as np
from jax.experimental import pallas as pl
from jax.experimental.pallas import tpu as pltpu


# ----------------------------------------------------------------------------
# Shared helpers
# ----------------------------------------------------------------------------
def _layer_norm(x, g, b, eps=1e-5):
    mu = jnp.mean(x, axis=-1, keepdims=True)
    var = jnp.mean(jnp.square(x - mu), axis=-1, keepdims=True)
    return (x - mu) * jax.lax.rsqrt(var + eps) * g + b


# ----------------------------------------------------------------------------
# Kernel 1: patch embedding  (patches @ W + b) — Conv2d(stride=patch) as matmul
# ----------------------------------------------------------------------------
def _patch_embed_kernel(p_ref, w_ref, b_ref, o_ref):
    acc = jnp.dot(p_ref[...], w_ref[...], preferred_element_type=jnp.float32)
    o_ref[...] = (acc + b_ref[...]).astype(o_ref.dtype)


def patch_embed(patches_bf16, w_bf16, b):
    rows, pdim = patches_bf16.shape
    e = w_bf16.shape[1]
    # Large row tiles keep the MXU M dimension full and patch_embed is purely
    # HBM-bandwidth bound (512-row tiles ~85% of roofline); cdiv grid handles tails.
    if rows >= 512:
        block_rows = 512
    elif rows >= 256:
        block_rows = 256
    else:
        block_rows = rows
    return pl.pallas_call(
        _patch_embed_kernel,
        out_shape=jax.ShapeDtypeStruct((rows, e), jnp.float32),
        grid=(pl.cdiv(rows, block_rows),),
        in_specs=[
            pl.BlockSpec((block_rows, pdim), lambda i: (i, 0)),
            pl.BlockSpec((pdim, e), lambda i: (0, 0)),
            pl.BlockSpec((1, e), lambda i: (0, 0)),
        ],
        out_specs=pl.BlockSpec((block_rows, e), lambda i: (i, 0)),
        compiler_params=pltpu.CompilerParams(dimension_semantics=("parallel",)),
    )(patches_bf16, w_bf16, b.reshape(1, e))


# ----------------------------------------------------------------------------
# Kernel 2: fused encoder stack — all L pre-norm TransformerEncoderLayers in
# one pallas_call.  grid=(B//Bt, L); residual stream stays in VMEM across l.
# ----------------------------------------------------------------------------
def _encoder_stack_kernel(embed, heads, bt, sp_len, s_real,
                          x_ref, g1_ref, b1_ref, wqkv_ref, bqkv_ref,
                          wo_ref, bo_ref, g2_ref, b2_ref,
                          w1_ref, fb1_ref, w2_ref, fb2_ref, o_ref):
    l = pl.program_id(1)
    dh = embed // heads
    bf16 = jnp.bfloat16
    scale = 1.0 / math.sqrt(dh)
    rows = bt * sp_len

    # Initialize the VMEM-resident residual stream from the input on layer 0.
    @pl.when(l == 0)
    def _():
        o_ref[...] = x_ref[...]

    # Flatten Bt sequences into one (Bt*Sp, E) slab: Sp % 8 == 0 so this is a
    # layout-trivial leading-dim merge; all dense matmuls get a full MXU M.
    x = o_ref[...].reshape(rows, embed)                      # f32 residual

    # --- self-attention block (pre-norm) ---
    h = _layer_norm(x, g1_ref[0], b1_ref[0])
    qkv = jnp.dot(h.astype(bf16), wqkv_ref[0],
                  preferred_element_type=jnp.float32) + bqkv_ref[0]   # (Bt*Sp, 3E)

    # Fold 1/sqrt(dh) into q (f32) before the bf16 cast: far fewer mults than
    # scaling the (Sp, Sp) score matrix.
    q3 = (qkv[:, :embed] * scale).reshape(bt, sp_len, embed)
    kv3 = qkv[:, embed:].reshape(bt, sp_len, 2 * embed)

    def split_heads(t3, off):
        # Lane-offset slices + leading-dim reshape only (no minor-dim-splitting
        # reshape, which Mosaic may not lower).  (Bt, Sp, *) -> (Bt*H, Sp, dh).
        parts = [t3[:, :, off + hh * dh: off + (hh + 1) * dh]
                 for hh in range(heads)]
        return jnp.stack(parts, axis=1).reshape(bt * heads, sp_len, dh)

    qh = split_heads(q3, 0).astype(bf16)
    kh = split_heads(kv3, 0).astype(bf16)
    vh = split_heads(kv3, embed).astype(bf16)

    # Single head/batch-batched contractions (one dot_general each).
    s = jnp.einsum('hqd,hkd->hqk', qh, kh,
                   preferred_element_type=jnp.float32)        # (Bt*H, Sp, Sp)
    if sp_len != s_real:
        # Mask the zero-padded key positions introduced by sublane alignment.
        kmask = jax.lax.broadcasted_iota(jnp.int32, (1, 1, sp_len), 2) < s_real
        s = jnp.where(kmask, s, -1e30)
    s = s - jnp.max(s, axis=-1, keepdims=True)
    e = jnp.exp(s)
    p = e * pl.reciprocal(jnp.sum(e, axis=-1, keepdims=True), approx=True)
    ctx = jnp.einsum('hqk,hkd->hqd', p.astype(bf16), vh,
                     preferred_element_type=jnp.float32)      # (Bt*H, Sp, dh)
    ctx4 = ctx.reshape(bt, heads, sp_len, dh)
    ctx2d = jnp.concatenate([ctx4[:, hh] for hh in range(heads)],
                            axis=-1).reshape(rows, embed)     # (Bt*Sp, E)

    attn = jnp.dot(ctx2d.astype(bf16), wo_ref[0],
                   preferred_element_type=jnp.float32) + bo_ref[0]
    x = x + attn

    # --- feed-forward block (pre-norm, relu) ---
    h2 = _layer_norm(x, g2_ref[0], b2_ref[0])
    f = jnp.dot(h2.astype(bf16), w1_ref[0],
                preferred_element_type=jnp.float32) + fb1_ref[0]
    f = jnp.maximum(f, 0.0)
    f = jnp.dot(f.astype(bf16), w2_ref[0],
                preferred_element_type=jnp.float32) + fb2_ref[0]

    o_ref[...] = (x + f).reshape(bt, sp_len, embed).astype(o_ref.dtype)


def encoder_stack(x, sp, embed, heads, s_real):
    B, Sp, E = x.shape
    L = sp['w1'].shape[0]
    ff = sp['w1'].shape[2]

    # Batch-block: largest divisor of B that is <= 8.  Bt sequences per grid
    # step fill the MXU M dimension and cut per-layer weight DMA by Bt x.
    bt = 1
    for cand in range(min(B, 8), 0, -1):
        if B % cand == 0:
            bt = cand
            break

    def wspec(shape):
        # per-layer parameter: leading L dim blocked to 1, indexed by l
        return pl.BlockSpec((1,) + shape, lambda b, l: (l,) + (0,) * len(shape))

    in_specs = [
        pl.BlockSpec((bt, Sp, E), lambda b, l: (b, 0, 0)),    # activations (per Bt)
        wspec((1, E)), wspec((1, E)),                         # ln1 gamma / beta
        wspec((E, 3 * E)), wspec((1, 3 * E)),                 # qkv proj
        wspec((E, E)), wspec((1, E)),                         # out proj
        wspec((1, E)), wspec((1, E)),                         # ln2 gamma / beta
        wspec((E, ff)), wspec((1, ff)),                       # ffn linear1
        wspec((ff, E)), wspec((1, E)),                        # ffn linear2
    ]
    args = (x,
            sp['ln1_g'], sp['ln1_b'],
            sp['wqkv'], sp['bqkv'],
            sp['wo'], sp['bo'],
            sp['ln2_g'], sp['ln2_b'],
            sp['w1'], sp['b1'],
            sp['w2'], sp['b2'])

    # Rough VMEM working set: double-buffered bf16 per-layer weights + f32
    # activations / attention intermediates.  Raise the scoped limit only when
    # it would exceed the conservative default.
    wbytes = 2 * 2 * (E * 3 * E + E * E + 2 * E * ff)
    abytes = 4 * bt * Sp * (6 * E + ff) + 4 * bt * heads * Sp * Sp
    need = wbytes + abytes
    vmem_limit = None
    if need > 28 * (1 << 20):
        # TODO(synk): production sizes (E=768, ff=3072) should additionally tile
        # the ff axis of w1/w2 with a VMEM accumulator (v7x physical VMEM 64 MiB).
        vmem_limit = min(int(need * 1.3), 64 * (1 << 20))

    return pl.pallas_call(
        partial(_encoder_stack_kernel, E, heads, bt, Sp, s_real),
        out_shape=jax.ShapeDtypeStruct((B, Sp, E), jnp.float32),
        grid=(B // bt, L),                                    # l innermost (arbitrary)
        in_specs=in_specs,
        out_specs=pl.BlockSpec((bt, Sp, E), lambda b, l: (b, 0, 0)),
        compiler_params=pltpu.CompilerParams(
            # NOTE: on v7x megacore, the "parallel" batch axis is sharded across
            # the 2 TensorCores, so each core re-streams the layer weights; keep
            # Bt large enough per core to amortize that DMA.
            dimension_semantics=("parallel", "arbitrary"),
            vmem_limit_bytes=vmem_limit),
    )(*args)


# ----------------------------------------------------------------------------
# Kernel 3: classifier head — LayerNorm(E) + Linear(E -> nc_padded) on CLS token
# ----------------------------------------------------------------------------
def _classifier_kernel(x_ref, g_ref, b_ref, w_ref, wb_ref, o_ref):
    h = _layer_norm(x_ref[...], g_ref[...], b_ref[...])
    o_ref[...] = (jnp.dot(h.astype(jnp.bfloat16), w_ref[...],
                          preferred_element_type=jnp.float32)
                  + wb_ref[...]).astype(o_ref.dtype)


def classifier_head(x_cls, g, b, w_pad_bf16, wb_pad):
    B, E = x_cls.shape
    ncp = w_pad_bf16.shape[1]                                 # lane-dense (mult of 128)
    br = 128 if B >= 128 else B
    return pl.pallas_call(
        _classifier_kernel,
        out_shape=jax.ShapeDtypeStruct((B, ncp), jnp.float32),
        grid=(pl.cdiv(B, br),),
        in_specs=[
            pl.BlockSpec((br, E), lambda i: (i, 0)),
            pl.BlockSpec((1, E), lambda i: (0, 0)),
            pl.BlockSpec((1, E), lambda i: (0, 0)),
            pl.BlockSpec((E, ncp), lambda i: (0, 0)),
            pl.BlockSpec((1, ncp), lambda i: (0, 0)),
        ],
        out_specs=pl.BlockSpec((br, ncp), lambda i: (i, 0)),
        compiler_params=pltpu.CompilerParams(dimension_semantics=("parallel",)),
    )(x_cls, g.reshape(1, E), b.reshape(1, E), w_pad_bf16, wb_pad.reshape(1, ncp))


# ----------------------------------------------------------------------------
# One-time parameter preparation (outside jit): stack layers, cast to bf16, pad
# ----------------------------------------------------------------------------
def prepare_params(params, cfg):
    E = cfg['embed_size']
    nc = cfg['num_classes']
    bf16 = jnp.bfloat16
    layers = params['layers']
    L = len(layers)
    st = lambda k: jnp.stack([lp[k] for lp in layers], axis=0)
    ff = layers[0]['w1_t'].shape[1]
    ncp = 128 * pl.cdiv(nc, 128)
    return {
        'class_embedding': params['class_embedding'],
        'position_embedding': params['position_embedding'],
        'patch_w': params['patch_w'].astype(bf16),
        'patch_b': params['patch_b'],
        'cls_ln_g': params['cls_ln_g'],
        'cls_ln_b': params['cls_ln_b'],
        'cls_w_pad': jnp.pad(params['cls_w_t'], ((0, 0), (0, ncp - nc))).astype(bf16),
        'cls_b_pad': jnp.pad(params['cls_b'], (0, ncp - nc)),
        'stack': {
            'ln1_g': st('ln1_g').reshape(L, 1, E),
            'ln1_b': st('ln1_b').reshape(L, 1, E),
            'wqkv': st('wqkv_t').astype(bf16),
            'bqkv': st('bqkv').reshape(L, 1, 3 * E),
            'wo': st('wo_t').astype(bf16),
            'bo': st('bo').reshape(L, 1, E),
            'ln2_g': st('ln2_g').reshape(L, 1, E),
            'ln2_b': st('ln2_b').reshape(L, 1, E),
            'w1': st('w1_t').astype(bf16),
            'b1': st('b1').reshape(L, 1, ff),
            'w2': st('w2_t').astype(bf16),
            'b2': st('b2').reshape(L, 1, E),
        },
    }


# ----------------------------------------------------------------------------
# Full forward (glue in plain JAX, compute in Pallas)
# ----------------------------------------------------------------------------
def vit_forward(prep, x, cfg):
    B = x.shape[0]
    p = cfg['patch_size']
    C = cfg['in_channels']
    Hp = cfg['img_size'] // p
    N = Hp * Hp
    E = cfg['embed_size']
    nc = cfg['num_classes']
    bf16 = jnp.bfloat16

    # patch extraction: NCHW -> (B*N, C*p*p), matching Conv2d weight flattening.
    # The transpose already materializes a fresh buffer, so write it as bf16:
    # halves the HBM write and the patch_embed input DMA (mem-bound kernel).
    xp = (x.reshape(B, C, Hp, p, Hp, p)
            .transpose(0, 2, 4, 1, 3, 5)
            .reshape(B * N, C * p * p)).astype(bf16)

    pe = patch_embed(xp, prep['patch_w'], prep['patch_b']).reshape(B, N, E)

    cls = jnp.broadcast_to(prep['class_embedding'], (B, 1, E))
    seq = jnp.concatenate([cls, pe], axis=1) + prep['position_embedding']
    # TODO(synk): embedding_dropout omitted (p=0.0 / eval mode -> identity).

    # Pad sequence length to a multiple of 8 (sublane-aligned); padded key
    # positions are masked inside the encoder kernel.
    S = N + 1
    Sp = 8 * pl.cdiv(S, 8)
    if Sp != S:
        seq = jnp.pad(seq, ((0, 0), (0, Sp - S), (0, 0)))

    seq = encoder_stack(seq, prep['stack'], E, cfg['n_heads'], S)

    # classifier head on the CLS token (index 0); num_classes padded to 128
    # for a lane-dense store, sliced back here.
    logits = classifier_head(seq[:, 0, :], prep['cls_ln_g'], prep['cls_ln_b'],
                             prep['cls_w_pad'], prep['cls_b_pad'])
    return logits[:, :nc]


# ----------------------------------------------------------------------------
# Pure-JAX f32 reference (same math, no Pallas) for numerical sanity check
# ----------------------------------------------------------------------------
def vit_reference(params, x, cfg):
    B = x.shape[0]
    p = cfg['patch_size']
    C = cfg['in_channels']
    Hp = cfg['img_size'] // p
    N = Hp * Hp
    E = cfg['embed_size']
    heads = cfg['n_heads']
    dh = E // heads

    xp = (x.reshape(B, C, Hp, p, Hp, p)
            .transpose(0, 2, 4, 1, 3, 5)
            .reshape(B, N, C * p * p))
    seq = xp @ params['patch_w'] + params['patch_b']
    cls = jnp.broadcast_to(params['class_embedding'], (B, 1, E))
    seq = jnp.concatenate([cls, seq], axis=1) + params['position_embedding']
    S = seq.shape[1]

    for lp in params['layers']:
        h = _layer_norm(seq, lp['ln1_g'], lp['ln1_b'])
        qkv = h @ lp['wqkv_t'] + lp['bqkv']
        q, k, v = jnp.split(qkv, 3, axis=-1)
        split = lambda t: t.reshape(B, S, heads, dh).transpose(0, 2, 1, 3)
        qh, kh, vh = split(q), split(k), split(v)
        s = jnp.einsum('bhqd,bhkd->bhqk', qh, kh) / math.sqrt(dh)
        a = jax.nn.softmax(s, axis=-1)
        ctx = jnp.einsum('bhqk,bhkd->bhqd', a, vh).transpose(0, 2, 1, 3).reshape(B, S, E)
        seq = seq + ctx @ lp['wo_t'] + lp['bo']
        h2 = _layer_norm(seq, lp['ln2_g'], lp['ln2_b'])
        f = jax.nn.relu(h2 @ lp['w1_t'] + lp['b1']) @ lp['w2_t'] + lp['b2']
        seq = seq + f

    h = _layer_norm(seq[:, 0], params['cls_ln_g'], params['cls_ln_b'])
    return h @ params['cls_w_t'] + params['cls_b']


# ----------------------------------------------------------------------------
# Deterministic parameter init (synthetic weights, PyTorch layouts transposed
# to [in, out] where convenient)
# ----------------------------------------------------------------------------
def init_params(key, cfg):
    E = cfg['embed_size']
    C = cfg['in_channels']
    p = cfg['patch_size']
    ff = cfg['inner_ff_size']
    nc = cfg['num_classes']
    N = (cfg['img_size'] // p) ** 2

    keys = iter(jax.random.split(key, 8 + cfg['num_transformer_layers'] * 8))

    def rnd(shape, scale=0.02):
        return (scale * jax.random.normal(next(keys), shape)).astype(jnp.float32)

    params = {
        'class_embedding': rnd((1, 1, E), 1.0),
        'position_embedding': rnd((1, N + 1, E), 1.0),
        'patch_w': rnd((C * p * p, E)),                  # Conv2d weight reshaped+transposed
        'patch_b': rnd((E,)),
        'cls_ln_g': jnp.ones((E,), jnp.float32),
        'cls_ln_b': jnp.zeros((E,), jnp.float32),
        'cls_w_t': rnd((E, nc)),
        'cls_b': rnd((nc,)),
        'layers': [],
    }
    for _ in range(cfg['num_transformer_layers']):
        params['layers'].append({
            'ln1_g': jnp.ones((E,), jnp.float32), 'ln1_b': jnp.zeros((E,), jnp.float32),
            'wqkv_t': rnd((E, 3 * E)), 'bqkv': rnd((3 * E,)),
            'wo_t': rnd((E, E)), 'bo': rnd((E,)),
            'ln2_g': jnp.ones((E,), jnp.float32), 'ln2_b': jnp.zeros((E,), jnp.float32),
            'w1_t': rnd((E, ff)), 'b1': rnd((ff,)),
            'w2_t': rnd((ff, E)), 'b2': rnd((E,)),
        })
    return params


# ----------------------------------------------------------------------------
if __name__ == "__main__":
    cfg = dict(
        img_size=16, patch_size=4, in_channels=4,
        embed_size=32, n_heads=4, inner_ff_size=64,
        num_transformer_layers=2, num_classes=10,
        dropout=0.0, embedding_dropout=0.0,
    )

    key = jax.random.PRNGKey(0)
    pkey, xkey = jax.random.split(key)
    params = init_params(pkey, cfg)
    x = jax.random.normal(
        xkey, (2, cfg['in_channels'], cfg['img_size'], cfg['img_size']), jnp.float32)

    # Stack / cast / pad parameters ONCE outside the jitted forward.
    prep = jax.tree_util.tree_map(jax.block_until_ready, prepare_params(params, cfg))

    fwd = jax.jit(lambda pr, xx: vit_forward(pr, xx, cfg))
    out = jax.block_until_ready(fwd(prep, x))
    assert out.shape == (2, cfg['num_classes'])

    # bf16 matmul operands w/ f32 accumulation vs f32 reference -> loose tolerance
    ref = jax.block_until_ready(vit_reference(params, x, cfg))
    np.testing.assert_allclose(np.asarray(out), np.asarray(ref), rtol=3e-2, atol=3e-2)

    print("KERNEL_OK")
</pallas_src>

<mosaic_0001>
module attributes {stable_mosaic.version = 11 : i64} {
  func.func @_patch_embed_kernel(%arg0: i32, %arg1: memref<32x64xbf16, #tpu.memory_space<vmem>>, %arg2: memref<64x32xbf16, #tpu.memory_space<vmem>>, %arg3: memref<1x32xf32, #tpu.memory_space<vmem>>, %arg4: memref<32x32xf32, #tpu.memory_space<vmem>>) attributes {dimension_semantics = [#tpu.dimension_semantics<parallel>], iteration_bounds = array<i64: 1>, scalar_prefetch = 0 : i64, scratch_operands = 0 : i64, tpu.core_type = #tpu.core_type<tc>, window_params = [{transform_indices = @transform_0, window_bounds = array<i64: 32, 64>}, {pipeline_mode = #tpu.pipeline_mode<synchronous>, transform_indices = @transform_1, window_bounds = array<i64: 64, 32>}, {pipeline_mode = #tpu.pipeline_mode<synchronous>, transform_indices = @transform_2, window_bounds = array<i64: 1, 32>}, {transform_indices = @transform_3, window_bounds = array<i64: 32, 32>}]} {
    %c0 = arith.constant 0 : index
    %c0_0 = arith.constant 0 : index
    %0 = vector.load %arg1[%c0, %c0_0] : memref<32x64xbf16, #tpu.memory_space<vmem>>, vector<32x64xbf16>
    %c0_1 = arith.constant 0 : index
    %c0_2 = arith.constant 0 : index
    %1 = vector.load %arg2[%c0_1, %c0_2] : memref<64x32xbf16, #tpu.memory_space<vmem>>, vector<64x32xbf16>
    %cst = arith.constant dense<0.000000e+00> : vector<32x32xf32>
    %2 = tpu.matmul %0, %1, %cst {dimension_numbers = #tpu.dot_dimension_numbers<[1], [0], [0], [1], [0, 0, 1, 1], [], []>} : vector<32x64xbf16>, vector<64x32xbf16>, vector<32x32xf32> -> vector<32x32xf32>
    %c0_3 = arith.constant 0 : index
    %c0_4 = arith.constant 0 : index
    %3 = vector.load %arg3[%c0_3, %c0_4] : memref<1x32xf32, #tpu.memory_space<vmem>>, vector<1x32xf32>
    %4 = vector.broadcast %3 : vector<1x32xf32> to vector<32x32xf32>
    %5 = arith.addf %2, %4 : vector<32x32xf32>
    %c0_5 = arith.constant 0 : index
    %c0_6 = arith.constant 0 : index
    %6 = vector.load %arg4[%c0_5, %c0_6] : memref<32x32xf32, #tpu.memory_space<vmem>>, vector<32x32xf32>
    tpu.vector_store %arg4[%c0_5, %c0_6], %5 {strides = array<i32>} : memref<32x32xf32, #tpu.memory_space<vmem>>, vector<32x32xf32>,
    return
  }
  func.func @transform_0(%arg0: i32) -> (i32, i32) {
    %c0_i32 = arith.constant 0 : i32
    %c0_i32_0 = arith.constant 0 : i32
    return %arg0, %c0_i32 : i32, i32
  }
  func.func @transform_1(%arg0: i32) -> (i32, i32) {
    %c0_i32 = arith.constant 0 : i32
    %c0_i32_0 = arith.constant 0 : i32
    %c0_i32_1 = arith.constant 0 : i32
    return %c0_i32, %c0_i32_0 : i32, i32
  }
  func.func @transform_2(%arg0: i32) -> (i32, i32) {
    %c0_i32 = arith.constant 0 : i32
    %c0_i32_0 = arith.constant 0 : i32
    %c0_i32_1 = arith.constant 0 : i32
    return %c0_i32, %c0_i32_0 : i32, i32
  }
  func.func @transform_3(%arg0: i32) -> (i32, i32) {
    %c0_i32 = arith.constant 0 : i32
    %c0_i32_0 = arith.constant 0 : i32
    return %arg0, %c0_i32 : i32, i32
  }
}

module attributes {stable_mosaic.version = 11 : i64} {
  func.func @_encoder_stack_kernel(%arg0: i32, %arg1: i32, %arg2: memref<2x24x32xf32, #tpu.memory_space<vmem>>, %arg3: memref<1x1x32xf32, #tpu.memory_space<vmem>>, %arg4: memref<1x1x32xf32, #tpu.memory_space<vmem>>, %arg5: memref<1x32x96xbf16, #tpu.memory_space<vmem>>, %arg6: memref<1x1x96xf32, #tpu.memory_space<vmem>>, %arg7: memref<1x32x32xbf16, #tpu.memory_space<vmem>>, %arg8: memref<1x1x32xf32, #tpu.memory_space<vmem>>, %arg9: memref<1x1x32xf32, #tpu.memory_space<vmem>>, %arg10: memref<1x1x32xf32, #tpu.memory_space<vmem>>, %arg11: memref<1x32x64xbf16, #tpu.memory_space<vmem>>, %arg12: memref<1x1x64xf32, #tpu.memory_space<vmem>>, %arg13: memref<1x64x32xbf16, #tpu.memory_space<vmem>>, %arg14: memref<1x1x32xf32, #tpu.memory_space<vmem>>, %arg15: memref<2x24x32xf32, #tpu.memory_space<vmem>>) attributes {dimension_semantics = [#tpu.dimension_semantics<parallel>, #tpu.dimension_semantics<arbitrary>], iteration_bounds = array<i64: 1, 2>, scalar_prefetch = 0 : i64, scratch_operands = 0 : i64, tpu.core_type = #tpu.core_type<tc>, window_params = [{transform_indices = @transform_0, window_bounds = array<i64: 2, 24, 32>}, {transform_indices = @transform_1, window_bounds = array<i64: 1, 1, 32>}, {transform_indices = @transform_2, window_bounds = array<i64: 1, 1, 32>}, {transform_indices = @transform_3, window_bounds = array<i64: 1, 32, 96>}, {transform_indices = @transform_4, window_bounds = array<i64: 1, 1, 96>}, {transform_indices = @transform_5, window_bounds = array<i64: 1, 32, 32>}, {transform_indices = @transform_6, window_bounds = array<i64: 1, 1, 32>}, {transform_indices = @transform_7, window_bounds = array<i64: 1, 1, 32>}, {transform_indices = @transform_8, window_bounds = array<i64: 1, 1, 32>}, {transform_indices = @transform_9, window_bounds = array<i64: 1, 32, 64>}, {transform_indices = @transform_10, window_bounds = array<i64: 1, 1, 64>}, {transform_indices = @transform_11, window_bounds = array<i64: 1, 64, 32>}, {transform_indices = @transform_12, window_bounds = array<i64: 1, 1, 32>}, {transform_indices = @transform_13, window_bounds = array<i64: 2, 24, 32>}]} {
    %c0_i32 = arith.constant 0 : i32
    %0 = arith.cmpi eq, %arg1, %c0_i32 : i32
    %1 = arith.extui %0 : i1 to i32
    %c0_i32_0 = arith.constant 0 : i32
    %2 = arith.cmpi ne, %1, %c0_i32_0 : i32
    scf.if %2 {
      %c0_62 = arith.constant 0 : index
      %c0_63 = arith.constant 0 : index
      %c0_64 = arith.constant 0 : index
      %165 = vector.load %arg2[%c0_62, %c0_63, %c0_64] : memref<2x24x32xf32, #tpu.memory_space<vmem>>, vector<2x24x32xf32>
      %c0_65 = arith.constant 0 : index
      %c0_66 = arith.constant 0 : index
      %c0_67 = arith.constant 0 : index
      %166 = vector.load %arg15[%c0_65, %c0_66, %c0_67] : memref<2x24x32xf32, #tpu.memory_space<vmem>>, vector<2x24x32xf32>
      tpu.vector_store %arg15[%c0_65, %c0_66, %c0_67], %165 {strides = array<i32>} : memref<2x24x32xf32, #tpu.memory_space<vmem>>, vector<2x24x32xf32>,
    } else {
    }
    %c0 = arith.constant 0 : index
    %c0_1 = arith.constant 0 : index
    %c0_2 = arith.constant 0 : index
    %3 = vector.load %arg15[%c0, %c0_1, %c0_2] : memref<2x24x32xf32, #tpu.memory_space<vmem>>, vector<2x24x32xf32>
    %4 = vector.shape_cast %3 : vector<2x24x32xf32> to vector<48x32xf32>
    %c0_3 = arith.constant 0 : index
    %c0_4 = arith.constant 0 : index
    %c0_5 = arith.constant 0 : index
    %5 = vector.load %arg3[%c0_3, %c0_4, %c0_5] : memref<1x1x32xf32, #tpu.memory_space<vmem>>, vector<1x1x32xf32>
    %6 = vector.shape_cast %5 : vector<1x1x32xf32> to vector<1x32xf32>
    %c0_6 = arith.constant 0 : index
    %c0_7 = arith.constant 0 : index
    %c0_8 = arith.constant 0 : index
    %7 = vector.load %arg4[%c0_6, %c0_7, %c0_8] : memref<1x1x32xf32, #tpu.memory_space<vmem>>, vector<1x1x32xf32>
    %8 = vector.shape_cast %7 : vector<1x1x32xf32> to vector<1x32xf32>
    %cst = arith.constant dense<0.000000e+00> : vector<48xf32>
    %9 = vector.multi_reduction <add>, %4, %cst [1] : vector<48x32xf32> to vector<48xf32>
    %10 = vector.shape_cast %9 : vector<48xf32> to vector<48x1xf32>
    %cst_9 = arith.constant 3.200000e+01 : f32
    %11 = vector.broadcast %cst_9 : f32 to vector<48x1xf32>
    %12 = arith.divf %10, %11 : vector<48x1xf32>
    %13 = vector.broadcast %12 : vector<48x1xf32> to vector<48x32xf32>
    %14 = arith.subf %4, %13 : vector<48x32xf32>
    %15 = arith.mulf %14, %14 : vector<48x32xf32>
    %cst_10 = arith.constant dense<0.000000e+00> : vector<48xf32>
    %16 = vector.multi_reduction <add>, %15, %cst_10 [1] : vector<48x32xf32> to vector<48xf32>
    %17 = vector.shape_cast %16 : vector<48xf32> to vector<48x1xf32>
    %cst_11 = arith.constant 3.200000e+01 : f32
    %18 = vector.broadcast %cst_11 : f32 to vector<48x1xf32>
    %19 = arith.divf %17, %18 : vector<48x1xf32>
    %20 = vector.broadcast %12 : vector<48x1xf32> to vector<48x32xf32>
    %21 = arith.subf %4, %20 : vector<48x32xf32>
    %cst_12 = arith.constant 9.99999974E-6 : f32
    %22 = vector.broadcast %cst_12 : f32 to vector<48x1xf32>
    %23 = arith.addf %19, %22 : vector<48x1xf32>
    %24 = math.rsqrt %23 : vector<48x1xf32>
    %25 = vector.broadcast %24 : vector<48x1xf32> to vector<48x32xf32>
    %26 = arith.mulf %21, %25 : vector<48x32xf32>
    %27 = vector.broadcast %6 : vector<1x32xf32> to vector<48x32xf32>
    %28 = arith.mulf %26, %27 : vector<48x32xf32>
    %29 = vector.broadcast %8 : vector<1x32xf32> to vector<48x32xf32>
    %30 = arith.addf %28, %29 : vector<48x32xf32>
    %31 = arith.truncf %30 : vector<48x32xf32> to vector<48x32xbf16>
    %c0_13 = arith.constant 0 : index
    %c0_14 = arith.constant 0 : index
    %c0_15 = arith.constant 0 : index
    %32 = vector.load %arg5[%c0_13, %c0_14, %c0_15] : memref<1x32x96xbf16, #tpu.memory_space<vmem>>, vector<1x32x96xbf16>
    %33 = vector.shape_cast %32 : vector<1x32x96xbf16> to vector<32x96xbf16>
    %cst_16 = arith.constant dense<0.000000e+00> : vector<48x96xf32>
    %34 = tpu.matmul %31, %33, %cst_16 {dimension_numbers = #tpu.dot_dimension_numbers<[1], [0], [0], [1], [0, 0, 1, 1], [], []>} : vector<48x32xbf16>, vector<32x96xbf16>, vector<48x96xf32> -> vector<48x96xf32>
    %c0_17 = arith.constant 0 : index
    %c0_18 = arith.constant 0 : index
    %c0_19 = arith.constant 0 : index
    %35 = vector.load %arg6[%c0_17, %c0_18, %c0_19] : memref<1x1x96xf32, #tpu.memory_space<vmem>>, vector<1x1x96xf32>
    %36 = vector.shape_cast %35 : vector<1x1x96xf32> to vector<1x96xf32>
    %37 = vector.broadcast %36 : vector<1x96xf32> to vector<48x96xf32>
    %38 = arith.addf %34, %37 : vector<48x96xf32>
    %39 = vector.extract_strided_slice %38 {offsets = [0, 0], sizes = [48, 32], strides = [1, 1]} : vector<48x96xf32> to vector<48x32xf32>
    %cst_20 = arith.constant 0.353553385 : f32
    %40 = vector.broadcast %cst_20 : f32 to vector<48x32xf32>
    %41 = arith.mulf %39, %40 : vector<48x32xf32>
    %42 = vector.shape_cast %41 : vector<48x32xf32> to vector<2x24x32xf32>
    %43 = vector.extract_strided_slice %38 {offsets = [0, 32], sizes = [48, 64], strides = [1, 1]} : vector<48x96xf32> to vector<48x64xf32>
    %44 = vector.shape_cast %43 : vector<48x64xf32> to vector<2x24x64xf32>
    %45 = vector.extract_strided_slice %42 {offsets = [0, 0, 0], sizes = [2, 24, 8], strides = [1, 1, 1]} : vector<2x24x32xf32> to vector<2x24x8xf32>
    %46 = vector.extract_strided_slice %42 {offsets = [0, 0, 8], sizes = [2, 24, 8], strides = [1, 1, 1]} : vector<2x24x32xf32> to vector<2x24x8xf32>
    %47 = vector.extract_strided_slice %42 {offsets = [0, 0, 16], sizes = [2, 24, 8], strides = [1, 1, 1]} : vector<2x24x32xf32> to vector<2x24x8xf32>
    %48 = vector.extract_strided_slice %42 {offsets = [0, 0, 24], sizes = [2, 24, 8], strides = [1, 1, 1]} : vector<2x24x32xf32> to vector<2x24x8xf32>
    %49 = vector.shape_cast %45 : vector<2x24x8xf32> to vector<2x1x24x8xf32>
    %50 = vector.shape_cast %46 : vector<2x24x8xf32> to vector<2x1x24x8xf32>
    %51 = vector.shape_cast %47 : vector<2x24x8xf32> to vector<2x1x24x8xf32>
    %52 = vector.shape_cast %48 : vector<2x24x8xf32> to vector<2x1x24x8xf32>
    %53 = tpu.concatenate %49, %50, %51, %52 in 1 : vector<2x1x24x8xf32>, vector<2x1x24x8xf32>, vector<2x1x24x8xf32>, vector<2x1x24x8xf32> -> vector<2x4x24x8xf32>
    %54 = vector.shape_cast %53 : vector<2x4x24x8xf32> to vector<8x24x8xf32>
    %55 = arith.truncf %54 : vector<8x24x8xf32> to vector<8x24x8xbf16>
    %56 = vector.extract_strided_slice %44 {offsets = [0, 0, 0], sizes = [2, 24, 8], strides = [1, 1, 1]} : vector<2x24x64xf32> to vector<2x24x8xf32>
    %57 = vector.extract_strided_slice %44 {offsets = [0, 0, 8], sizes = [2, 24, 8], strides = [1, 1, 1]} : vector<2x24x64xf32> to vector<2x24x8xf32>
    %58 = vector.extract_strided_slice %44 {offsets = [0, 0, 16], sizes = [2, 24, 8], strides = [1, 1, 1]} : vector<2x24x64xf32> to vector<2x24x8xf32>
    %59 = vector.extract_strided_slice %44 {offsets = [0, 0, 24], sizes = [2, 24, 8], strides = [1, 1, 1]} : vector<2x24x64xf32> to vector<2x24x8xf32>
    %60 = vector.shape_cast %56 : vector<2x24x8xf32> to vector<2x1x24x8xf32>
    %61 = vector.shape_cast %57 : vector<2x24x8xf32> to vector<2x1x24x8xf32>
    %62 = vector.shape_cast %58 : vector<2x24x8xf32> to vector<2x1x24x8xf32>
    %63 = vector.shape_cast %59 : vector<2x24x8xf32> to vector<2x1x24x8xf32>
    %64 = tpu.concatenate %60, %61, %62, %63 in 1 : vector<2x1x24x8xf32>, vector<2x1x24x8xf32>, vector<2x1x24x8xf32>, vector<2x1x24x8xf32> -> vector<2x4x24x8xf32>
    %65 = vector.shape_cast %64 : vector<2x4x24x8xf32> to vector<8x24x8xf32>
    %66 = arith.truncf %65 : vector<8x24x8xf32> to vector<8x24x8xbf16>
    %67 = vector.extract_strided_slice %44 {offsets = [0, 0, 32], sizes = [2, 24, 8], strides = [1, 1, 1]} : vector<2x24x64xf32> to vector<2x24x8xf32>
    %68 = vector.extract_strided_slice %44 {offsets = [0, 0, 40], sizes = [2, 24, 8], strides = [1, 1, 1]} : vector<2x24x64xf32> to vector<2x24x8xf32>
    %69 = vector.extract_strided_slice %44 {offsets = [0, 0, 48], sizes = [2, 24, 8], strides = [1, 1, 1]} : vector<2x24x64xf32> to vector<2x24x8xf32>
    %70 = vector.extract_strided_slice %44 {offsets = [0, 0, 56], sizes = [2, 24, 8], strides = [1, 1, 1]} : vector<2x24x64xf32> to vector<2x24x8xf32>
    %71 = vector.shape_cast %67 : vector<2x24x8xf32> to vector<2x1x24x8xf32>
    %72 = vector.shape_cast %68 : vector<2x24x8xf32> to vector<2x1x24x8xf32>
    %73 = vector.shape_cast %69 : vector<2x24x8xf32> to vector<2x1x24x8xf32>
    %74 = vector.shape_cast %70 : vector<2x24x8xf32> to vector<2x1x24x8xf32>
    %75 = tpu.concatenate %71, %72, %73, %74 in 1 : vector<2x1x24x8xf32>, vector<2x1x24x8xf32>, vector<2x1x24x8xf32>, vector<2x1x24x8xf32> -> vector<2x4x24x8xf32>
    %76 = vector.shape_cast %75 : vector<2x4x24x8xf32> to vector<8x24x8xf32>
    %77 = arith.truncf %76 : vector<8x24x8xf32> to vector<8x24x8xbf16>
    "tpu.trace_start"() <{level = 10 : i32, message = "hqd,hkd->hqk"}> : () -> ()
    %cst_21 = arith.constant dense<0.000000e+00> : vector<8x24x24xf32>
    %78 = tpu.matmul %55, %66, %cst_21 {dimension_numbers = #tpu.dot_dimension_numbers<[2], [2], [1], [1], [0, 0, 0, 1, 1, 1], [0], [0]>} : vector<8x24x8xbf16>, vector<8x24x8xbf16>, vector<8x24x24xf32> -> vector<8x24x24xf32>
    "tpu.trace_stop"() : () -> ()
    %79 = tpu.iota {dimensions = array<i32: 2>} : vector<1x1x24xi32>
    %c17_i32 = arith.constant 17 : i32
    %80 = vector.broadcast %c17_i32 : i32 to vector<1x1x24xi32>
    %81 = arith.cmpi slt, %79, %80 : vector<1x1x24xi32>
    %cst_22 = arith.constant -1.000000e+30 : f32
    %82 = vector.shape_cast %81 : vector<1x1x24xi1> to vector<1x1x24xi1>
    %83 = vector.broadcast %82 : vector<1x1x24xi1> to vector<8x24x24xi1>
    %84 = vector.broadcast %cst_22 : f32 to vector<8x24x24xf32>
    %85 = arith.select %83, %78, %84 : vector<8x24x24xi1>, vector<8x24x24xf32>
    %cst_23 = arith.constant dense<0xFF800000> : vector<8x24xf32>
    %86 = vector.multi_reduction <maximumf>, %85, %cst_23 [2] : vector<8x24x24xf32> to vector<8x24xf32>
    %87 = vector.shape_cast %86 : vector<8x24xf32> to vector<8x24x1xf32>
    %88 = vector.broadcast %87 : vector<8x24x1xf32> to vector<8x24x24xf32>
    %89 = arith.subf %85, %88 : vector<8x24x24xf32>
    %90 = math.exp %89 : vector<8x24x24xf32>
    %cst_24 = arith.constant dense<0.000000e+00> : vector<8x24xf32>
    %91 = vector.multi_reduction <add>, %90, %cst_24 [2] : vector<8x24x24xf32> to vector<8x24xf32>
    %92 = vector.shape_cast %91 : vector<8x24xf32> to vector<8x24x1xf32>
    %93 = tpu.reciprocal %92 {approx = true} : vector<8x24x1xf32> -> vector<8x24x1xf32>
    %94 = vector.broadcast %93 : vector<8x24x1xf32> to vector<8x24x24xf32>
    %95 = arith.mulf %90, %94 : vector<8x24x24xf32>
    %96 = arith.truncf %95 : vector<8x24x24xf32> to vector<8x24x24xbf16>
    "tpu.trace_start"() <{level = 10 : i32, message = "hqk,hkd->hqd"}> : () -> ()
    %cst_25 = arith.constant dense<0.000000e+00> : vector<8x24x8xf32>
    %97 = tpu.matmul %96, %77, %cst_25 {dimension_numbers = #tpu.dot_dimension_numbers<[2], [1], [1], [2], [0, 0, 0, 1, 1, 2], [0], [0]>} : vector<8x24x24xbf16>, vector<8x24x8xbf16>, vector<8x24x8xf32> -> vector<8x24x8xf32>
    "tpu.trace_stop"() : () -> ()
    %98 = vector.shape_cast %97 : vector<8x24x8xf32> to vector<2x4x24x8xf32>
    %99 = vector.extract_strided_slice %98 {offsets = [0, 0, 0, 0], sizes = [2, 1, 24, 8], strides = [1, 1, 1, 1]} : vector<2x4x24x8xf32> to vector<2x1x24x8xf32>
    %100 = vector.shape_cast %99 : vector<2x1x24x8xf32> to vector<2x24x8xf32>
    %101 = vector.extract_strided_slice %98 {offsets = [0, 1, 0, 0], sizes = [2, 1, 24, 8], strides = [1, 1, 1, 1]} : vector<2x4x24x8xf32> to vector<2x1x24x8xf32>
    %102 = vector.shape_cast %101 : vector<2x1x24x8xf32> to vector<2x24x8xf32>
    %103 = vector.extract_strided_slice %98 {offsets = [0, 2, 0, 0], sizes = [2, 1, 24, 8], strides = [1, 1, 1, 1]} : vector<2x4x24x8xf32> to vector<2x1x24x8xf32>
    %104 = vector.shape_cast %103 : vector<2x1x24x8xf32> to vector<2x24x8xf32>
    %105 = vector.extract_strided_slice %98 {offsets = [0, 3, 0, 0], sizes = [2, 1, 24, 8], strides = [1, 1, 1, 1]} : vector<2x4x24x8xf32> to vector<2x1x24x8xf32>
    %106 = vector.shape_cast %105 : vector<2x1x24x8xf32> to vector<2x24x8xf32>
    %107 = tpu.concatenate %100, %102, %104, %106 in 2 : vector<2x24x8xf32>, vector<2x24x8xf32>, vector<2x24x8xf32>, vector<2x24x8xf32> -> vector<2x24x32xf32>
    %108 = vector.shape_cast %107 : vector<2x24x32xf32> to vector<48x32xf32>
    %109 = arith.truncf %108 : vector<48x32xf32> to vector<48x32xbf16>
    %c0_26 = arith.constant 0 : index
    %c0_27 = arith.constant 0 : index
    %c0_28 = arith.constant 0 : index
    %110 = vector.load %arg7[%c0_26, %c0_27, %c0_28] : memref<1x32x32xbf16, #tpu.memory_space<vmem>>, vector<1x32x32xbf16>
    %111 = vector.shape_cast %110 : vector<1x32x32xbf16> to vector<32x32xbf16>
    %cst_29 = arith.constant dense<0.000000e+00> : vector<48x32xf32>
    %112 = tpu.matmul %109, %111, %cst_29 {dimension_numbers = #tpu.dot_dimension_numbers<[1], [0], [0], [1], [0, 0, 1, 1], [], []>} : vector<48x32xbf16>, vector<32x32xbf16>, vector<48x32xf32> -> vector<48x32xf32>
    %c0_30 = arith.constant 0 : index
    %c0_31 = arith.constant 0 : index
    %c0_32 = arith.constant 0 : index
    %113 = vector.load %arg8[%c0_30, %c0_31, %c0_32] : memref<1x1x32xf32, #tpu.memory_space<vmem>>, vector<1x1x32xf32>
    %114 = vector.shape_cast %113 : vector<1x1x32xf32> to vector<1x32xf32>
    %115 = vector.broadcast %114 : vector<1x32xf32> to vector<48x32xf32>
    %116 = arith.addf %112, %115 : vector<48x32xf32>
    %117 = arith.addf %4, %116 : vector<48x32xf32>
    %c0_33 = arith.constant 0 : index
    %c0_34 = arith.constant 0 : index
    %c0_35 = arith.constant 0 : index
    %118 = vector.load %arg9[%c0_33, %c0_34, %c0_35] : memref<1x1x32xf32, #tpu.memory_space<vmem>>, vector<1x1x32xf32>
    %119 = vector.shape_cast %118 : vector<1x1x32xf32> to vector<1x32xf32>
    %c0_36 = arith.constant 0 : index
    %c0_37 = arith.constant 0 : index
    %c0_38 = arith.constant 0 : index
    %120 = vector.load %arg10[%c0_36, %c0_37, %c0_38] : memref<1x1x32xf32, #tpu.memory_space<vmem>>, vector<1x1x32xf32>
    %121 = vector.shape_cast %120 : vector<1x1x32xf32> to vector<1x32xf32>
    %cst_39 = arith.constant dense<0.000000e+00> : vector<48xf32>
    %122 = vector.multi_reduction <add>, %117, %cst_39 [1] : vector<48x32xf32> to vector<48xf32>
    %123 = vector.shape_cast %122 : vector<48xf32> to vector<48x1xf32>
    %cst_40 = arith.constant 3.200000e+01 : f32
    %124 = vector.broadcast %cst_40 : f32 to vector<48x1xf32>
    %125 = arith.divf %123, %124 : vector<48x1xf32>
    %126 = vector.broadcast %125 : vector<48x1xf32> to vector<48x32xf32>
    %127 = arith.subf %117, %126 : vector<48x32xf32>
    %128 = arith.mulf %127, %127 : vector<48x32xf32>
    %cst_41 = arith.constant dense<0.000000e+00> : vector<48xf32>
    %129 = vector.multi_reduction <add>, %128, %cst_41 [1] : vector<48x32xf32> to vector<48xf32>
    %130 = vector.shape_cast %129 : vector<48xf32> to vector<48x1xf32>
    %cst_42 = arith.constant 3.200000e+01 : f32
    %131 = vector.broadcast %cst_42 : f32 to vector<48x1xf32>
    %132 = arith.divf %130, %131 : vector<48x1xf32>
    %133 = vector.broadcast %125 : vector<48x1xf32> to vector<48x32xf32>
    %134 = arith.subf %117, %133 : vector<48x32xf32>
    %cst_43 = arith.constant 9.99999974E-6 : f32
    %135 = vector.broadcast %cst_43 : f32 to vector<48x1xf32>
    %136 = arith.addf %132, %135 : vector<48x1xf32>
    %137 = math.rsqrt %136 : vector<48x1xf32>
    %138 = vector.broadcast %137 : vector<48x1xf32> to vector<48x32xf32>
    %139 = arith.mulf %134, %138 : vector<48x32xf32>
    %140 = vector.broadcast %119 : vector<1x32xf32> to vector<48x32xf32>
    %141 = arith.mulf %139, %140 : vector<48x32xf32>
    %142 = vector.broadcast %121 : vector<1x32xf32> to vector<48x32xf32>
    %143 = arith.addf %141, %142 : vector<48x32xf32>
    %144 = arith.truncf %143 : vector<48x32xf32> to vector<48x32xbf16>
    %c0_44 = arith.constant 0 : index
    %c0_45 = arith.constant 0 : index
    %c0_46 = arith.constant 0 : index
    %145 = vector.load %arg11[%c0_44, %c0_45, %c0_46] : memref<1x32x64xbf16, #tpu.memory_space<vmem>>, vector<1x32x64xbf16>
    %146 = vector.shape_cast %145 : vector<1x32x64xbf16> to vector<32x64xbf16>
    %cst_47 = arith.constant dense<0.000000e+00> : vector<48x64xf32>
    %147 = tpu.matmul %144, %146, %cst_47 {dimension_numbers = #tpu.dot_dimension_numbers<[1], [0], [0], [1], [0, 0, 1, 1], [], []>} : vector<48x32xbf16>, vector<32x64xbf16>, vector<48x64xf32> -> vector<48x64xf32>
    %c0_48 = arith.constant 0 : index
    %c0_49 = arith.constant 0 : index
    %c0_50 = arith.constant 0 : index
    %148 = vector.load %arg12[%c0_48, %c0_49, %c0_50] : memref<1x1x64xf32, #tpu.memory_space<vmem>>, vector<1x1x64xf32>
    %149 = vector.shape_cast %148 : vector<1x1x64xf32> to vector<1x64xf32>
    %150 = vector.broadcast %149 : vector<1x64xf32> to vector<48x64xf32>
    %151 = arith.addf %147, %150 : vector<48x64xf32>
    %cst_51 = arith.constant 0.000000e+00 : f32
    %152 = vector.broadcast %cst_51 : f32 to vector<48x64xf32>
    %153 = arith.maximumf %151, %152 : vector<48x64xf32>
    %154 = arith.truncf %153 : vector<48x64xf32> to vector<48x64xbf16>
    %c0_52 = arith.constant 0 : index
    %c0_53 = arith.constant 0 : index
    %c0_54 = arith.constant 0 : index
    %155 = vector.load %arg13[%c0_52, %c0_53, %c0_54] : memref<1x64x32xbf16, #tpu.memory_space<vmem>>, vector<1x64x32xbf16>
    %156 = vector.shape_cast %155 : vector<1x64x32xbf16> to vector<64x32xbf16>
    %cst_55 = arith.constant dense<0.000000e+00> : vector<48x32xf32>
    %157 = tpu.matmul %154, %156, %cst_55 {dimension_numbers = #tpu.dot_dimension_numbers<[1], [0], [0], [1], [0, 0, 1, 1], [], []>} : vector<48x64xbf16>, vector<64x32xbf16>, vector<48x32xf32> -> vector<48x32xf32>
    %c0_56 = arith.constant 0 : index
    %c0_57 = arith.constant 0 : index
    %c0_58 = arith.constant 0 : index
    %158 = vector.load %arg14[%c0_56, %c0_57, %c0_58] : memref<1x1x32xf32, #tpu.memory_space<vmem>>, vector<1x1x32xf32>
    %159 = vector.shape_cast %158 : vector<1x1x32xf32> to vector<1x32xf32>
    %160 = vector.broadcast %159 : vector<1x32xf32> to vector<48x32xf32>
    %161 = arith.addf %157, %160 : vector<48x32xf32>
    %162 = arith.addf %117, %161 : vector<48x32xf32>
    %163 = vector.shape_cast %162 : vector<48x32xf32> to vector<2x24x32xf32>
    %c0_59 = arith.constant 0 : index
    %c0_60 = arith.constant 0 : index
    %c0_61 = arith.constant 0 : index
    %164 = vector.load %arg15[%c0_59, %c0_60, %c0_61] : memref<2x24x32xf32, #tpu.memory_space<vmem>>, vector<2x24x32xf32>
    tpu.vector_store %arg15[%c0_59, %c0_60, %c0_61], %163 {strides = array<i32>} : memref<2x24x32xf32, #tpu.memory_space<vmem>>, vector<2x24x32xf32>,
    return
  }
  func.func @transform_0(%arg0: i32, %arg1: i32) -> (i32, i32, i32) {
    %c0_i32 = arith.constant 0 : i32
    %c0_i32_0 = arith.constant 0 : i32
    %c0_i32_1 = arith.constant 0 : i32
    return %arg0, %c0_i32, %c0_i32_0 : i32, i32, i32
  }
  func.func @transform_1(%arg0: i32, %arg1: i32) -> (i32, i32, i32) {
    %c0_i32 = arith.constant 0 : i32
    %c0_i32_0 = arith.constant 0 : i32
    %c0_i32_1 = arith.constant 0 : i32
    return %arg1, %c0_i32, %c0_i32_0 : i32, i32, i32
  }
  func.func @transform_2(%arg0: i32, %arg1: i32) -> (i32, i32, i32) {
    %c0_i32 = arith.constant 0 : i32
    %c0_i32_0 = arith.constant 0 : i32
    %c0_i32_1 = arith.constant 0 : i32
    return %arg1, %c0_i32, %c0_i32_0 : i32, i32, i32
  }
  func.func @transform_3(%arg0: i32, %arg1: i32) -> (i32, i32, i32) {
    %c0_i32 = arith.constant 0 : i32
    %c0_i32_0 = arith.constant 0 : i32
    %c0_i32_1 = arith.constant 0 : i32
    return %arg1, %c0_i32, %c0_i32_0 : i32, i32, i32
  }
  func.func @transform_4(%arg0: i32, %arg1: i32) -> (i32, i32, i32) {
    %c0_i32 = arith.constant 0 : i32
    %c0_i32_0 = arith.constant 0 : i32
    %c0_i32_1 = arith.constant 0 : i32
    return %arg1, %c0_i32, %c0_i32_0 : i32, i32, i32
  }
  func.func @transform_5(%arg0: i32, %arg1: i32) -> (i32, i32, i32) {
    %c0_i32 = arith.constant 0 : i32
    %c0_i32_0 = arith.constant 0 : i32
    %c0_i32_1 = arith.constant 0 : i32
    return %arg1, %c0_i32, %c0_i32_0 : i32, i32, i32
  }
  func.func @transform_6(%arg0: i32, %arg1: i32) -> (i32, i32, i32) {
    %c0_i32 = arith.constant 0 : i32
    %c0_i32_0 = arith.constant 0 : i32
    %c0_i32_1 = arith.constant 0 : i32
    return %arg1, %c0_i32, %c0_i32_0 : i32, i32, i32
  }
  func.func @transform_7(%arg0: i32, %arg1: i32) -> (i32, i32, i32) {
    %c0_i32 = arith.constant 0 : i32
    %c0_i32_0 = arith.constant 0 : i32
    %c0_i32_1 = arith.constant 0 : i32
    return %arg1, %c0_i32, %c0_i32_0 : i32, i32, i32
  }
  func.func @transform_8(%arg0: i32, %arg1: i32) -> (i32, i32, i32) {
    %c0_i32 = arith.constant 0 : i32
    %c0_i32_0 = arith.constant 0 : i32
    %c0_i32_1 = arith.constant 0 : i32
    return %arg1, %c0_i32, %c0_i32_0 : i32, i32, i32
  }
  func.func @transform_9(%arg0: i32, %arg1: i32) -> (i32, i32, i32) {
    %c0_i32 = arith.constant 0 : i32
    %c0_i32_0 = arith.constant 0 : i32
    %c0_i32_1 = arith.constant 0 : i32
    return %arg1, %c0_i32, %c0_i32_0 : i32, i32, i32
  }
  func.func @transform_10(%arg0: i32, %arg1: i32) -> (i32, i32, i32) {
    %c0_i32 = arith.constant 0 : i32
    %c0_i32_0 = arith.constant 0 : i32
    %c0_i32_1 = arith.constant 0 : i32
    return %arg1, %c0_i32, %c0_i32_0 : i32, i32, i32
  }
  func.func @transform_11(%arg0: i32, %arg1: i32) -> (i32, i32, i32) {
    %c0_i32 = arith.constant 0 : i32
    %c0_i32_0 = arith.constant 0 : i32
    %c0_i32_1 = arith.constant 0 : i32
    return %arg1, %c0_i32, %c0_i32_0 : i32, i32, i32
  }
  func.func @transform_12(%arg0: i32, %arg1: i32) -> (i32, i32, i32) {
    %c0_i32 = arith.constant 0 : i32
    %c0_i32_0 = arith.constant 0 : i32
    %c0_i32_1 = arith.constant 0 : i32
    return %arg1, %c0_i32, %c0_i32_0 : i32, i32, i32
  }
  func.func @transform_13(%arg0: i32, %arg1: i32) -> (i32, i32, i32) {
    %c0_i32 = arith.constant 0 : i32
    %c0_i32_0 = arith.constant 0 : i32
    %c0_i32_1 = arith.constant 0 : i32
    return %arg0, %c0_i32, %c0_i32_0 : i32, i32, i32
  }
}

module attributes {stable_mosaic.version = 11 : i64} {
  func.func @_classifier_kernel(%arg0: i32, %arg1: memref<2x32xf32, #tpu.memory_space<vmem>>, %arg2: memref<1x32xf32, #tpu.memory_space<vmem>>, %arg3: memref<1x32xf32, #tpu.memory_space<vmem>>, %arg4: memref<32x128xbf16, #tpu.memory_space<vmem>>, %arg5: memref<1x128xf32, #tpu.memory_space<vmem>>, %arg6: memref<2x128xf32, #tpu.memory_space<vmem>>) attributes {dimension_semantics = [#tpu.dimension_semantics<parallel>], iteration_bounds = array<i64: 1>, scalar_prefetch = 0 : i64, scratch_operands = 0 : i64, tpu.core_type = #tpu.core_type<tc>, window_params = [{transform_indices = @transform_0, window_bounds = array<i64: 2, 32>}, {pipeline_mode = #tpu.pipeline_mode<synchronous>, transform_indices = @transform_1, window_bounds = array<i64: 1, 32>}, {pipeline_mode = #tpu.pipeline_mode<synchronous>, transform_indices = @transform_2, window_bounds = array<i64: 1, 32>}, {pipeline_mode = #tpu.pipeline_mode<synchronous>, transform_indices = @transform_3, window_bounds = array<i64: 32, 128>}, {pipeline_mode = #tpu.pipeline_mode<synchronous>, transform_indices = @transform_4, window_bounds = array<i64: 1, 128>}, {transform_indices = @transform_5, window_bounds = array<i64: 2, 128>}]} {
    %c0 = arith.constant 0 : index
    %c0_0 = arith.constant 0 : index
    %0 = vector.load %arg1[%c0, %c0_0] : memref<2x32xf32, #tpu.memory_space<vmem>>, vector<2x32xf32>
    %c0_1 = arith.constant 0 : index
    %c0_2 = arith.constant 0 : index
    %1 = vector.load %arg2[%c0_1, %c0_2] : memref<1x32xf32, #tpu.memory_space<vmem>>, vector<1x32xf32>
    %c0_3 = arith.constant 0 : index
    %c0_4 = arith.constant 0 : index
    %2 = vector.load %arg3[%c0_3, %c0_4] : memref<1x32xf32, #tpu.memory_space<vmem>>, vector<1x32xf32>
    %cst = arith.constant dense<0.000000e+00> : vector<2xf32>
    %3 = vector.multi_reduction <add>, %0, %cst [1] : vector<2x32xf32> to vector<2xf32>
    %4 = vector.shape_cast %3 : vector<2xf32> to vector<2x1xf32>
    %cst_5 = arith.constant 3.200000e+01 : f32
    %5 = vector.broadcast %cst_5 : f32 to vector<2x1xf32>
    %6 = arith.divf %4, %5 : vector<2x1xf32>
    %7 = vector.broadcast %6 : vector<2x1xf32> to vector<2x32xf32>
    %8 = arith.subf %0, %7 : vector<2x32xf32>
    %9 = arith.mulf %8, %8 : vector<2x32xf32>
    %cst_6 = arith.constant dense<0.000000e+00> : vector<2xf32>
    %10 = vector.multi_reduction <add>, %9, %cst_6 [1] : vector<2x32xf32> to vector<2xf32>
    %11 = vector.shape_cast %10 : vector<2xf32> to vector<2x1xf32>
    %cst_7 = arith.constant 3.200000e+01 : f32
    %12 = vector.broadcast %cst_7 : f32 to vector<2x1xf32>
    %13 = arith.divf %11, %12 : vector<2x1xf32>
    %14 = vector.broadcast %6 : vector<2x1xf32> to vector<2x32xf32>
    %15 = arith.subf %0, %14 : vector<2x32xf32>
    %cst_8 = arith.constant 9.99999974E-6 : f32
    %16 = vector.broadcast %cst_8 : f32 to vector<2x1xf32>
    %17 = arith.addf %13, %16 : vector<2x1xf32>
    %18 = math.rsqrt %17 : vector<2x1xf32>
    %19 = vector.broadcast %18 : vector<2x1xf32> to vector<2x32xf32>
    %20 = arith.mulf %15, %19 : vector<2x32xf32>
    %21 = vector.broadcast %1 : vector<1x32xf32> to vector<2x32xf32>
    %22 = arith.mulf %20, %21 : vector<2x32xf32>
    %23 = vector.broadcast %2 : vector<1x32xf32> to vector<2x32xf32>
    %24 = arith.addf %22, %23 : vector<2x32xf32>
    %25 = arith.truncf %24 : vector<2x32xf32> to vector<2x32xbf16>
    %c0_9 = arith.constant 0 : index
    %c0_10 = arith.constant 0 : index
    %26 = vector.load %arg4[%c0_9, %c0_10] : memref<32x128xbf16, #tpu.memory_space<vmem>>, vector<32x128xbf16>
    %cst_11 = arith.constant dense<0.000000e+00> : vector<2x128xf32>
    %27 = tpu.matmul %25, %26, %cst_11 {dimension_numbers = #tpu.dot_dimension_numbers<[1], [0], [0], [1], [0, 0, 1, 1], [], []>} : vector<2x32xbf16>, vector<32x128xbf16>, vector<2x128xf32> -> vector<2x128xf32>
    %c0_12 = arith.constant 0 : index
    %c0_13 = arith.constant 0 : index
    %28 = vector.load %arg5[%c0_12, %c0_13] : memref<1x128xf32, #tpu.memory_space<vmem>>, vector<1x128xf32>
    %29 = vector.broadcast %28 : vector<1x128xf32> to vector<2x128xf32>
    %30 = arith.addf %27, %29 : vector<2x128xf32>
    %c0_14 = arith.constant 0 : index
    %c0_15 = arith.constant 0 : index
    %31 = vector.load %arg6[%c0_14, %c0_15] : memref<2x128xf32, #tpu.memory_space<vmem>>, vector<2x128xf32>
    tpu.vector_store %arg6[%c0_14, %c0_15], %30 {strides = array<i32>} : memref<2x128xf32, #tpu.memory_space<vmem>>, vector<2x128xf32>,
    return
  }
  func.func @transform_0(%arg0: i32) -> (i32, i32) {
    %c0_i32 = arith.constant 0 : i32
    %c0_i32_0 = arith.constant 0 : i32
    return %arg0, %c0_i32 : i32, i32
  }
  func.func @transform_1(%arg0: i32) -> (i32, i32) {
    %c0_i32 = arith.constant 0 : i32
    %c0_i32_0 = arith.constant 0 : i32
    %c0_i32_1 = arith.constant 0 : i32
    return %c0_i32, %c0_i32_0 : i32, i32
  }
  func.func @transform_2(%arg0: i32) -> (i32, i32) {
    %c0_i32 = arith.constant 0 : i32
    %c0_i32_0 = arith.constant 0 : i32
    %c0_i32_1 = arith.constant 0 : i32
    return %c0_i32, %c0_i32_0 : i32, i32
  }
  func.func @transform_3(%arg0: i32) -> (i32, i32) {
    %c0_i32 = arith.constant 0 : i32
    %c0_i32_0 = arith.constant 0 : i32
    %c0_i32_1 = arith.constant 0 : i32
    return %c0_i32, %c0_i32_0 : i32, i32
  }
  func.func @transform_4(%arg0: i32) -> (i32, i32) {
    %c0_i32 = arith.constant 0 : i32
    %c0_i32_0 = arith.constant 0 : i32
    %c0_i32_1 = arith.constant 0 : i32
    return %c0_i32, %c0_i32_0 : i32, i32
  }
  func.func @transform_5(%arg0: i32) -> (i32, i32) {
    %c0_i32 = arith.constant 0 : i32
    %c0_i32_0 = arith.constant 0 : i32
    return %arg0, %c0_i32 : i32, i32
  }
}

</mosaic_0001>

<llo_original>
// kernel: _lambda_.3
$region0: #{_lambda_.3}
  #allocation0 [shape = 'u32[]', space=smem, size = 0x4, offset = 0x4, fixed_abs, tag = 'smem constant byte address 0x4 - core index']
  #allocation1 [shape = 'u32[144,128]{1,0:T(1,128)}', space=vmem, size = 0x12000, scoped, tag = 'internal scratch']
  %s0 = inlined_call_operand.vmem [shape: bf16[32,64], index: 0, kind: input, shape index: {}]
  %s1 = inlined_call_operand.vmem [shape: bf16[64,32], index: 1, kind: input, shape index: {}]
  %s2 = inlined_call_operand.vmem [shape: f32[1,32], index: 2, kind: input, shape index: {}]
  %s3 = inlined_call_operand.vmem [shape: f32[32,32], index: 3, kind: output, shape index: {}]
  %s4 = sld [smem:[#allocation0]]
  $region22: #{_lambda_.3} parent=0
    _
  %s6 = ssub.s32 1, %s4
  %s7 = scalar_select 0, %s6, %s4
  // Predicated region
  $region2: #{_lambda_.3} parent=0 // pred_check
    _
  $region3: #{_lambda_.3} parent=0 // pred_check_branch
    %9 = sbr.rel (0) target = $region5
  $region4: #{_lambda_.3} parent=0 // pred_region
    _
  $region5: #{_lambda_.3} parent=0 // pred_fallthru
    _
  // Predicated region
  $region6: #{_lambda_.3} parent=0 // pred_check
    _
  $region7: #{_lambda_.3} parent=0 // pred_check_branch
    %11 = sbr.rel (0) target = $region9
  $region8: #{_lambda_.3} parent=0 // pred_region
    _
  $region9: #{_lambda_.3} parent=0 // pred_fallthru
    _
  // Predicated region
  $region10: #{_lambda_.3} parent=0 // pred_check
    _
  $region11: #{_lambda_.3} parent=0 // pred_check_branch
    %13 = sbr.rel (0) target = $region13
  $region12: #{_lambda_.3} parent=0 // pred_region
    _
  $region13: #{_lambda_.3} parent=0 // pred_fallthru
    _
  %v15 = vld [vmem:[%s0] sm:$0xf]
  %v16 = vld [vmem:[%s0 + $0x4] sm:$0xf]
  %v17 = vld [vmem:[%s0 + $0x8] sm:$0xf]
  %v18 = vld [vmem:[%s0 + $0xc] sm:$0xf]
  %v19 = vld [vmem:[%s1] sm:$0xf]
  %v20 = vld [vmem:[%s1 + $0x4] sm:$0xf]
  %v21 = vld [vmem:[%s1 + $0x8] sm:$0xf]
  %v22 = vld [vmem:[%s1 + $0xc] sm:$0xf]
  %v23 = vld [vmem:[%s1 + $0x10] sm:$0xf]
  %v24 = vld [vmem:[%s1 + $0x14] sm:$0xf]
  %v25 = vld [vmem:[%s1 + $0x18] sm:$0xf]
  %v26 = vld [vmem:[%s1 + $0x1c] sm:$0xf]
  %v27 = vld [vmem:[%s2] sm:$0x1]
  %v29 = vlaneseq
  %v30 = vshrl.u32 %v29, 7
  %v31 = vsub.s32 0, %v30
  %v32 = vrot.slane %v27, %v31
  %v38 = vunpack.c.l.b16 %v15
  %v39 = vunpack.c.l.b16 %v16
  %v40 = vunpack.c.l.b16 %v17
  %v41 = vunpack.c.l.b16 %v18
  %v42 = vpack.c.b16 %v39, %v38
  %v43 = vpack.c.b16 %v41, %v40
  %v52 = vunpack.c.l.b16 %v19
  %v53 = vunpack.c.l.b16 %v20
  %v54 = vunpack.c.l.b16 %v21
  %v55 = vunpack.c.l.b16 %v22
  %v56 = vunpack.c.l.b16 %v23
  %v57 = vunpack.c.l.b16 %v24
  %v58 = vunpack.c.l.b16 %v25
  %v59 = vunpack.c.l.b16 %v26
  %v60 = vpack.c.b16 %v53, %v52
  %v61 = vpack.c.b16 %v55, %v54
  %v62 = vpack.c.b16 %v57, %v56
  %v63 = vpack.c.b16 %v59, %v58
  %vm68 = vcmask 523264
  %v70 = vsel %vm68, %v42, 0
  %v73 = vsel %vm68, %v43, 0
  %75 = vmatprep.subr.bf16.mxu0 0
  %76 = vmatpush1.bf16.msra.mxu0 %v60
  %77 = vmatprep.subr.bf16.mxu0 0
  %78 = vmatpush1.bf16.msra.mxu0 %v61
  %79 = vmatprep.subr.bf16.mxu0 0
  %80 = vmatpush1.bf16.msra.mxu0 %v62
  %81 = vmatprep.subr.bf16.mxu0 0
  %82 = vmatpush1.bf16.msra.mxu0 %v63
  %83 = vmatprep.subr.bf16.mxu0 0
  %84 = vmatpush1.bf16.msra.mxu0 0
  %85 = vmatprep.subr.bf16.mxu0 0
  %86 = vmatpush1.bf16.msra.mxu0 0
  %87 = vmatprep.subr.bf16.mxu0 0
  %88 = vmatpush1.bf16.msra.mxu0 0
  %89 = vmatprep.subr.bf16.mxu0 0
  %90 = vmatpush1.bf16.msra.mxu0 0
  %91 = vmatprep.subr.bf16.mxu0 0
  %92 = vmatpush1.bf16.msra.mxu0 0
  %93 = vmatprep.subr.bf16.mxu0 0
  %94 = vmatpush1.bf16.msra.mxu0 0
  %95 = vmatprep.subr.bf16.mxu0 0
  %96 = vmatpush1.bf16.msra.mxu0 0
  %97 = vmatprep.subr.bf16.mxu0 0
  %98 = vmatpush1.bf16.msra.mxu0 0
  %99 = vmatprep.subr.bf16.mxu0 0
  %100 = vmatpush1.bf16.msra.mxu0 0
  %101 = vmatprep.subr.bf16.mxu0 0
  %102 = vmatpush1.bf16.msra.mxu0 0
  %103 = vmatprep.subr.bf16.mxu0 0
  %104 = vmatpush1.bf16.msra.mxu0 0
  %105 = vmatprep.subr.bf16.mxu0 0
  %106 = vmatpush1.bf16.msra.mxu0 0
  %107 = vmatprep.mubr.bf16.mxu0 0
  %108 = vmatmul.mubr.bf16.gmra.mrb[0].mxu0 %v70
  %v109 = vpop.f32.mrb[0].mxu0
  %v110 = vadd.f32 %v32, %v109
  %v111 = vpop.f32.mrb[0].mxu0
  %v112 = vpop.f32.mrb[0].mxu0
  %v113 = vadd.f32 %v32, %v112
  %v114 = vpop.f32.mrb[0].mxu0
  %115 = vmatprep.mubr.bf16.mxu0 0
  %116 = vmatmul.mubr.bf16.gmra.mrb[0].mxu0 %v73
  %v117 = vpop.f32.mrb[0].mxu0
  %v118 = vadd.f32 %v32, %v117
  %v119 = vpop.f32.mrb[0].mxu0
  %v120 = vpop.f32.mrb[0].mxu0
  %v121 = vadd.f32 %v32, %v120
  %v122 = vpop.f32.mrb[0].mxu0
  %123 = vdwg.mxu0
  %vm124 = vcmask 261120
  %125 = vst.msk [vmem:[%s3] sm:$0xff] %vm124, %v110
  %126 = vst.msk [vmem:[%s3 + $0x8] sm:$0xff] %vm124, %v113
  %127 = vst.msk [vmem:[%s3 + $0x10] sm:$0xff] %vm124, %v118
  %128 = vst.msk [vmem:[%s3 + $0x18] sm:$0xff] %vm124, %v121
  // Predicated region
  $region14: #{_lambda_.3} parent=0 // pred_check
    _
  $region15: #{_lambda_.3} parent=0 // pred_check_branch
    %130 = sbr.rel (0) target = $region17
  $region16: #{_lambda_.3} parent=0 // pred_region
    _
  $region17: #{_lambda_.3} parent=0 // pred_fallthru
    _
  // Predicated region
  $region18: #{_lambda_.3} parent=0 // pred_check
    _
  $region19: #{_lambda_.3} parent=0 // pred_check_branch
    %132 = sbr.rel (0) target = $region21
  $region20: #{_lambda_.3} parent=0 // pred_region
    _
  $region21: #{_lambda_.3} parent=0 // pred_fallthru
    _

// kernel: _lambda_.5
$region0: #{_lambda_.5}
  #allocation0 [shape = 'u32[]', space=smem, size = 0x4, offset = 0x4, fixed_abs, tag = 'smem constant byte address 0x4 - core index']
  #allocation1 [shape = 'u32[144,128]{1,0:T(1,128)}', space=vmem, size = 0x12000, scoped, tag = 'internal scratch']
  %s0 = inlined_call_operand.vmem [shape: f32[2,32], index: 0, kind: input, shape index: {}]
  %s1 = inlined_call_operand.vmem [shape: f32[1,32], index: 1, kind: input, shape index: {}]
  %s2 = inlined_call_operand.vmem [shape: f32[1,32], index: 2, kind: input, shape index: {}]
  %s3 = inlined_call_operand.vmem [shape: bf16[32,128], index: 3, kind: input, shape index: {}]
  %s4 = inlined_call_operand.vmem [shape: f32[1,128], index: 4, kind: input, shape index: {}]
  %s5 = inlined_call_operand.hbm [shape: f32[2,128], index: 5, kind: output, shape index: {}]
  %s6 = sld [smem:[#allocation0]]
  $region30: #{_lambda_.5} parent=0
    _
  %s8 = ssub.s32 1, %s6
  %s9 = scalar_select 0, %s8, %s6
  $region1: #{_lambda_.5} parent=0
    #allocation2 [shape = 'u8[1024]{0}', space=vmem, size = 0x400, scoped, tag = 'output window, operand 0, single buffered']
    #allocation3 [shape = 's32[1]{0}', space=sflag, size = 0x4, scoped, tag = 'scoped memory for _lambda_.5']
    %10 = vsyncpa [#allocation3], 0
    // Predicated region
    $region2: #{_lambda_.5} parent=1 // pred_check
      _
    $region3: #{_lambda_.5} parent=1 // pred_check_branch
      %12 = sbr.rel (0) target = $region5
    $region4: #{_lambda_.5} parent=1 // pred_region
      _
    $region5: #{_lambda_.5} parent=1 // pred_fallthru
      _
    // Predicated region
    $region6: #{_lambda_.5} parent=1 // pred_check
      _
    $region7: #{_lambda_.5} parent=1 // pred_check_branch
      %14 = sbr.rel (0) target = $region9
    $region8: #{_lambda_.5} parent=1 // pred_region
      _
    $region9: #{_lambda_.5} parent=1 // pred_fallthru
      _
    // Predicated region
    $region10: #{_lambda_.5} parent=1 // pred_check
      _
    $region11: #{_lambda_.5} parent=1 // pred_check_branch
      %16 = sbr.rel (0) target = $region13
    $region12: #{_lambda_.5} parent=1 // pred_region
      _
    $region13: #{_lambda_.5} parent=1 // pred_fallthru
      _
    // Predicated region
    $region14: #{_lambda_.5} parent=1 // pred_check
      _
    $region15: #{_lambda_.5} parent=1 // pred_check_branch
      %18 = sbr.rel (0) target = $region17
    $region16: #{_lambda_.5} parent=1 // pred_region
      _
    $region17: #{_lambda_.5} parent=1 // pred_fallthru
      _
    // Predicated region
    $region18: #{_lambda_.5} parent=1 // pred_check
      _
    $region19: #{_lambda_.5} parent=1 // pred_check_branch
      %20 = sbr.rel (0) target = $region21
    $region20: #{_lambda_.5} parent=1 // pred_region
      _
    $region21: #{_lambda_.5} parent=1 // pred_fallthru
      _
    %v22 = vld [vmem:[%s0] sm:$0x3]
    %v23 = vld [vmem:[%s1] sm:$0x1]
    %v24 = vld [vmem:[%s2] sm:$0x1]
    %vm25 = vcmask 254976
    %v26 = vsel %vm25, %v22, 0.0
    %27 = vadd.xlane.f32.xlu0 %v26
    %v28 = vpop.xlane.xlu0 %27
    %v29 = vrcp.pop 32.0
    %v30 = vmul.f32 %v28, %v29
    %v31 = vsub.f32 %v22, %v30
    %v32 = vmul.f32 %v31, %v31
    %v33 = vsel %vm25, %v32, 0.0
    %34 = vadd.xlane.f32.xlu0 %v33
    %v35 = vpop.xlane.xlu0 %34
    %v36 = vmul.f32 %v35, %v29
    %v37 = vadd.f32 %v36, 1e-05
    %v38 = vrsqrt.pop %v37
    %v39 = vmul.f32 %v31, %v38
    %v41 = vlaneseq
    %v42 = vshrl.u32 %v41, 7
    %v43 = vsub.s32 0, %v42
    %v44 = vrot.slane %v23, %v43
    %v46 = vmul.f32 %v39, %v44
    %v48 = vlaneseq
    %v49 = vshrl.u32 %v48, 7
    %v50 = vsub.s32 0, %v49
    %v51 = vrot.slane %v24, %v50
    %v53 = vadd.f32 %v46, %v51
    %v54 = vpack.c.bf16 %v53, %v53
    %v55 = vld [vmem:[%s3] sm:$0xf]
    %v56 = vld [vmem:[%s3 + $0x4] sm:$0xf]
    %v57 = vld [vmem:[%s3 + $0x8] sm:$0xf]
    %v58 = vld [vmem:[%s3 + $0xc] sm:$0xf]
    %v59 = vld [vmem:[%s4] sm:$0x1]
    %v61 = vlaneseq
    %v62 = vshrl.u32 %v61, 7
    %v63 = vsub.s32 0, %v62
    %v64 = vrot.slane %v59, %v63
    %v70 = vunpack.c.l.b16 %v55
    %v71 = vunpack.c.l.b16 %v56
    %v72 = vunpack.c.l.b16 %v57
    %v73 = vunpack.c.l.b16 %v58
    %v74 = vpack.c.b16 %v71, %v70
    %v75 = vpack.c.b16 %v73, %v72
    %vm78 = vcmask 261120
    %v80 = vsel %vm78, %v54, 0
    %82 = vmatprep.subr.bf16.mxu0 0
    %83 = vmatpush1.bf16.msra.mxu0 %v74
    %84 = vmatprep.subr.bf16.mxu0 0
    %85 = vmatpush1.bf16.msra.mxu0 %v75
    %86 = vmatprep.subr.bf16.mxu0 0
    %87 = vmatpush1.bf16.msra.mxu0 0
    %88 = vmatprep.subr.bf16.mxu0 0
    %89 = vmatpush1.bf16.msra.mxu0 0
    %90 = vmatprep.subr.bf16.mxu0 0
    %91 = vmatpush1.bf16.msra.mxu0 0
    %92 = vmatprep.subr.bf16.mxu0 0
    %93 = vmatpush1.bf16.msra.mxu0 0
    %94 = vmatprep.subr.bf16.mxu0 0
    %95 = vmatpush1.bf16.msra.mxu0 0
    %96 = vmatprep.subr.bf16.mxu0 0
    %97 = vmatpush1.bf16.msra.mxu0 0
    %98 = vmatprep.subr.bf16.mxu0 0
    %99 = vmatpush1.bf16.msra.mxu0 0
    %100 = vmatprep.subr.bf16.mxu0 0
    %101 = vmatpush1.bf16.msra.mxu0 0
    %102 = vmatprep.subr.bf16.mxu0 0
    %103 = vmatpush1.bf16.msra.mxu0 0
    %104 = vmatprep.subr.bf16.mxu0 0
    %105 = vmatpush1.bf16.msra.mxu0 0
    %106 = vmatprep.subr.bf16.mxu0 0
    %107 = vmatpush1.bf16.msra.mxu0 0
    %108 = vmatprep.subr.bf16.mxu0 0
    %109 = vmatpush1.bf16.msra.mxu0 0
    %110 = vmatprep.subr.bf16.mxu0 0
    %111 = vmatpush1.bf16.msra.mxu0 0
    %112 = vmatprep.subr.bf16.mxu0 0
    %113 = vmatpush1.bf16.msra.mxu0 0
    %114 = vmatprep.mubr.bf16.mxu0 0
    %115 = vmatmul.mubr.bf16.gmra.mrb[0].mxu0 %v80
    %v116 = vpop.f32.mrb[0].mxu0
    %v117 = vadd.f32 %v64, %v116
    %v118 = vpop.f32.mrb[0].mxu0
    %v119 = vpop.f32.mrb[0].mxu0
    %v120 = vpop.f32.mrb[0].mxu0
    %121 = vdwg.mxu0
    %122 = vst [vmem:[#allocation2] sm:$0x3] %v117
    // Predicated region
    $region22: #{_lambda_.5} parent=1 // pred_check
      _
    $region23: #{_lambda_.5} parent=1 // pred_check_branch
      %124 = sbr.rel (0) target = $region25
    $region24: #{_lambda_.5} parent=1 // pred_region
      %s126 = ssub.s32 32, 32
      %127 = vsyncadd [#allocation3], %s126
      %s129 = sshll.u32 [#allocation2], 4
      %s130 = int_to_ptr.vmem [resolvable:$true] %s129
      %132 = dma.vmem_to_hbm [thread:$0]  %s130, 32, %s5, [#allocation3]
    $region25: #{_lambda_.5} parent=1 // pred_fallthru
      _
    // Predicated region
    $region26: #{_lambda_.5} parent=1 // pred_check
      _
    $region27: #{_lambda_.5} parent=1 // pred_check_branch
      %134 = sbr.rel (0) target = $region29
    $region28: #{_lambda_.5} parent=1 // pred_region
      %135 = dma.done [#allocation3], 32
    $region29: #{_lambda_.5} parent=1 // pred_fallthru
      _
    %136 = vsyncpa [#allocation3], 1

// kernel: _lambda_.4
$region0: #{_lambda_.4}
  #allocation0 [shape = 'u32[]', space=smem, size = 0x4, offset = 0x4, fixed_abs, tag = 'smem constant byte address 0x4 - core index']
  #allocation1 [shape = 'u32[144,128]{1,0:T(1,128)}', space=vmem, size = 0x12000, scoped, tag = 'internal scratch']
  %s0 = inlined_call_operand.vmem [shape: f32[2,24,32], index: 0, kind: input, shape index: {}]
  %s1 = inlined_call_operand.vmem [shape: f32[2,1,32], index: 1, kind: input, shape index: {}]
  %s2 = inlined_call_operand.vmem [shape: f32[2,1,32], index: 2, kind: input, shape index: {}]
  %s3 = inlined_call_operand.vmem [shape: bf16[2,32,96], index: 3, kind: input, shape index: {}]
  %s4 = inlined_call_operand.vmem [shape: f32[2,1,96], index: 4, kind: input, shape index: {}]
  %s5 = inlined_call_operand.vmem [shape: bf16[2,32,32], index: 5, kind: input, shape index: {}]
  %s6 = inlined_call_operand.vmem [shape: f32[2,1,32], index: 6, kind: input, shape index: {}]
  %s7 = inlined_call_operand.vmem [shape: f32[2,1,32], index: 7, kind: input, shape index: {}]
  %s8 = inlined_call_operand.vmem [shape: f32[2,1,32], index: 8, kind: input, shape index: {}]
  %s9 = inlined_call_operand.vmem [shape: bf16[2,32,64], index: 9, kind: input, shape index: {}]
  %s10 = inlined_call_operand.vmem [shape: f32[2,1,64], index: 10, kind: input, shape index: {}]
  %s11 = inlined_call_operand.vmem [shape: bf16[2,64,32], index: 11, kind: input, shape index: {}]
  %s12 = inlined_call_operand.vmem [shape: f32[2,1,32], index: 12, kind: input, shape index: {}]
  %s13 = inlined_call_operand.vmem [shape: f32[2,24,32], index: 13, kind: output, shape index: {}]
  %s14 = sld [smem:[#allocation0]]
  $region89: #{_lambda_.4} parent=0
    _
  %s16 = ssub.s32 1, %s14
  %s17 = scalar_select 0, %s16, %s14
  loop: start=0, step=1, limit=4
  $region2: #{_lambda_.4} parent=0 // loop_pre_header
    _
  $region3: #{_lambda_.4} parent=0 // loop_header
    %s19 = sphi 0, %s23
    %p20 = scmp.ge.s32.totalorder %s19, 4
    %s26 = sphi 0, %s38
    %s27 = sphi 0, %s34
    %s28 = sphi 0, %s26
    %s29 = sphi 0, %s27
    %s30 = sphi 0, %s28
    %s31 = sphi 0, %s29
    %s41 = sphi 0, %s43
    %s44 = sphi 0, %s41
    %s45 = sphi 0, %s44
    %s61 = sphi 0, %s45
    %s67 = sphi 0, %s69
    %s70 = sphi 0, %s67
    %s71 = sphi 0, %s70
    %s87 = sphi 0, %s71
    %s93 = sphi 0, %s95
    %s96 = sphi 0, %s93
    %s97 = sphi 0, %s96
    %s113 = sphi 0, %s97
    %s119 = sphi 0, %s121
    %s122 = sphi 0, %s119
    %s123 = sphi 0, %s122
    %s139 = sphi 0, %s123
    %s145 = sphi 0, %s147
    %s148 = sphi 0, %s145
    %s149 = sphi 0, %s148
    %s165 = sphi 0, %s149
    %s171 = sphi 0, %s173
    %s174 = sphi 0, %s171
    %s175 = sphi 0, %s174
    %s191 = sphi 0, %s175
    %s197 = sphi 0, %s199
    %s200 = sphi 0, %s197
    %s201 = sphi 0, %s200
    %s217 = sphi 0, %s201
    %s223 = sphi 0, %s225
    %s226 = sphi 0, %s223
    %s227 = sphi 0, %s226
    %s243 = sphi 0, %s227
    %s249 = sphi 0, %s251
    %s252 = sphi 0, %s249
    %s253 = sphi 0, %s252
    %s269 = sphi 0, %s253
    %s275 = sphi 0, %s277
    %s278 = sphi 0, %s275
    %s279 = sphi 0, %s278
    %s295 = sphi 0, %s279
    %s301 = sphi 0, %s303
    %s304 = sphi 0, %s301
    %s305 = sphi 0, %s304
    %s321 = sphi 0, %s305
    %s327 = sphi 0, %s329
    %s330 = sphi 0, %s327
    %s331 = sphi 0, %s330
    %s347 = sphi 0, %s331
    %s353 = sphi 0, %s355
    %s356 = sphi 0, %s353
    %s357 = sphi 0, %s356
    %s373 = sphi 0, %s357
    %s379 = sphi 0, %s381
    %s382 = sphi 0, %s379
    %s383 = sphi 0, %s382
    %s399 = sphi 0, %s383
  $region4: #{_lambda_.4} parent=0 // loop_header_branch
    %22 = sbr.rel (%p20) target = $region8
  $region5: #{_lambda_.4} parent=0 // loop_body
    %s24 = ssub.s32 %s19, 1
    %s25 = ssub.s32 %s19, 2
    %s32 = sadd.s32 1, %s27
    %p33 = scmp.ge.s32.totalorder %s32, 2
    %s34 = scalar_select %p33, 0, %s32
    %s35 = sadd.s32 1, %s26
    %s36 = scalar_select %p33, %s35, %s26
    %p37 = scmp.ge.s32.totalorder %s36, 1
    %s38 = scalar_select %p37, 0, %s36
    %s39 = ssub.s32 %s26, %s38
    %p40 = scmp.eq.s32.totalorder %s39, 0
    %s42 = sadd.s32 %s41, 1
    %s43 = scalar_select %p40, %s41, %s42
    %p46 = pneg %p40
    %p47 = scmp.eq.s32.totalorder %s19, 1
    %p48 = por %p46, %p47
    %p49 = scmp.ne.s32.totalorder %s41, %s44
    %p50 = scmp.eq.s32.totalorder %s19, 0
    %p51 = por %p49, %p50
    %p52 = scmp.ne.s32.totalorder %s41, %s44
    %p53 = scmp.eq.s32.totalorder %s24, 1
    %p54 = por %p52, %p53
    %p55 = scmp.ne.s32.totalorder %s44, %s45
    %p56 = scmp.eq.s32.totalorder %s24, 0
    %p57 = por %p55, %p56
    %p58 = scmp.ne.s32.totalorder %s44, %s45
    %p59 = scmp.eq.s32.totalorder %s25, 1
    %p60 = por %p58, %p59
    %p62 = scmp.ne.s32.totalorder %s45, %s61
    %p63 = scmp.eq.s32.totalorder %s25, 0
    %p64 = por %p62, %p63
    %s65 = ssub.s32 %s27, %s34
    %p66 = scmp.eq.s32.totalorder %s65, 0
    %s68 = sadd.s32 %s67, 1
    %s69 = scalar_select %p66, %s67, %s68
    %p72 = pneg %p66
    %p73 = scmp.eq.s32.totalorder %s19, 1
    %p74 = por %p72, %p73
    %p75 = scmp.ne.s32.totalorder %s67, %s70
    %p76 = scmp.eq.s32.totalorder %s19, 0
    %p77 = por %p75, %p76
    %p78 = scmp.ne.s32.totalorder %s67, %s70
    %p79 = scmp.eq.s32.totalorder %s24, 1
    %p80 = por %p78, %p79
    %p81 = scmp.ne.s32.totalorder %s70, %s71
    %p82 = scmp.eq.s32.totalorder %s24, 0
    %p83 = por %p81, %p82
    %p84 = scmp.ne.s32.totalorder %s70, %s71
    %p85 = scmp.eq.s32.totalorder %s25, 1
    %p86 = por %p84, %p85
    %p88 = scmp.ne.s32.totalorder %s71, %s87
    %p89 = scmp.eq.s32.totalorder %s25, 0
    %p90 = por %p88, %p89
    %s91 = ssub.s32 %s27, %s34
    %p92 = scmp.eq.s32.totalorder %s91, 0
    %s94 = sadd.s32 %s93, 1
    %s95 = scalar_select %p92, %s93, %s94
    %p98 = pneg %p92
    %p99 = scmp.eq.s32.totalorder %s19, 1
    %p100 = por %p98, %p99
    %p101 = scmp.ne.s32.totalorder %s93, %s96
    %p102 = scmp.eq.s32.totalorder %s19, 0
    %p103 = por %p101, %p102
    %p104 = scmp.ne.s32.totalorder %s93, %s96
    %p105 = scmp.eq.s32.totalorder %s24, 1
    %p106 = por %p104, %p105
    %p107 = scmp.ne.s32.totalorder %s96, %s97
    %p108 = scmp.eq.s32.totalorder %s24, 0
    %p109 = por %p107, %p108
    %p110 = scmp.ne.s32.totalorder %s96, %s97
    %p111 = scmp.eq.s32.totalorder %s25, 1
    %p112 = por %p110, %p111
    %p114 = scmp.ne.s32.totalorder %s97, %s113
    %p115 = scmp.eq.s32.totalorder %s25, 0
    %p116 = por %p114, %p115
    %s117 = ssub.s32 %s27, %s34
    %p118 = scmp.eq.s32.totalorder %s117, 0
    %s120 = sadd.s32 %s119, 1
    %s121 = scalar_select %p118, %s119, %s120
    %p124 = pneg %p118
    %p125 = scmp.eq.s32.totalorder %s19, 1
    %p126 = por %p124, %p125
    %p127 = scmp.ne.s32.totalorder %s119, %s122
    %p128 = scmp.eq.s32.totalorder %s19, 0
    %p129 = por %p127, %p128
    %p130 = scmp.ne.s32.totalorder %s119, %s122
    %p131 = scmp.eq.s32.totalorder %s24, 1
    %p132 = por %p130, %p131
    %p133 = scmp.ne.s32.totalorder %s122, %s123
    %p134 = scmp.eq.s32.totalorder %s24, 0
    %p135 = por %p133, %p134
    %p136 = scmp.ne.s32.totalorder %s122, %s123
    %p137 = scmp.eq.s32.totalorder %s25, 1
    %p138 = por %p136, %p137
    %p140 = scmp.ne.s32.totalorder %s123, %s139
    %p141 = scmp.eq.s32.totalorder %s25, 0
    %p142 = por %p140, %p141
    %s143 = ssub.s32 %s27, %s34
    %p144 = scmp.eq.s32.totalorder %s143, 0
    %s146 = sadd.s32 %s145, 1
    %s147 = scalar_select %p144, %s145, %s146
    %p150 = pneg %p144
    %p151 = scmp.eq.s32.totalorder %s19, 1
    %p152 = por %p150, %p151
    %p153 = scmp.ne.s32.totalorder %s145, %s148
    %p154 = scmp.eq.s32.totalorder %s19, 0
    %p155 = por %p153, %p154
    %p156 = scmp.ne.s32.totalorder %s145, %s148
    %p157 = scmp.eq.s32.totalorder %s24, 1
    %p158 = por %p156, %p157
    %p159 = scmp.ne.s32.totalorder %s148, %s149
    %p160 = scmp.eq.s32.totalorder %s24, 0
    %p161 = por %p159, %p160
    %p162 = scmp.ne.s32.totalorder %s148, %s149
    %p163 = scmp.eq.s32.totalorder %s25, 1
    %p164 = por %p162, %p163
    %p166 = scmp.ne.s32.totalorder %s149, %s165
    %p167 = scmp.eq.s32.totalorder %s25, 0
    %p168 = por %p166, %p167
    %s169 = ssub.s32 %s27, %s34
    %p170 = scmp.eq.s32.totalorder %s169, 0
    %s172 = sadd.s32 %s171, 1
    %s173 = scalar_select %p170, %s171, %s172
    %p176 = pneg %p170
    %p177 = scmp.eq.s32.totalorder %s19, 1
    %p178 = por %p176, %p177
    %p179 = scmp.ne.s32.totalorder %s171, %s174
    %p180 = scmp.eq.s32.totalorder %s19, 0
    %p181 = por %p179, %p180
    %p182 = scmp.ne.s32.totalorder %s171, %s174
    %p183 = scmp.eq.s32.totalorder %s24, 1
    %p184 = por %p182, %p183
    %p185 = scmp.ne.s32.totalorder %s174, %s175
    %p186 = scmp.eq.s32.totalorder %s24, 0
    %p187 = por %p185, %p186
    %p188 = scmp.ne.s32.totalorder %s174, %s175
    %p189 = scmp.eq.s32.totalorder %s25, 1
    %p190 = por %p188, %p189
    %p192 = scmp.ne.s32.totalorder %s175, %s191
    %p193 = scmp.eq.s32.totalorder %s25, 0
    %p194 = por %p192, %p193
    %s195 = ssub.s32 %s27, %s34
    %p196 = scmp.eq.s32.totalorder %s195, 0
    %s198 = sadd.s32 %s197, 1
    %s199 = scalar_select %p196, %s197, %s198
    %p202 = pneg %p196
    %p203 = scmp.eq.s32.totalorder %s19, 1
    %p204 = por %p202, %p203
    %p205 = scmp.ne.s32.totalorder %s197, %s200
    %p206 = scmp.eq.s32.totalorder %s19, 0
    %p207 = por %p205, %p206
    %p208 = scmp.ne.s32.totalorder %s197, %s200
    %p209 = scmp.eq.s32.totalorder %s24, 1
    %p210 = por %p208, %p209
    %p211 = scmp.ne.s32.totalorder %s200, %s201
    %p212 = scmp.eq.s32.totalorder %s24, 0
    %p213 = por %p211, %p212
    %p214 = scmp.ne.s32.totalorder %s200, %s201
    %p215 = scmp.eq.s32.totalorder %s25, 1
    %p216 = por %p214, %p215
    %p218 = scmp.ne.s32.totalorder %s201, %s217
    %p219 = scmp.eq.s32.totalorder %s25, 0
    %p220 = por %p218, %p219
    %s221 = ssub.s32 %s27, %s34
    %p222 = scmp.eq.s32.totalorder %s221, 0
    %s224 = sadd.s32 %s223, 1
    %s225 = scalar_select %p222, %s223, %s224
    %p228 = pneg %p222
    %p229 = scmp.eq.s32.totalorder %s19, 1
    %p230 = por %p228, %p229
    %p231 = scmp.ne.s32.totalorder %s223, %s226
    %p232 = scmp.eq.s32.totalorder %s19, 0
    %p233 = por %p231, %p232
    %p234 = scmp.ne.s32.totalorder %s223, %s226
    %p235 = scmp.eq.s32.totalorder %s24, 1
    %p236 = por %p234, %p235
    %p237 = scmp.ne.s32.totalorder %s226, %s227
    %p238 = scmp.eq.s32.totalorder %s24, 0
    %p239 = por %p237, %p238
    %p240 = scmp.ne.s32.totalorder %s226, %s227
    %p241 = scmp.eq.s32.totalorder %s25, 1
    %p242 = por %p240, %p241
    %p244 = scmp.ne.s32.totalorder %s227, %s243
    %p245 = scmp.eq.s32.totalorder %s25, 0
    %p246 = por %p244, %p245
    %s247 = ssub.s32 %s27, %s34
    %p248 = scmp.eq.s32.totalorder %s247, 0
    %s250 = sadd.s32 %s249, 1
    %s251 = scalar_select %p248, %s249, %s250
    %p254 = pneg %p248
    %p255 = scmp.eq.s32.totalorder %s19, 1
    %p256 = por %p254, %p255
    %p257 = scmp.ne.s32.totalorder %s249, %s252
    %p258 = scmp.eq.s32.totalorder %s19, 0
    %p259 = por %p257, %p258
    %p260 = scmp.ne.s32.totalorder %s249, %s252
    %p261 = scmp.eq.s32.totalorder %s24, 1
    %p262 = por %p260, %p261
    %p263 = scmp.ne.s32.totalorder %s252, %s253
    %p264 = scmp.eq.s32.totalorder %s24, 0
    %p265 = por %p263, %p264
    %p266 = scmp.ne.s32.totalorder %s252, %s253
    %p267 = scmp.eq.s32.totalorder %s25, 1
    %p268 = por %p266, %p267
    %p270 = scmp.ne.s32.totalorder %s253, %s269
    %p271 = scmp.eq.s32.totalorder %s25, 0
    %p272 = por %p270, %p271
    %s273 = ssub.s32 %s27, %s34
    %p274 = scmp.eq.s32.totalorder %s273, 0
    %s276 = sadd.s32 %s275, 1
    %s277 = scalar_select %p274, %s275, %s276
    %p280 = pneg %p274
    %p281 = scmp.eq.s32.totalorder %s19, 1
    %p282 = por %p280, %p281
    %p283 = scmp.ne.s32.totalorder %s275, %s278
    %p284 = scmp.eq.s32.totalorder %s19, 0
    %p285 = por %p283, %p284
    %p286 = scmp.ne.s32.totalorder %s275, %s278
    %p287 = scmp.eq.s32.totalorder %s24, 1
    %p288 = por %p286, %p287
    %p289 = scmp.ne.s32.totalorder %s278, %s279
    %p290 = scmp.eq.s32.totalorder %s24, 0
    %p291 = por %p289, %p290
    %p292 = scmp.ne.s32.totalorder %s278, %s279
    %p293 = scmp.eq.s32.totalorder %s25, 1
    %p294 = por %p292, %p293
    %p296 = scmp.ne.s32.totalorder %s279, %s295
    %p297 = scmp.eq.s32.totalorder %s25, 0
    %p298 = por %p296, %p297
    %s299 = ssub.s32 %s27, %s34
    %p300 = scmp.eq.s32.totalorder %s299, 0
    %s302 = sadd.s32 %s301, 1
    %s303 = scalar_select %p300, %s301, %s302
    %p306 = pneg %p300
    %p307 = scmp.eq.s32.totalorder %s19, 1
    %p308 = por %p306, %p307
    %p309 = scmp.ne.s32.totalorder %s301, %s304
    %p310 = scmp.eq.s32.totalorder %s19, 0
    %p311 = por %p309, %p310
    %p312 = scmp.ne.s32.totalorder %s301, %s304
    %p313 = scmp.eq.s32.totalorder %s24, 1
    %p314 = por %p312, %p313
    %p315 = scmp.ne.s32.totalorder %s304, %s305
    %p316 = scmp.eq.s32.totalorder %s24, 0
    %p317 = por %p315, %p316
    %p318 = scmp.ne.s32.totalorder %s304, %s305
    %p319 = scmp.eq.s32.totalorder %s25, 1
    %p320 = por %p318, %p319
    %p322 = scmp.ne.s32.totalorder %s305, %s321
    %p323 = scmp.eq.s32.totalorder %s25, 0
    %p324 = por %p322, %p323
    %s325 = ssub.s32 %s27, %s34
    %p326 = scmp.eq.s32.totalorder %s325, 0
    %s328 = sadd.s32 %s327, 1
    %s329 = scalar_select %p326, %s327, %s328
    %p332 = pneg %p326
    %p333 = scmp.eq.s32.totalorder %s19, 1
    %p334 = por %p332, %p333
    %p335 = scmp.ne.s32.totalorder %s327, %s330
    %p336 = scmp.eq.s32.totalorder %s19, 0
    %p337 = por %p335, %p336
    %p338 = scmp.ne.s32.totalorder %s327, %s330
    %p339 = scmp.eq.s32.totalorder %s24, 1
    %p340 = por %p338, %p339
    %p341 = scmp.ne.s32.totalorder %s330, %s331
    %p342 = scmp.eq.s32.totalorder %s24, 0
    %p343 = por %p341, %p342
    %p344 = scmp.ne.s32.totalorder %s330, %s331
    %p345 = scmp.eq.s32.totalorder %s25, 1
    %p346 = por %p344, %p345
    %p348 = scmp.ne.s32.totalorder %s331, %s347
    %p349 = scmp.eq.s32.totalorder %s25, 0
    %p350 = por %p348, %p349
    %s351 = ssub.s32 %s27, %s34
    %p352 = scmp.eq.s32.totalorder %s351, 0
    %s354 = sadd.s32 %s353, 1
    %s355 = scalar_select %p352, %s353, %s354
    %p358 = pneg %p352
    %p359 = scmp.eq.s32.totalorder %s19, 1
    %p360 = por %p358, %p359
    %p361 = scmp.ne.s32.totalorder %s353, %s356
    %p362 = scmp.eq.s32.totalorder %s19, 0
    %p363 = por %p361, %p362
    %p364 = scmp.ne.s32.totalorder %s353, %s356
    %p365 = scmp.eq.s32.totalorder %s24, 1
    %p366 = por %p364, %p365
    %p367 = scmp.ne.s32.totalorder %s356, %s357
    %p368 = scmp.eq.s32.totalorder %s24, 0
    %p369 = por %p367, %p368
    %p370 = scmp.ne.s32.totalorder %s356, %s357
    %p371 = scmp.eq.s32.totalorder %s25, 1
    %p372 = por %p370, %p371
    %p374 = scmp.ne.s32.totalorder %s357, %s373
    %p375 = scmp.eq.s32.totalorder %s25, 0
    %p376 = por %p374, %p375
    %s377 = ssub.s32 %s26, %s38
    %p378 = scmp.eq.s32.totalorder %s377, 0
    %s380 = sadd.s32 %s379, 1
    %s381 = scalar_select %p378, %s379, %s380
    %p384 = pneg %p378
    %p385 = scmp.eq.s32.totalorder %s19, 1
    %p386 = por %p384, %p385
    %p387 = scmp.ne.s32.totalorder %s379, %s382
    %p388 = scmp.eq.s32.totalorder %s19, 0
    %p389 = por %p387, %p388
    %p390 = scmp.ne.s32.totalorder %s379, %s382
    %p391 = scmp.eq.s32.totalorder %s24, 1
    %p392 = por %p390, %p391
    %p393 = scmp.ne.s32.totalorder %s382, %s383
    %p394 = scmp.eq.s32.totalorder %s24, 0
    %p395 = por %p393, %p394
    %p396 = scmp.ne.s32.totalorder %s382, %s383
    %p397 = scmp.eq.s32.totalorder %s25, 1
    %p398 = por %p396, %p397
    %p400 = scmp.ne.s32.totalorder %s383, %s399
    %p401 = scmp.eq.s32.totalorder %s25, 0
    %p402 = por %p400, %p401
    %p403 = scmp.le.s32.totalorder 1, %s19
    %p404 = scmp.lt.s32.totalorder %s19, 3
    %p405 = pnand %p403, %p404
    %p406 = pneg %p405
    // Predicated region
    $region9: #{_lambda_.4} parent=5 // pred_check
      _
    $region10: #{_lambda_.4} parent=5 // pred_check_branch
      %408 = sbr.rel (%p405) target = $region12
    $region11: #{_lambda_.4} parent=5 // pred_region
      %s409 = ssub.s32 %s19, 1
      // Predicated region
      $region13: #{_lambda_.4} parent=11 // pred_check
        %p410 = pneg %p57
      $region14: #{_lambda_.4} parent=11 // pred_check_branch
        %412 = sbr.rel (%p410) target = $region16
      $region15: #{_lambda_.4} parent=11 // pred_region
        %s413 = smul.u32 2, %s28
        %p414 = scmp.lt.s32.totalorder %s413, 1
        %s415 = scalar_select %p414, %s413, 1
        %s416 = smul.addr %s415, 3
        %s417 = smul.addr %s416, 8
        %s418 = scalar_lea.vmem %s0, %s417
        %s419 = smul.u32 2, %s28
      $region16: #{_lambda_.4} parent=11 // pred_fallthru
        _
    $region12: #{_lambda_.4} parent=5 // pred_fallthru
      _
    %p420 = scmp.lt.s32.totalorder %s19, 2
    // Predicated region
    $region17: #{_lambda_.4} parent=5 // pred_check
      %p421 = pneg %p420
    $region18: #{_lambda_.4} parent=5 // pred_check_branch
      %423 = sbr.rel (%p421) target = $region20
    $region19: #{_lambda_.4} parent=5 // pred_region
      // Predicated region
      $region21: #{_lambda_.4} parent=19 // pred_check
        %p424 = pneg %p77
      $region22: #{_lambda_.4} parent=19 // pred_check_branch
        %426 = sbr.rel (%p424) target = $region24
      $region23: #{_lambda_.4} parent=19 // pred_region
        %p427 = scmp.lt.s32.totalorder %s27, 1
        %s428 = scalar_select %p427, %s27, 1
        %s429 = scalar_lea.vmem %s1, %s428
      $region24: #{_lambda_.4} parent=19 // pred_fallthru
        _
      // Predicated region
      $region25: #{_lambda_.4} parent=19 // pred_check
        %p430 = pneg %p103
      $region26: #{_lambda_.4} parent=19 // pred_check_branch
        %432 = sbr.rel (%p430) target = $region28
      $region27: #{_lambda_.4} parent=19 // pred_region
        %p433 = scmp.lt.s32.totalorder %s27, 1
        %s434 = scalar_select %p433, %s27, 1
        %s435 = scalar_lea.vmem %s2, %s434
      $region28: #{_lambda_.4} parent=19 // pred_fallthru
        _
      // Predicated region
      $region29: #{_lambda_.4} parent=19 // pred_check
        %p436 = pneg %p129
      $region30: #{_lambda_.4} parent=19 // pred_check_branch
        %438 = sbr.rel (%p436) target = $region32
      $region31: #{_lambda_.4} parent=19 // pred_region
        %p439 = scmp.lt.s32.totalorder %s27, 1
        %s440 = scalar_select %p439, %s27, 1
        %s441 = smul.addr %s440, 4
        %s442 = smul.addr %s441, 4
        %s443 = scalar_lea.vmem %s3, %s442
      $region32: #{_lambda_.4} parent=19 // pred_fallthru
        _
      // Predicated region
      $region33: #{_lambda_.4} parent=19 // pred_check
        %p444 = pneg %p155
      $region34: #{_lambda_.4} parent=19 // pred_check_branch
        %446 = sbr.rel (%p444) target = $region36
      $region35: #{_lambda_.4} parent=19 // pred_region
        %p447 = scmp.lt.s32.totalorder %s27, 1
        %s448 = scalar_select %p447, %s27, 1
        %s449 = scalar_lea.vmem %s4, %s448
      $region36: #{_lambda_.4} parent=19 // pred_fallthru
        _
      // Predicated region
      $region37: #{_lambda_.4} parent=19 // pred_check
        %p450 = pneg %p181
      $region38: #{_lambda_.4} parent=19 // pred_check_branch
        %452 = sbr.rel (%p450) target = $region40
      $region39: #{_lambda_.4} parent=19 // pred_region
        %p453 = scmp.lt.s32.totalorder %s27, 1
        %s454 = scalar_select %p453, %s27, 1
        %s455 = smul.addr %s454, 4
        %s456 = smul.addr %s455, 4
        %s457 = scalar_lea.vmem %s5, %s456
      $region40: #{_lambda_.4} parent=19 // pred_fallthru
        _
      // Predicated region
      $region41: #{_lambda_.4} parent=19 // pred_check
        %p458 = pneg %p207
      $region42: #{_lambda_.4} parent=19 // pred_check_branch
        %460 = sbr.rel (%p458) target = $region44
      $region43: #{_lambda_.4} parent=19 // pred_region
        %p461 = scmp.lt.s32.totalorder %s27, 1
        %s462 = scalar_select %p461, %s27, 1
        %s463 = scalar_lea.vmem %s6, %s462
      $region44: #{_lambda_.4} parent=19 // pred_fallthru
        _
      // Predicated region
      $region45: #{_lambda_.4} parent=19 // pred_check
        %p464 = pneg %p233
      $region46: #{_lambda_.4} parent=19 // pred_check_branch
        %466 = sbr.rel (%p464) target = $region48
      $region47: #{_lambda_.4} parent=19 // pred_region
        %p467 = scmp.lt.s32.totalorder %s27, 1
        %s468 = scalar_select %p467, %s27, 1
        %s469 = scalar_lea.vmem %s7, %s468
      $region48: #{_lambda_.4} parent=19 // pred_fallthru
        _
      // Predicated region
      $region49: #{_lambda_.4} parent=19 // pred_check
        %p470 = pneg %p259
      $region50: #{_lambda_.4} parent=19 // pred_check_branch
        %472 = sbr.rel (%p470) target = $region52
      $region51: #{_lambda_.4} parent=19 // pred_region
        %p473 = scmp.lt.s32.totalorder %s27, 1
        %s474 = scalar_select %p473, %s27, 1
        %s475 = scalar_lea.vmem %s8, %s474
      $region52: #{_lambda_.4} parent=19 // pred_fallthru
        _
      // Predicated region
      $region53: #{_lambda_.4} parent=19 // pred_check
        %p476 = pneg %p285
      $region54: #{_lambda_.4} parent=19 // pred_check_branch
        %478 = sbr.rel (%p476) target = $region56
      $region55: #{_lambda_.4} parent=19 // pred_region
        %p479 = scmp.lt.s32.totalorder %s27, 1
        %s480 = scalar_select %p479, %s27, 1
        %s481 = smul.addr %s480, 4
        %s482 = smul.addr %s481, 4
        %s483 = scalar_lea.vmem %s9, %s482
      $region56: #{_lambda_.4} parent=19 // pred_fallthru
        _
      // Predicated region
      $region57: #{_lambda_.4} parent=19 // pred_check
        %p484 = pneg %p311
      $region58: #{_lambda_.4} parent=19 // pred_check_branch
        %486 = sbr.rel (%p484) target = $region60
      $region59: #{_lambda_.4} parent=19 // pred_region
        %p487 = scmp.lt.s32.totalorder %s27, 1
        %s488 = scalar_select %p487, %s27, 1
        %s489 = scalar_lea.vmem %s10, %s488
      $region60: #{_lambda_.4} parent=19 // pred_fallthru
        _
      // Predicated region
      $region61: #{_lambda_.4} parent=19 // pred_check
        %p490 = pneg %p337
      $region62: #{_lambda_.4} parent=19 // pred_check_branch
        %492 = sbr.rel (%p490) target = $region64
      $region63: #{_lambda_.4} parent=19 // pred_region
        %p493 = scmp.lt.s32.totalorder %s27, 1
        %s494 = scalar_select %p493, %s27, 1
        %s495 = smul.addr %s494, 8
        %s496 = smul.addr %s495, 4
        %s497 = scalar_lea.vmem %s11, %s496
      $region64: #{_lambda_.4} parent=19 // pred_fallthru
        _
      // Predicated region
      $region65: #{_lambda_.4} parent=19 // pred_check
        %p498 = pneg %p363
      $region66: #{_lambda_.4} parent=19 // pred_check_branch
        %500 = sbr.rel (%p498) target = $region68
      $region67: #{_lambda_.4} parent=19 // pred_region
        %p501 = scmp.lt.s32.totalorder %s27, 1
        %s502 = scalar_select %p501, %s27, 1
        %s503 = scalar_lea.vmem %s12, %s502
      $region68: #{_lambda_.4} parent=19 // pred_fallthru
        _
    $region20: #{_lambda_.4} parent=5 // pred_fallthru
      _
    %p504 = scmp.le.s32.totalorder 1, %s19
    %p505 = scmp.lt.s32.totalorder %s19, 3
    %p506 = pnand %p504, %p505
    %p507 = pneg %p506
    // Predicated region
    $region69: #{_lambda_.4} parent=5 // pred_check
      _
    $region70: #{_lambda_.4} parent=5 // pred_check_branch
      %509 = sbr.rel (%p506) target = $region72
    $region71: #{_lambda_.4} parent=5 // pred_region
      %s510 = ssub.s32 %s19, 1
      %s511 = smul.u32 2, %s28
      %p512 = scmp.lt.s32.totalorder %s511, 1
      %s513 = scalar_select %p512, %s511, 1
      %s514 = smul.addr %s513, 3
      %s515 = smul.addr %s514, 8
      %s516 = scalar_lea.vmem %s0, %s515
      %p517 = pneg %p57
      %p518 = pneg %p54
      %p519 = scmp.lt.s32.totalorder %s29, 1
      %s520 = scalar_select %p519, %s29, 1
      %s521 = scalar_lea.vmem %s1, %s520
      %p522 = pneg %p83
      %p523 = pneg %p80
      %p524 = scmp.lt.s32.totalorder %s29, 1
      %s525 = scalar_select %p524, %s29, 1
      %s526 = scalar_lea.vmem %s2, %s525
      %p527 = pneg %p109
      %p528 = pneg %p106
      %p529 = scmp.lt.s32.totalorder %s29, 1
      %s530 = scalar_select %p529, %s29, 1
      %s531 = smul.addr %s530, 4
      %s532 = smul.addr %s531, 4
      %s533 = scalar_lea.vmem %s3, %s532
      %p534 = pneg %p135
      %p535 = pneg %p132
      %p536 = scmp.lt.s32.totalorder %s29, 1
      %s537 = scalar_select %p536, %s29, 1
      %s538 = scalar_lea.vmem %s4, %s537
      %p539 = pneg %p161
      %p540 = pneg %p158
      %p541 = scmp.lt.s32.totalorder %s29, 1
      %s542 = scalar_select %p541, %s29, 1
      %s543 = smul.addr %s542, 4
      %s544 = smul.addr %s543, 4
      %s545 = scalar_lea.vmem %s5, %s544
      %p546 = pneg %p187
      %p547 = pneg %p184
      %p548 = scmp.lt.s32.totalorder %s29, 1
      %s549 = scalar_select %p548, %s29, 1
      %s550 = scalar_lea.vmem %s6, %s549
      %p551 = pneg %p213
      %p552 = pneg %p210
      %p553 = scmp.lt.s32.totalorder %s29, 1
      %s554 = scalar_select %p553, %s29, 1
      %s555 = scalar_lea.vmem %s7, %s554
      %p556 = pneg %p239
      %p557 = pneg %p236
      %p558 = scmp.lt.s32.totalorder %s29, 1
      %s559 = scalar_select %p558, %s29, 1
      %s560 = scalar_lea.vmem %s8, %s559
      %p561 = pneg %p265
      %p562 = pneg %p262
      %p563 = scmp.lt.s32.totalorder %s29, 1
      %s564 = scalar_select %p563, %s29, 1
      %s565 = smul.addr %s564, 4
      %s566 = smul.addr %s565, 4
      %s567 = scalar_lea.vmem %s9, %s566
      %p568 = pneg %p291
      %p569 = pneg %p288
      %p570 = scmp.lt.s32.totalorder %s29, 1
      %s571 = scalar_select %p570, %s29, 1
      %s572 = scalar_lea.vmem %s10, %s571
      %p573 = pneg %p317
      %p574 = pneg %p314
      %p575 = scmp.lt.s32.totalorder %s29, 1
      %s576 = scalar_select %p575, %s29, 1
      %s577 = smul.addr %s576, 8
      %s578 = smul.addr %s577, 4
      %s579 = scalar_lea.vmem %s11, %s578
      %p580 = pneg %p343
      %p581 = pneg %p340
      %p582 = scmp.lt.s32.totalorder %s29, 1
      %s583 = scalar_select %p582, %s29, 1
      %s584 = scalar_lea.vmem %s12, %s583
      %p585 = pneg %p369
      %p586 = pneg %p366
      %p587 = pneg %p395
      %p588 = pneg %p392
      %s589 = smul.u32 2, %s28
      %p590 = scmp.lt.s32.totalorder %s589, 1
      %s591 = scalar_select %p590, %s589, 1
      %s592 = smul.addr %s591, 3
      %s593 = smul.addr %s592, 8
      %s594 = scalar_lea.vmem %s13, %s593
      %s595 = smul.u32 2, %s28
      %p596 = scmp.lt.s32.totalorder %s595, 1
      %s597 = scalar_select %p596, %s595, 1
      %s598 = smul.addr %s597, 3
      %s599 = smul.addr %s598, 8
      %s600 = scalar_lea.vmem %s0, %s599
      %s601 = smul.u32 2, %s28
      %p602 = scmp.lt.s32.totalorder %s29, 1
      %s603 = scalar_select %p602, %s29, 1
      %s604 = scalar_lea.vmem %s1, %s603
      %p605 = scmp.lt.s32.totalorder %s29, 1
      %s606 = scalar_select %p605, %s29, 1
      %s607 = scalar_lea.vmem %s2, %s606
      %p608 = scmp.lt.s32.totalorder %s29, 1
      %s609 = scalar_select %p608, %s29, 1
      %s610 = smul.addr %s609, 4
      %s611 = smul.addr %s610, 4
      %s612 = scalar_lea.vmem %s3, %s611
      %p613 = scmp.lt.s32.totalorder %s29, 1
      %s614 = scalar_select %p613, %s29, 1
      %s615 = scalar_lea.vmem %s4, %s614
      %p616 = scmp.lt.s32.totalorder %s29, 1
      %s617 = scalar_select %p616, %s29, 1
      %s618 = smul.addr %s617, 4
      %s619 = smul.addr %s618, 4
      %s620 = scalar_lea.vmem %s5, %s619
      %p621 = scmp.lt.s32.totalorder %s29, 1
      %s622 = scalar_select %p621, %s29, 1
      %s623 = scalar_lea.vmem %s6, %s622
      %p624 = scmp.lt.s32.totalorder %s29, 1
      %s625 = scalar_select %p624, %s29, 1
      %s626 = scalar_lea.vmem %s7, %s625
      %p627 = scmp.lt.s32.totalorder %s29, 1
      %s628 = scalar_select %p627, %s29, 1
      %s629 = scalar_lea.vmem %s8, %s628
      %p630 = scmp.lt.s32.totalorder %s29, 1
      %s631 = scalar_select %p630, %s29, 1
      %s632 = smul.addr %s631, 4
      %s633 = smul.addr %s632, 4
      %s634 = scalar_lea.vmem %s9, %s633
      %p635 = scmp.lt.s32.totalorder %s29, 1
      %s636 = scalar_select %p635, %s29, 1
      %s637 = scalar_lea.vmem %s10, %s636
      %p638 = scmp.lt.s32.totalorder %s29, 1
      %s639 = scalar_select %p638, %s29, 1
      %s640 = smul.addr %s639, 8
      %s641 = smul.addr %s640, 4
      %s642 = scalar_lea.vmem %s11, %s641
      %p643 = scmp.lt.s32.totalorder %s29, 1
      %s644 = scalar_select %p643, %s29, 1
      %s645 = scalar_lea.vmem %s12, %s644
      %s646 = smul.u32 2, %s28
      %p647 = scmp.lt.s32.totalorder %s646, 1
      %s648 = scalar_select %p647, %s646, 1
      %s649 = smul.addr %s648, 3
      %s650 = smul.addr %s649, 8
      %s651 = scalar_lea.vmem %s13, %s650
      %s652 = smul.u32 2, %s28
      %p654 = scmp.eq.s32.totalorder %s29, 0
      // Predicated region
      $region73: #{_lambda_.4} parent=71 // pred_check
        %p655 = pneg %p654
      $region74: #{_lambda_.4} parent=71 // pred_check_branch
        %657 = sbr.rel (%p655) target = $region76
      $region75: #{_lambda_.4} parent=71 // pred_region
        %v658 = vld [vmem:[%s600] sm:$0xff]
        %v659 = vld [vmem:[%s600 + $0x8] sm:$0xff]
        %v660 = vld [vmem:[%s600 + $0x10] sm:$0xff]
        %v661 = vld [vmem:[%s600 + $0x18] sm:$0xff]
        %v662 = vld [vmem:[%s600 + $0x20] sm:$0xff]
        %v663 = vld [vmem:[%s600 + $0x28] sm:$0xff]
        %vm664 = vcmask 261120
        %665 = vst.msk [vmem:[%s651] sm:$0xff] %vm664, %v658
        %666 = vst.msk [vmem:[%s651 + $0x8] sm:$0xff] %vm664, %v659
        %667 = vst.msk [vmem:[%s651 + $0x10] sm:$0xff] %vm664, %v660
        %668 = vst.msk [vmem:[%s651 + $0x18] sm:$0xff] %vm664, %v661
        %669 = vst.msk [vmem:[%s651 + $0x20] sm:$0xff] %vm664, %v662
        %670 = vst.msk [vmem:[%s651 + $0x28] sm:$0xff] %vm664, %v663
      $region76: #{_lambda_.4} parent=71 // pred_fallthru
        _
      %v671 = vld [vmem:[%s651] sm:$0xff]
      %v672 = vld [vmem:[%s651 + $0x8] sm:$0xff]
      %v673 = vld [vmem:[%s651 + $0x10] sm:$0xff]
      %v674 = vld [vmem:[%s651 + $0x18] sm:$0xff]
      %v675 = vld [vmem:[%s651 + $0x20] sm:$0xff]
      %v676 = vld [vmem:[%s651 + $0x28] sm:$0xff]
      %v677 = vld [vmem:[%s604] sm:$0x1]
      %v678 = vld [vmem:[%s607] sm:$0x1]
      %vm679 = vcmask 261120
      %v680 = vsel %vm679, %v671, 0.0
      %681 = vadd.xlane.f32.xlu0 %v680
      %v682 = vpop.xlane.xlu0 %681
      %v683 = vsel %vm679, %v672, 0.0
      %684 = vadd.xlane.f32.xlu0 %v683
      %v685 = vpop.xlane.xlu0 %684
      %v686 = vsel %vm679, %v673, 0.0
      %687 = vadd.xlane.f32.xlu0 %v686
      %v688 = vpop.xlane.xlu0 %687
      %v689 = vsel %vm679, %v674, 0.0
      %690 = vadd.xlane.f32.xlu0 %v689
      %v691 = vpop.xlane.xlu0 %690
      %v692 = vsel %vm679, %v675, 0.0
      %693 = vadd.xlane.f32.xlu0 %v692
      %v694 = vpop.xlane.xlu0 %693
      %v695 = vsel %vm679, %v676, 0.0
      %696 = vadd.xlane.f32.xlu0 %v695
      %v697 = vpop.xlane.xlu0 %696
      %v698 = vrcp.pop 32.0
      %v699 = vmul.f32 %v682, %v698
      %v700 = vmul.f32 %v685, %v698
      %v701 = vmul.f32 %v688, %v698
      %v702 = vmul.f32 %v691, %v698
      %v703 = vmul.f32 %v694, %v698
      %v704 = vmul.f32 %v697, %v698
      %v705 = vsub.f32 %v671, %v699
      %v706 = vsub.f32 %v672, %v700
      %v707 = vsub.f32 %v673, %v701
      %v708 = vsub.f32 %v674, %v702
      %v709 = vsub.f32 %v675, %v703
      %v710 = vsub.f32 %v676, %v704
      %v711 = vmul.f32 %v705, %v705
      %v712 = vmul.f32 %v706, %v706
      %v713 = vmul.f32 %v707, %v707
      %v714 = vmul.f32 %v708, %v708
      %v715 = vmul.f32 %v709, %v709
      %v716 = vmul.f32 %v710, %v710
      %v717 = vsel %vm679, %v711, 0.0
      %718 = vadd.xlane.f32.xlu0 %v717
      %v719 = vpop.xlane.xlu0 %718
      %v720 = vsel %vm679, %v712, 0.0
      %721 = vadd.xlane.f32.xlu0 %v720
      %v722 = vpop.xlane.xlu0 %721
      %v723 = vsel %vm679, %v713, 0.0
      %724 = vadd.xlane.f32.xlu0 %v723
      %v725 = vpop.xlane.xlu0 %724
      %v726 = vsel %vm679, %v714, 0.0
      %727 = vadd.xlane.f32.xlu0 %v726
      %v728 = vpop.xlane.xlu0 %727
      %v729 = vsel %vm679, %v715, 0.0
      %730 = vadd.xlane.f32.xlu0 %v729
      %v731 = vpop.xlane.xlu0 %730
      %v732 = vsel %vm679, %v716, 0.0
      %733 = vadd.xlane.f32.xlu0 %v732
      %v734 = vpop.xlane.xlu0 %733
      %v735 = vmul.f32 %v719, %v698
      %v736 = vmul.f32 %v722, %v698
      %v737 = vmul.f32 %v725, %v698
      %v738 = vmul.f32 %v728, %v698
      %v739 = vmul.f32 %v731, %v698
      %v740 = vmul.f32 %v734, %v698
      %v741 = vadd.f32 %v735, 1e-05
      %v742 = vadd.f32 %v736, 1e-05
      %v743 = vadd.f32 %v737, 1e-05
      %v744 = vadd.f32 %v738, 1e-05
      %v745 = vadd.f32 %v739, 1e-05
      %v746 = vadd.f32 %v740, 1e-05
      %v747 = vrsqrt.pop %v741
      %v748 = vrsqrt.pop %v742
      %v749 = vrsqrt.pop %v743
      %v750 = vrsqrt.pop %v744
      %v751 = vrsqrt.pop %v745
      %v752 = vrsqrt.pop %v746
      %v753 = vmul.f32 %v705, %v747
      %v754 = vmul.f32 %v706, %v748
      %v755 = vmul.f32 %v707, %v749
      %v756 = vmul.f32 %v708, %v750
      %v757 = vmul.f32 %v709, %v751
      %v758 = vmul.f32 %v710, %v752
      %v760 = vlaneseq
      %v761 = vshrl.u32 %v760, 7
      %v762 = vsub.s32 0, %v761
      %v763 = vrot.slane %v677, %v762
      %v765 = vmul.f32 %v753, %v763
      %v766 = vmul.f32 %v754, %v763
      %v767 = vmul.f32 %v755, %v763
      %v768 = vmul.f32 %v756, %v763
      %v769 = vmul.f32 %v757, %v763
      %v770 = vmul.f32 %v758, %v763
      %v772 = vlaneseq
      %v773 = vshrl.u32 %v772, 7
      %v774 = vsub.s32 0, %v773
      %v775 = vrot.slane %v678, %v774
      %v777 = vadd.f32 %v765, %v775
      %v778 = vadd.f32 %v766, %v775
      %v779 = vadd.f32 %v767, %v775
      %v780 = vadd.f32 %v768, %v775
      %v781 = vadd.f32 %v769, %v775
      %v782 = vadd.f32 %v770, %v775
      %v783 = vpack.c.bf16 %v778, %v777
      %v784 = vpack.c.bf16 %v780, %v779
      %v785 = vpack.c.bf16 %v782, %v781
      %v786 = vld [vmem:[%s612] sm:$0xf]
      %v787 = vld [vmem:[%s612 + $0x4] sm:$0xf]
      %v788 = vld [vmem:[%s612 + $0x8] sm:$0xf]
      %v789 = vld [vmem:[%s612 + $0xc] sm:$0xf]
      %v790 = vld [vmem:[%s615] sm:$0x1]
      %v792 = vlaneseq
      %v793 = vshrl.u32 %v792, 7
      %v794 = vsub.s32 0, %v793
      %v795 = vrot.slane %v790, %v794
      %v801 = vunpack.c.l.b16 %v786
      %v802 = vunpack.c.l.b16 %v787
      %v803 = vunpack.c.l.b16 %v788
      %v804 = vunpack.c.l.b16 %v789
      %v805 = vpack.c.b16 %v802, %v801
      %v806 = vpack.c.b16 %v804, %v803
      %v810 = vsel %vm679, %v783, 0
      %v813 = vsel %vm679, %v784, 0
      %v816 = vsel %vm679, %v785, 0
      %818 = vmatprep.subr.bf16.mxu0 0
      %819 = vmatpush1.bf16.msra.mxu0 %v805
      %820 = vmatprep.subr.bf16.mxu0 0
      %821 = vmatpush1.bf16.msra.mxu0 %v806
      %822 = vmatprep.subr.bf16.mxu0 0
      %823 = vmatpush1.bf16.msra.mxu0 0
      %824 = vmatprep.subr.bf16.mxu0 0
      %825 = vmatpush1.bf16.msra.mxu0 0
      %826 = vmatprep.subr.bf16.mxu0 0
      %827 = vmatpush1.bf16.msra.mxu0 0
      %828 = vmatprep.subr.bf16.mxu0 0
      %829 = vmatpush1.bf16.msra.mxu0 0
      %830 = vmatprep.subr.bf16.mxu0 0
      %831 = vmatpush1.bf16.msra.mxu0 0
      %832 = vmatprep.subr.bf16.mxu0 0
      %833 = vmatpush1.bf16.msra.mxu0 0
      %834 = vmatprep.subr.bf16.mxu0 0
      %835 = vmatpush1.bf16.msra.mxu0 0
      %836 = vmatprep.subr.bf16.mxu0 0
      %837 = vmatpush1.bf16.msra.mxu0 0
      %838 = vmatprep.subr.bf16.mxu0 0
      %839 = vmatpush1.bf16.msra.mxu0 0
      %840 = vmatprep.subr.bf16.mxu0 0
      %841 = vmatpush1.bf16.msra.mxu0 0
      %842 = vmatprep.subr.bf16.mxu0 0
      %843 = vmatpush1.bf16.msra.mxu0 0
      %844 = vmatprep.subr.bf16.mxu0 0
      %845 = vmatpush1.bf16.msra.mxu0 0
      %846 = vmatprep.subr.bf16.mxu0 0
      %847 = vmatpush1.bf16.msra.mxu0 0
      %848 = vmatprep.subr.bf16.mxu0 0
      %849 = vmatpush1.bf16.msra.mxu0 0
      %850 = vmatprep.mubr.bf16.mxu0 0
      %851 = vmatmul.mubr.bf16.gmra.mrb[0].mxu0 %v810
      %v852 = vpop.f32.mrb[0].mxu0
      %v853 = vadd.f32 %v795, %v852
      %v854 = vpop.f32.mrb[0].mxu0
      %v855 = vpop.f32.mrb[0].mxu0
      %v856 = vadd.f32 %v795, %v855
      %v857 = vpop.f32.mrb[0].mxu0
      %858 = vmatprep.mubr.bf16.mxu0 0
      %859 = vmatmul.mubr.bf16.gmra.mrb[0].mxu0 %v813
      %v860 = vpop.f32.mrb[0].mxu0
      %v861 = vadd.f32 %v795, %v860
      %v862 = vpop.f32.mrb[0].mxu0
      %v863 = vpop.f32.mrb[0].mxu0
      %v864 = vadd.f32 %v795, %v863
      %v865 = vpop.f32.mrb[0].mxu0
      %866 = vmatprep.mubr.bf16.mxu0 0
      %867 = vmatmul.mubr.bf16.gmra.mrb[0].mxu0 %v816
      %v868 = vpop.f32.mrb[0].mxu0
      %v869 = vadd.f32 %v795, %v868
      %v870 = vpop.f32.mrb[0].mxu0
      %v871 = vpop.f32.mrb[0].mxu0
      %v872 = vadd.f32 %v795, %v871
      %v873 = vpop.f32.mrb[0].mxu0
      %874 = vdwg.mxu0
      %v875 = vmul.f32 %v853, 0.35355338
      %v876 = vmul.f32 %v856, 0.35355338
      %v877 = vmul.f32 %v861, 0.35355338
      %v878 = vmul.f32 %v864, 0.35355338
      %v879 = vmul.f32 %v869, 0.35355338
      %v880 = vmul.f32 %v872, 0.35355338
      %887 = vrot.lane.b32.xlu0 %v875, 120
      %v888 = vpop.permute.xlu0 %887
      %889 = vrot.lane.b32.xlu0 %v876, 120
      %v890 = vpop.permute.xlu0 %889
      %891 = vrot.lane.b32.xlu0 %v877, 120
      %v892 = vpop.permute.xlu0 %891
      %893 = vrot.lane.b32.xlu0 %v878, 120
      %v894 = vpop.permute.xlu0 %893
      %895 = vrot.lane.b32.xlu0 %v879, 120
      %v896 = vpop.permute.xlu0 %895
      %897 = vrot.lane.b32.xlu0 %v880, 120
      %v898 = vpop.permute.xlu0 %897
      %905 = vrot.lane.b32.xlu0 %v875, 112
      %v906 = vpop.permute.xlu0 %905
      %907 = vrot.lane.b32.xlu0 %v876, 112
      %v908 = vpop.permute.xlu0 %907
      %909 = vrot.lane.b32.xlu0 %v877, 112
      %v910 = vpop.permute.xlu0 %909
      %911 = vrot.lane.b32.xlu0 %v878, 112
      %v912 = vpop.permute.xlu0 %911
      %913 = vrot.lane.b32.xlu0 %v879, 112
      %v914 = vpop.permute.xlu0 %913
      %915 = vrot.lane.b32.xlu0 %v880, 112
      %v916 = vpop.permute.xlu0 %915
      %923 = vrot.lane.b32.xlu0 %v875, 104
      %v924 = vpop.permute.xlu0 %923
      %925 = vrot.lane.b32.xlu0 %v876, 104
      %v926 = vpop.permute.xlu0 %925
      %927 = vrot.lane.b32.xlu0 %v877, 104
      %v928 = vpop.permute.xlu0 %927
      %929 = vrot.lane.b32.xlu0 %v878, 104
      %v930 = vpop.permute.xlu0 %929
      %931 = vrot.lane.b32.xlu0 %v879, 104
      %v932 = vpop.permute.xlu0 %931
      %933 = vrot.lane.b32.xlu0 %v880, 104
      %v934 = vpop.permute.xlu0 %933
      %v941 = vpack.c.bf16 %v876, %v875
      %v942 = vpack.c.bf16 %v877, %v877
      %v943 = vpack.c.bf16 %v890, %v888
      %v944 = vpack.c.bf16 %v892, %v892
      %v945 = vpack.c.bf16 %v908, %v906
      %v946 = vpack.c.bf16 %v910, %v910
      %v947 = vpack.c.bf16 %v926, %v924
      %v948 = vpack.c.bf16 %v928, %v928
      %v949 = vpack.c.bf16 %v879, %v878
      %v950 = vpack.c.bf16 %v880, %v880
      %v951 = vpack.c.bf16 %v896, %v894
      %v952 = vpack.c.bf16 %v898, %v898
      %v953 = vpack.c.bf16 %v914, %v912
      %v954 = vpack.c.bf16 %v916, %v916
      %v955 = vpack.c.bf16 %v932, %v930
      %v956 = vpack.c.bf16 %v934, %v934
      %963 = vrot.lane.b32.xlu0 %v853, 120
      %v964 = vpop.permute.xlu0 %963
      %965 = vrot.lane.b32.xlu0 %v856, 120
      %v966 = vpop.permute.xlu0 %965
      %967 = vrot.lane.b32.xlu0 %v861, 120
      %v968 = vpop.permute.xlu0 %967
      %969 = vrot.lane.b32.xlu0 %v864, 120
      %v970 = vpop.permute.xlu0 %969
      %971 = vrot.lane.b32.xlu0 %v869, 120
      %v972 = vpop.permute.xlu0 %971
      %973 = vrot.lane.b32.xlu0 %v872, 120
      %v974 = vpop.permute.xlu0 %973
      %981 = vrot.lane.b32.xlu0 %v853, 112
      %v982 = vpop.permute.xlu0 %981
      %983 = vrot.lane.b32.xlu0 %v856, 112
      %v984 = vpop.permute.xlu0 %983
      %985 = vrot.lane.b32.xlu0 %v861, 112
      %v986 = vpop.permute.xlu0 %985
      %987 = vrot.lane.b32.xlu0 %v864, 112
      %v988 = vpop.permute.xlu0 %987
      %989 = vrot.lane.b32.xlu0 %v869, 112
      %v990 = vpop.permute.xlu0 %989
      %991 = vrot.lane.b32.xlu0 %v872, 112
      %v992 = vpop.permute.xlu0 %991
      %999 = vrot.lane.b32.xlu0 %v853, 104
      %v1000 = vpop.permute.xlu0 %999
      %1001 = vrot.lane.b32.xlu0 %v856, 104
      %v1002 = vpop.permute.xlu0 %1001
      %1003 = vrot.lane.b32.xlu0 %v861, 104
      %v1004 = vpop.permute.xlu0 %1003
      %1005 = vrot.lane.b32.xlu0 %v864, 104
      %v1006 = vpop.permute.xlu0 %1005
      %1007 = vrot.lane.b32.xlu0 %v869, 104
      %v1008 = vpop.permute.xlu0 %1007
      %1009 = vrot.lane.b32.xlu0 %v872, 104
      %v1010 = vpop.permute.xlu0 %1009
      %v1017 = vpack.c.bf16 %v856, %v853
      %v1018 = vpack.c.bf16 %v861, %v861
      %v1019 = vpack.c.bf16 %v966, %v964
      %v1020 = vpack.c.bf16 %v968, %v968
      %v1021 = vpack.c.bf16 %v984, %v982
      %v1022 = vpack.c.bf16 %v986, %v986
      %v1023 = vpack.c.bf16 %v1002, %v1000
      %v1024 = vpack.c.bf16 %v1004, %v1004
      %v1025 = vpack.c.bf16 %v869, %v864
      %v1026 = vpack.c.bf16 %v872, %v872
      %v1027 = vpack.c.bf16 %v972, %v970
      %v1028 = vpack.c.bf16 %v974, %v974
      %v1029 = vpack.c.bf16 %v990, %v988
      %v1030 = vpack.c.bf16 %v992, %v992
      %v1031 = vpack.c.bf16 %v1008, %v1006
      %v1032 = vpack.c.bf16 %v1010, %v1010
      %1035 = vrot.lane.b32.xlu0 %v1017, 96
      %v1036 = vpop.permute.xlu0 %1035
      %1037 = vrot.lane.b32.xlu0 %v1018, 96
      %v1038 = vpop.permute.xlu0 %1037
      %vm1039 = vcmask 64512
      %v1041 = vsel %vm1039, %v941, 0
      %v1044 = vsel %vm1039, %v942, 0
      %v1047 = vsel %vm1039, %v1036, 0
      %v1050 = vsel %vm1039, %v1038, 0
      %1052 = vmatprep.subr.bf16.mxu0 0
      %1053 = vmatpush1.bf16.xpose.msra.mxu0 %v1047
      %1054 = vmatprep.subr.bf16.mxu0 0
      %1055 = vmatpush1.bf16.xpose.msra.mxu0 %v1050
      %1056 = vmatprep.subr.bf16.mxu0 0
      %1057 = vmatpush1.bf16.xpose.msra.mxu0 0
      %1058 = vmatprep.subr.bf16.mxu0 0
      %1059 = vmatpush1.bf16.xpose.msra.mxu0 0
      %1060 = vmatprep.subr.bf16.mxu0 0
      %1061 = vmatpush1.bf16.xpose.msra.mxu0 0
      %1062 = vmatprep.subr.bf16.mxu0 0
      %1063 = vmatpush1.bf16.xpose.msra.mxu0 0
      %1064 = vmatprep.subr.bf16.mxu0 0
      %1065 = vmatpush1.bf16.xpose.msra.mxu0 0
      %1066 = vmatprep.subr.bf16.mxu0 0
      %1067 = vmatpush1.bf16.xpose.msra.mxu0 0
      %1068 = vmatprep.subr.bf16.mxu0 0
      %1069 = vmatpush1.bf16.xpose.msra.mxu0 0
      %1070 = vmatprep.subr.bf16.mxu0 0
      %1071 = vmatpush1.bf16.xpose.msra.mxu0 0
      %1072 = vmatprep.subr.bf16.mxu0 0
      %1073 = vmatpush1.bf16.xpose.msra.mxu0 0
      %1074 = vmatprep.subr.bf16.mxu0 0
      %1075 = vmatpush1.bf16.xpose.msra.mxu0 0
      %1076 = vmatprep.subr.bf16.mxu0 0
      %1077 = vmatpush1.bf16.xpose.msra.mxu0 0
      %1078 = vmatprep.subr.bf16.mxu0 0
      %1079 = vmatpush1.bf16.xpose.msra.mxu0 0
      %1080 = vmatprep.subr.bf16.mxu0 0
      %1081 = vmatpush1.bf16.xpose.msra.mxu0 0
      %1082 = vmatprep.subr.bf16.mxu0 0
      %1083 = vmatpush1.bf16.xpose.msra.mxu0 0
      %1084 = vmatprep.mubr.bf16.mxu0 0
      %1085 = vmatmul.mubr.bf16.gmra.mrb[0].mxu0 %v1041
      %v1086 = vpop.f32.mrb[0].mxu0
      %v1087 = vadd.f32 0.0, %v1086
      %v1088 = vpop.f32.mrb[0].mxu0
      %v1089 = vpop.f32.mrb[0].mxu0
      %v1090 = vadd.f32 0.0, %v1089
      %v1091 = vpop.f32.mrb[0].mxu0
      %1092 = vmatprep.mubr.bf16.mxu0 0
      %1093 = vmatmul.mubr.bf16.gmra.mrb[0].mxu0 %v1044
      %v1094 = vpop.f32.mrb[0].mxu0
      %v1095 = vadd.f32 0.0, %v1094
      %v1096 = vpop.f32.mrb[0].mxu0
      %v1097 = vpop.f32.mrb[0].mxu0
      %v1098 = vpop.f32.mrb[0].mxu0
      %1099 = vdwg.mxu0
      %1102 = vrot.lane.b32.xlu0 %v1019, 96
      %v1103 = vpop.permute.xlu0 %1102
      %1104 = vrot.lane.b32.xlu0 %v1020, 96
      %v1105 = vpop.permute.xlu0 %1104
      %v1107 = vsel %vm1039, %v943, 0
      %v1110 = vsel %vm1039, %v944, 0
      %v1113 = vsel %vm1039, %v1103, 0
      %v1116 = vsel %vm1039, %v1105, 0
      %1118 = vmatprep.subr.bf16.mxu0 0
      %1119 = vmatpush1.bf16.xpose.msra.mxu0 %v1113
      %1120 = vmatprep.subr.bf16.mxu0 0
      %1121 = vmatpush1.bf16.xpose.msra.mxu0 %v1116
      %1122 = vmatprep.subr.bf16.mxu0 0
      %1123 = vmatpush1.bf16.xpose.msra.mxu0 0
      %1124 = vmatprep.subr.bf16.mxu0 0
      %1125 = vmatpush1.bf16.xpose.msra.mxu0 0
      %1126 = vmatprep.subr.bf16.mxu0 0
      %1127 = vmatpush1.bf16.xpose.msra.mxu0 0
      %1128 = vmatprep.subr.bf16.mxu0 0
      %1129 = vmatpush1.bf16.xpose.msra.mxu0 0
      %1130 = vmatprep.subr.bf16.mxu0 0
      %1131 = vmatpush1.bf16.xpose.msra.mxu0 0
      %1132 = vmatprep.subr.bf16.mxu0 0
      %1133 = vmatpush1.bf16.xpose.msra.mxu0 0
      %1134 = vmatprep.subr.bf16.mxu0 0
      %1135 = vmatpush1.bf16.xpose.msra.mxu0 0
      %1136 = vmatprep.subr.bf16.mxu0 0
      %1137 = vmatpush1.bf16.xpose.msra.mxu0 0
      %1138 = vmatprep.subr.bf16.mxu0 0
      %1139 = vmatpush1.bf16.xpose.msra.mxu0 0
      %1140 = vmatprep.subr.bf16.mxu0 0
      %1141 = vmatpush1.bf16.xpose.msra.mxu0 0
      %1142 = vmatprep.subr.bf16.mxu0 0
      %1143 = vmatpush1.bf16.xpose.msra.mxu0 0
      %1144 = vmatprep.subr.bf16.mxu0 0
      %1145 = vmatpush1.bf16.xpose.msra.mxu0 0
      %1146 = vmatprep.subr.bf16.mxu0 0
      %1147 = vmatpush1.bf16.xpose.msra.mxu0 0
      %1148 = vmatprep.subr.bf16.mxu0 0
      %1149 = vmatpush1.bf16.xpose.msra.mxu0 0
      %1150 = vmatprep.mubr.bf16.mxu0 0
      %1151 = vmatmul.mubr.bf16.gmra.mrb[0].mxu0 %v1107
      %v1152 = vpop.f32.mrb[0].mxu0
      %v1153 = vadd.f32 0.0, %v1152
      %v1154 = vpop.f32.mrb[0].mxu0
      %v1155 = vpop.f32.mrb[0].mxu0
      %v1156 = vadd.f32 0.0, %v1155
      %v1157 = vpop.f32.mrb[0].mxu0
      %1158 = vmatprep.mubr.bf16.mxu0 0
      %1159 = vmatmul.mubr.bf16.gmra.mrb[0].mxu0 %v1110
      %v1160 = vpop.f32.mrb[0].mxu0
      %v1161 = vadd.f32 0.0, %v1160
      %v1162 = vpop.f32.mrb[0].mxu0
      %v1163 = vpop.f32.mrb[0].mxu0
      %v1164 = vpop.f32.mrb[0].mxu0
      %1165 = vdwg.mxu0
      %1168 = vrot.lane.b32.xlu0 %v1021, 96
      %v1169 = vpop.permute.xlu0 %1168
      %1170 = vrot.lane.b32.xlu0 %v1022, 96
      %v1171 = vpop.permute.xlu0 %1170
      %v1173 = vsel %vm1039, %v945, 0
      %v1176 = vsel %vm1039, %v946, 0
      %v1179 = vsel %vm1039, %v1169, 0
      %v1182 = vsel %vm1039, %v1171, 0
      %1184 = vmatprep.subr.bf16.mxu0 0
      %1185 = vmatpush1.bf16.xpose.msra.mxu0 %v1179
      %1186 = vmatprep.subr.bf16.mxu0 0
      %1187 = vmatpush1.bf16.xpose.msra.mxu0 %v1182
      %1188 = vmatprep.subr.bf16.mxu0 0
      %1189 = vmatpush1.bf16.xpose.msra.mxu0 0
      %1190 = vmatprep.subr.bf16.mxu0 0
      %1191 = vmatpush1.bf16.xpose.msra.mxu0 0
      %1192 = vmatprep.subr.bf16.mxu0 0
      %1193 = vmatpush1.bf16.xpose.msra.mxu0 0
      %1194 = vmatprep.subr.bf16.mxu0 0
      %1195 = vmatpush1.bf16.xpose.msra.mxu0 0
      %1196 = vmatprep.subr.bf16.mxu0 0
      %1197 = vmatpush1.bf16.xpose.msra.mxu0 0
      %1198 = vmatprep.subr.bf16.mxu0 0
      %1199 = vmatpush1.bf16.xpose.msra.mxu0 0
      %1200 = vmatprep.subr.bf16.mxu0 0
      %1201 = vmatpush1.bf16.xpose.msra.mxu0 0
      %1202 = vmatprep.subr.bf16.mxu0 0
      %1203 = vmatpush1.bf16.xpose.msra.mxu0 0
      %1204 = vmatprep.subr.bf16.mxu0 0
      %1205 = vmatpush1.bf16.xpose.msra.mxu0 0
      %1206 = vmatprep.subr.bf16.mxu0 0
      %1207 = vmatpush1.bf16.xpose.msra.mxu0 0
      %1208 = vmatprep.subr.bf16.mxu0 0
      %1209 = vmatpush1.bf16.xpose.msra.mxu0 0
      %1210 = vmatprep.subr.bf16.mxu0 0
      %1211 = vmatpush1.bf16.xpose.msra.mxu0 0
      %1212 = vmatprep.subr.bf16.mxu0 0
      %1213 = vmatpush1.bf16.xpose.msra.mxu0 0
      %1214 = vmatprep.subr.bf16.mxu0 0
      %1215 = vmatpush1.bf16.xpose.msra.mxu0 0
      %1216 = vmatprep.mubr.bf16.mxu0 0
      %1217 = vmatmul.mubr.bf16.gmra.mrb[0].mxu0 %v1173
      %v1218 = vpop.f32.mrb[0].mxu0
      %v1219 = vadd.f32 0.0, %v1218
      %v1220 = vpop.f32.mrb[0].mxu0
      %v1221 = vpop.f32.mrb[0].mxu0
      %v1222 = vadd.f32 0.0, %v1221
      %v1223 = vpop.f32.mrb[0].mxu0
      %1224 = vmatprep.mubr.bf16.mxu0 0
      %1225 = vmatmul.mubr.bf16.gmra.mrb[0].mxu0 %v1176
      %v1226 = vpop.f32.mrb[0].mxu0
      %v1227 = vadd.f32 0.0, %v1226
      %v1228 = vpop.f32.mrb[0].mxu0
      %v1229 = vpop.f32.mrb[0].mxu0
      %v1230 = vpop.f32.mrb[0].mxu0
      %1231 = vdwg.mxu0
      %1234 = vrot.lane.b32.xlu0 %v1023, 96
      %v1235 = vpop.permute.xlu0 %1234
      %1236 = vrot.lane.b32.xlu0 %v1024, 96
      %v1237 = vpop.permute.xlu0 %1236
      %v1239 = vsel %vm1039, %v947, 0
      %v1242 = vsel %vm1039, %v948, 0
      %v1245 = vsel %vm1039, %v1235, 0
      %v1248 = vsel %vm1039, %v1237, 0
      %1250 = vmatprep.subr.bf16.mxu0 0
      %1251 = vmatpush1.bf16.xpose.msra.mxu0 %v1245
      %1252 = vmatprep.subr.bf16.mxu0 0
      %1253 = vmatpush1.bf16.xpose.msra.mxu0 %v1248
      %1254 = vmatprep.subr.bf16.mxu0 0
      %1255 = vmatpush1.bf16.xpose.msra.mxu0 0
      %1256 = vmatprep.subr.bf16.mxu0 0
      %1257 = vmatpush1.bf16.xpose.msra.mxu0 0
      %1258 = vmatprep.subr.bf16.mxu0 0
      %1259 = vmatpush1.bf16.xpose.msra.mxu0 0
      %1260 = vmatprep.subr.bf16.mxu0 0
      %1261 = vmatpush1.bf16.xpose.msra.mxu0 0
      %1262 = vmatprep.subr.bf16.mxu0 0
      %1263 = vmatpush1.bf16.xpose.msra.mxu0 0
      %1264 = vmatprep.subr.bf16.mxu0 0
      %1265 = vmatpush1.bf16.xpose.msra.mxu0 0
      %1266 = vmatprep.subr.bf16.mxu0 0
      %1267 = vmatpush1.bf16.xpose.msra.mxu0 0
      %1268 = vmatprep.subr.bf16.mxu0 0
      %1269 = vmatpush1.bf16.xpose.msra.mxu0 0
      %1270 = vmatprep.subr.bf16.mxu0 0
      %1271 = vmatpush1.bf16.xpose.msra.mxu0 0
      %1272 = vmatprep.subr.bf16.mxu0 0
      %1273 = vmatpush1.bf16.xpose.msra.mxu0 0
      %1274 = vmatprep.subr.bf16.mxu0 0
      %1275 = vmatpush1.bf16.xpose.msra.mxu0 0
      %1276 = vmatprep.subr.bf16.mxu0 0
      %1277 = vmatpush1.bf16.xpose.msra.mxu0 0
      %1278 = vmatprep.subr.bf16.mxu0 0
      %1279 = vmatpush1.bf16.xpose.msra.mxu0 0
      %1280 = vmatprep.subr.bf16.mxu0 0
      %1281 = vmatpush1.bf16.xpose.msra.mxu0 0
      %1282 = vmatprep.mubr.bf16.mxu0 0
      %1283 = vmatmul.mubr.bf16.gmra.mrb[0].mxu0 %v1239
      %v1284 = vpop.f32.mrb[0].mxu0
      %v1285 = vadd.f32 0.0, %v1284
      %v1286 = vpop.f32.mrb[0].mxu0
      %v1287 = vpop.f32.mrb[0].mxu0
      %v1288 = vadd.f32 0.0, %v1287
      %v1289 = vpop.f32.mrb[0].mxu0
      %1290 = vmatprep.mubr.bf16.mxu0 0
      %1291 = vmatmul.mubr.bf16.gmra.mrb[0].mxu0 %v1242
      %v1292 = vpop.f32.mrb[0].mxu0
      %v1293 = vadd.f32 0.0, %v1292
      %v1294 = vpop.f32.mrb[0].mxu0
      %v1295 = vpop.f32.mrb[0].mxu0
      %v1296 = vpop.f32.mrb[0].mxu0
      %1297 = vdwg.mxu0
      %1300 = vrot.lane.b32.xlu0 %v1025, 96
      %v1301 = vpop.permute.xlu0 %1300
      %1302 = vrot.lane.b32.xlu0 %v1026, 96
      %v1303 = vpop.permute.xlu0 %1302
      %v1305 = vsel %vm1039, %v949, 0
      %v1308 = vsel %vm1039, %v950, 0
      %v1311 = vsel %vm1039, %v1301, 0
      %v1314 = vsel %vm1039, %v1303, 0
      %1316 = vmatprep.subr.bf16.mxu0 0
      %1317 = vmatpush1.bf16.xpose.msra.mxu0 %v1311
      %1318 = vmatprep.subr.bf16.mxu0 0
      %1319 = vmatpush1.bf16.xpose.msra.mxu0 %v1314
      %1320 = vmatprep.subr.bf16.mxu0 0
      %1321 = vmatpush1.bf16.xpose.msra.mxu0 0
      %1322 = vmatprep.subr.bf16.mxu0 0
      %1323 = vmatpush1.bf16.xpose.msra.mxu0 0
      %1324 = vmatprep.subr.bf16.mxu0 0
      %1325 = vmatpush1.bf16.xpose.msra.mxu0 0
      %1326 = vmatprep.subr.bf16.mxu0 0
      %1327 = vmatpush1.bf16.xpose.msra.mxu0 0
      %1328 = vmatprep.subr.bf16.mxu0 0
      %1329 = vmatpush1.bf16.xpose.msra.mxu0 0
      %1330 = vmatprep.subr.bf16.mxu0 0
      %1331 = vmatpush1.bf16.xpose.msra.mxu0 0
      %1332 = vmatprep.subr.bf16.mxu0 0
      %1333 = vmatpush1.bf16.xpose.msra.mxu0 0
      %1334 = vmatprep.subr.bf16.mxu0 0
      %1335 = vmatpush1.bf16.xpose.msra.mxu0 0
      %1336 = vmatprep.subr.bf16.mxu0 0
      %1337 = vmatpush1.bf16.xpose.msra.mxu0 0
      %1338 = vmatprep.subr.bf16.mxu0 0
      %1339 = vmatpush1.bf16.xpose.msra.mxu0 0
      %1340 = vmatprep.subr.bf16.mxu0 0
      %1341 = vmatpush1.bf16.xpose.msra.mxu0 0
      %1342 = vmatprep.subr.bf16.mxu0 0
      %1343 = vmatpush1.bf16.xpose.msra.mxu0 0
      %1344 = vmatprep.subr.bf16.mxu0 0
      %1345 = vmatpush1.bf16.xpose.msra.mxu0 0
      %1346 = vmatprep.subr.bf16.mxu0 0
      %1347 = vmatpush1.bf16.xpose.msra.mxu0 0
      %1348 = vmatprep.mubr.bf16.mxu0 0
      %1349 = vmatmul.mubr.bf16.gmra.mrb[0].mxu0 %v1305
      %v1350 = vpop.f32.mrb[0].mxu0
      %v1351 = vadd.f32 0.0, %v1350
      %v1352 = vpop.f32.mrb[0].mxu0
      %v1353 = vpop.f32.mrb[0].mxu0
      %v1354 = vadd.f32 0.0, %v1353
      %v1355 = vpop.f32.mrb[0].mxu0
      %1356 = vmatprep.mubr.bf16.mxu0 0
      %1357 = vmatmul.mubr.bf16.gmra.mrb[0].mxu0 %v1308
      %v1358 = vpop.f32.mrb[0].mxu0
      %v1359 = vadd.f32 0.0, %v1358
      %v1360 = vpop.f32.mrb[0].mxu0
      %v1361 = vpop.f32.mrb[0].mxu0
      %v1362 = vpop.f32.mrb[0].mxu0
      %1363 = vdwg.mxu0
      %1366 = vrot.lane.b32.xlu0 %v1027, 96
      %v1367 = vpop.permute.xlu0 %1366
      %1368 = vrot.lane.b32.xlu0 %v1028, 96
      %v1369 = vpop.permute.xlu0 %1368
      %v1371 = vsel %vm1039, %v951, 0
      %v1374 = vsel %vm1039, %v952, 0
      %v1377 = vsel %vm1039, %v1367, 0
      %v1380 = vsel %vm1039, %v1369, 0
      %1382 = vmatprep.subr.bf16.mxu0 0
      %1383 = vmatpush1.bf16.xpose.msra.mxu0 %v1377
      %1384 = vmatprep.subr.bf16.mxu0 0
      %1385 = vmatpush1.bf16.xpose.msra.mxu0 %v1380
      %1386 = vmatprep.subr.bf16.mxu0 0
      %1387 = vmatpush1.bf16.xpose.msra.mxu0 0
      %1388 = vmatprep.subr.bf16.mxu0 0
      %1389 = vmatpush1.bf16.xpose.msra.mxu0 0
      %1390 = vmatprep.subr.bf16.mxu0 0
      %1391 = vmatpush1.bf16.xpose.msra.mxu0 0
      %1392 = vmatprep.subr.bf16.mxu0 0
      %1393 = vmatpush1.bf16.xpose.msra.mxu0 0
      %1394 = vmatprep.subr.bf16.mxu0 0
      %1395 = vmatpush1.bf16.xpose.msra.mxu0 0
      %1396 = vmatprep.subr.bf16.mxu0 0
      %1397 = vmatpush1.bf16.xpose.msra.mxu0 0
      %1398 = vmatprep.subr.bf16.mxu0 0
      %1399 = vmatpush1.bf16.xpose.msra.mxu0 0
      %1400 = vmatprep.subr.bf16.mxu0 0
      %1401 = vmatpush1.bf16.xpose.msra.mxu0 0
      %1402 = vmatprep.subr.bf16.mxu0 0
      %1403 = vmatpush1.bf16.xpose.msra.mxu0 0
      %1404 = vmatprep.subr.bf16.mxu0 0
      %1405 = vmatpush1.bf16.xpose.msra.mxu0 0
      %1406 = vmatprep.subr.bf16.mxu0 0
      %1407 = vmatpush1.bf16.xpose.msra.mxu0 0
      %1408 = vmatprep.subr.bf16.mxu0 0
      %1409 = vmatpush1.bf16.xpose.msra.mxu0 0
      %1410 = vmatprep.subr.bf16.mxu0 0
      %1411 = vmatpush1.bf16.xpose.msra.mxu0 0
      %1412 = vmatprep.subr.bf16.mxu0 0
      %1413 = vmatpush1.bf16.xpose.msra.mxu0 0
      %1414 = vmatprep.mubr.bf16.mxu0 0
      %1415 = vmatmul.mubr.bf16.gmra.mrb[0].mxu0 %v1371
      %v1416 = vpop.f32.mrb[0].mxu0
      %v1417 = vadd.f32 0.0, %v1416
      %v1418 = vpop.f32.mrb[0].mxu0
      %v1419 = vpop.f32.mrb[0].mxu0
      %v1420 = vadd.f32 0.0, %v1419
      %v1421 = vpop.f32.mrb[0].mxu0
      %1422 = vmatprep.mubr.bf16.mxu0 0
      %1423 = vmatmul.mubr.bf16.gmra.mrb[0].mxu0 %v1374
      %v1424 = vpop.f32.mrb[0].mxu0
      %v1425 = vadd.f32 0.0, %v1424
      %v1426 = vpop.f32.mrb[0].mxu0
      %v1427 = vpop.f32.mrb[0].mxu0
      %v1428 = vpop.f32.mrb[0].mxu0
      %1429 = vdwg.mxu0
      %1432 = vrot.lane.b32.xlu0 %v1029, 96
      %v1433 = vpop.permute.xlu0 %1432
      %1434 = vrot.lane.b32.xlu0 %v1030, 96
      %v1435 = vpop.permute.xlu0 %1434
      %v1437 = vsel %vm1039, %v953, 0
      %v1440 = vsel %vm1039, %v954, 0
      %v1443 = vsel %vm1039, %v1433, 0
      %v1446 = vsel %vm1039, %v1435, 0
      %1448 = vmatprep.subr.bf16.mxu0 0
      %1449 = vmatpush1.bf16.xpose.msra.mxu0 %v1443
      %1450 = vmatprep.subr.bf16.mxu0 0
      %1451 = vmatpush1.bf16.xpose.msra.mxu0 %v1446
      %1452 = vmatprep.subr.bf16.mxu0 0
      %1453 = vmatpush1.bf16.xpose.msra.mxu0 0
      %1454 = vmatprep.subr.bf16.mxu0 0
      %1455 = vmatpush1.bf16.xpose.msra.mxu0 0
      %1456 = vmatprep.subr.bf16.mxu0 0
      %1457 = vmatpush1.bf16.xpose.msra.mxu0 0
      %1458 = vmatprep.subr.bf16.mxu0 0
      %1459 = vmatpush1.bf16.xpose.msra.mxu0 0
      %1460 = vmatprep.subr.bf16.mxu0 0
      %1461 = vmatpush1.bf16.xpose.msra.mxu0 0
      %1462 = vmatprep.subr.bf16.mxu0 0
      %1463 = vmatpush1.bf16.xpose.msra.mxu0 0
      %1464 = vmatprep.subr.bf16.mxu0 0
      %1465 = vmatpush1.bf16.xpose.msra.mxu0 0
      %1466 = vmatprep.subr.bf16.mxu0 0
      %1467 = vmatpush1.bf16.xpose.msra.mxu0 0
      %1468 = vmatprep.subr.bf16.mxu0 0
      %1469 = vmatpush1.bf16.xpose.msra.mxu0 0
      %1470 = vmatprep.subr.bf16.mxu0 0
      %1471 = vmatpush1.bf16.xpose.msra.mxu0 0
      %1472 = vmatprep.subr.bf16.mxu0 0
      %1473 = vmatpush1.bf16.xpose.msra.mxu0 0
      %1474 = vmatprep.subr.bf16.mxu0 0
      %1475 = vmatpush1.bf16.xpose.msra.mxu0 0
      %1476 = vmatprep.subr.bf16.mxu0 0
      %1477 = vmatpush1.bf16.xpose.msra.mxu0 0
      %1478 = vmatprep.subr.bf16.mxu0 0
      %1479 = vmatpush1.bf16.xpose.msra.mxu0 0
      %1480 = vmatprep.mubr.bf16.mxu0 0
      %1481 = vmatmul.mubr.bf16.gmra.mrb[0].mxu0 %v1437
      %v1482 = vpop.f32.mrb[0].mxu0
      %v1483 = vadd.f32 0.0, %v1482
      %v1484 = vpop.f32.mrb[0].mxu0
      %v1485 = vpop.f32.mrb[0].mxu0
      %v1486 = vadd.f32 0.0, %v1485
      %v1487 = vpop.f32.mrb[0].mxu0
      %1488 = vmatprep.mubr.bf16.mxu0 0
      %1489 = vmatmul.mubr.bf16.gmra.mrb[0].mxu0 %v1440
      %v1490 = vpop.f32.mrb[0].mxu0
      %v1491 = vadd.f32 0.0, %v1490
      %v1492 = vpop.f32.mrb[0].mxu0
      %v1493 = vpop.f32.mrb[0].mxu0
      %v1494 = vpop.f32.mrb[0].mxu0
      %1495 = vdwg.mxu0
      %1498 = vrot.lane.b32.xlu0 %v1031, 96
      %v1499 = vpop.permute.xlu0 %1498
      %1500 = vrot.lane.b32.xlu0 %v1032, 96
      %v1501 = vpop.permute.xlu0 %1500
      %v1503 = vsel %vm1039, %v955, 0
      %v1506 = vsel %vm1039, %v956, 0
      %v1509 = vsel %vm1039, %v1499, 0
      %v1512 = vsel %vm1039, %v1501, 0
      %1514 = vmatprep.subr.bf16.mxu0 0
      %1515 = vmatpush1.bf16.xpose.msra.mxu0 %v1509
      %1516 = vmatprep.subr.bf16.mxu0 0
      %1517 = vmatpush1.bf16.xpose.msra.mxu0 %v1512
      %1518 = vmatprep.subr.bf16.mxu0 0
      %1519 = vmatpush1.bf16.xpose.msra.mxu0 0
      %1520 = vmatprep.subr.bf16.mxu0 0
      %1521 = vmatpush1.bf16.xpose.msra.mxu0 0
      %1522 = vmatprep.subr.bf16.mxu0 0
      %1523 = vmatpush1.bf16.xpose.msra.mxu0 0
      %1524 = vmatprep.subr.bf16.mxu0 0
      %1525 = vmatpush1.bf16.xpose.msra.mxu0 0
      %1526 = vmatprep.subr.bf16.mxu0 0
      %1527 = vmatpush1.bf16.xpose.msra.mxu0 0
      %1528 = vmatprep.subr.bf16.mxu0 0
      %1529 = vmatpush1.bf16.xpose.msra.mxu0 0
      %1530 = vmatprep.subr.bf16.mxu0 0
      %1531 = vmatpush1.bf16.xpose.msra.mxu0 0
      %1532 = vmatprep.subr.bf16.mxu0 0
      %1533 = vmatpush1.bf16.xpose.msra.mxu0 0
      %1534 = vmatprep.subr.bf16.mxu0 0
      %1535 = vmatpush1.bf16.xpose.msra.mxu0 0
      %1536 = vmatprep.subr.bf16.mxu0 0
      %1537 = vmatpush1.bf16.xpose.msra.mxu0 0
      %1538 = vmatprep.subr.bf16.mxu0 0
      %1539 = vmatpush1.bf16.xpose.msra.mxu0 0
      %1540 = vmatprep.subr.bf16.mxu0 0
      %1541 = vmatpush1.bf16.xpose.msra.mxu0 0
      %1542 = vmatprep.subr.bf16.mxu0 0
      %1543 = vmatpush1.bf16.xpose.msra.mxu0 0
      %1544 = vmatprep.subr.bf16.mxu0 0
      %1545 = vmatpush1.bf16.xpose.msra.mxu0 0
      %1546 = vmatprep.mubr.bf16.mxu0 0
      %1547 = vmatmul.mubr.bf16.gmra.mrb[0].mxu0 %v1503
      %v1548 = vpop.f32.mrb[0].mxu0
      %v1549 = vadd.f32 0.0, %v1548
      %v1550 = vpop.f32.mrb[0].mxu0
      %v1551 = vpop.f32.mrb[0].mxu0
      %v1552 = vadd.f32 0.0, %v1551
      %v1553 = vpop.f32.mrb[0].mxu0
      %1554 = vmatprep.mubr.bf16.mxu0 0
      %1555 = vmatmul.mubr.bf16.gmra.mrb[0].mxu0 %v1506
      %v1556 = vpop.f32.mrb[0].mxu0
      %v1557 = vadd.f32 0.0, %v1556
      %v1558 = vpop.f32.mrb[0].mxu0
      %v1559 = vpop.f32.mrb[0].mxu0
      %v1560 = vpop.f32.mrb[0].mxu0
      %1561 = vdwg.mxu0
      %v1562 = vlaneseq
      %v1563 = vand.u32 %v1562, 127
      %vm1564 = vcmp.lt.s32.totalorder %v1563, 17
      %v1565 = vsel %vm1564, 1, 0
      %vm1566 = vcmp.eq.s32.totalorder %v1565, 1
      %v1567 = vsel %vm1566, %v1087, -1e+30
      %v1568 = vsel %vm1566, %v1090, -1e+30
      %v1569 = vsel %vm1566, %v1095, -1e+30
      %v1570 = vsel %vm1566, %v1153, -1e+30
      %v1571 = vsel %vm1566, %v1156, -1e+30
      %v1572 = vsel %vm1566, %v1161, -1e+30
      %v1573 = vsel %vm1566, %v1219, -1e+30
      %v1574 = vsel %vm1566, %v1222, -1e+30
      %v1575 = vsel %vm1566, %v1227, -1e+30
      %v1576 = vsel %vm1566, %v1285, -1e+30
      %v1577 = vsel %vm1566, %v1288, -1e+30
      %v1578 = vsel %vm1566, %v1293, -1e+30
      %v1579 = vsel %vm1566, %v1351, -1e+30
      %v1580 = vsel %vm1566, %v1354, -1e+30
      %v1581 = vsel %vm1566, %v1359, -1e+30
      %v1582 = vsel %vm1566, %v1417, -1e+30
      %v1583 = vsel %vm1566, %v1420, -1e+30
      %v1584 = vsel %vm1566, %v1425, -1e+30
      %v1585 = vsel %vm1566, %v1483, -1e+30
      %v1586 = vsel %vm1566, %v1486, -1e+30
      %v1587 = vsel %vm1566, %v1491, -1e+30
      %v1588 = vsel %vm1566, %v1549, -1e+30
      %v1589 = vsel %vm1566, %v1552, -1e+30
      %v1590 = vsel %vm1566, %v1557, -1e+30
      %vm1591 = vcmask 195584
      %v1592 = vsel %vm1591, %v1567, -inf
      %1593 = vmax.xlane.f32.xlu0 %v1592
      %v1594 = vpop.xlane.xlu0 %1593
      %v1595 = vsel %vm1591, %v1568, -inf
      %1596 = vmax.xlane.f32.xlu0 %v1595
      %v1597 = vpop.xlane.xlu0 %1596
      %v1598 = vsel %vm1591, %v1569, -inf
      %1599 = vmax.xlane.f32.xlu0 %v1598
      %v1600 = vpop.xlane.xlu0 %1599
      %v1601 = vsel %vm1591, %v1570, -inf
      %1602 = vmax.xlane.f32.xlu0 %v1601
      %v1603 = vpop.xlane.xlu0 %1602
      %v1604 = vsel %vm1591, %v1571, -inf
      %1605 = vmax.xlane.f32.xlu0 %v1604
      %v1606 = vpop.xlane.xlu0 %1605
      %v1607 = vsel %vm1591, %v1572, -inf
      %1608 = vmax.xlane.f32.xlu0 %v1607
      %v1609 = vpop.xlane.xlu0 %1608
      %v1610 = vsel %vm1591, %v1573, -inf
      %1611 = vmax.xlane.f32.xlu0 %v1610
      %v1612 = vpop.xlane.xlu0 %1611
      %v1613 = vsel %vm1591, %v1574, -inf
      %1614 = vmax.xlane.f32.xlu0 %v1613
      %v1615 = vpop.xlane.xlu0 %1614
      %v1616 = vsel %vm1591, %v1575, -inf
      %1617 = vmax.xlane.f32.xlu0 %v1616
      %v1618 = vpop.xlane.xlu0 %1617
      %v1619 = vsel %vm1591, %v1576, -inf
      %1620 = vmax.xlane.f32.xlu0 %v1619
      %v1621 = vpop.xlane.xlu0 %1620
      %v1622 = vsel %vm1591, %v1577, -inf
      %1623 = vmax.xlane.f32.xlu0 %v1622
      %v1624 = vpop.xlane.xlu0 %1623
      %v1625 = vsel %vm1591, %v1578, -inf
      %1626 = vmax.xlane.f32.xlu0 %v1625
      %v1627 = vpop.xlane.xlu0 %1626
      %v1628 = vsel %vm1591, %v1579, -inf
      %1629 = vmax.xlane.f32.xlu0 %v1628
      %v1630 = vpop.xlane.xlu0 %1629
      %v1631 = vsel %vm1591, %v1580, -inf
      %1632 = vmax.xlane.f32.xlu0 %v1631
      %v1633 = vpop.xlane.xlu0 %1632
      %v1634 = vsel %vm1591, %v1581, -inf
      %1635 = vmax.xlane.f32.xlu0 %v1634
      %v1636 = vpop.xlane.xlu0 %1635
      %v1637 = vsel %vm1591, %v1582, -inf
      %1638 = vmax.xlane.f32.xlu0 %v1637
      %v1639 = vpop.xlane.xlu0 %1638
      %v1640 = vsel %vm1591, %v1583, -inf
      %1641 = vmax.xlane.f32.xlu0 %v1640
      %v1642 = vpop.xlane.xlu0 %1641
      %v1643 = vsel %vm1591, %v1584, -inf
      %1644 = vmax.xlane.f32.xlu0 %v1643
      %v1645 = vpop.xlane.xlu0 %1644
      %v1646 = vsel %vm1591, %v1585, -inf
      %1647 = vmax.xlane.f32.xlu0 %v1646
      %v1648 = vpop.xlane.xlu0 %1647
      %v1649 = vsel %vm1591, %v1586, -inf
      %1650 = vmax.xlane.f32.xlu0 %v1649
      %v1651 = vpop.xlane.xlu0 %1650
      %v1652 = vsel %vm1591, %v1587, -inf
      %1653 = vmax.xlane.f32.xlu0 %v1652
      %v1654 = vpop.xlane.xlu0 %1653
      %v1655 = vsel %vm1591, %v1588, -inf
      %1656 = vmax.xlane.f32.xlu0 %v1655
      %v1657 = vpop.xlane.xlu0 %1656
      %v1658 = vsel %vm1591, %v1589, -inf
      %1659 = vmax.xlane.f32.xlu0 %v1658
      %v1660 = vpop.xlane.xlu0 %1659
      %v1661 = vsel %vm1591, %v1590, -inf
      %1662 = vmax.xlane.f32.xlu0 %v1661
      %v1663 = vpop.xlane.xlu0 %1662
      %v1664 = vsub.f32 %v1567, %v1594
      %v1665 = vsub.f32 %v1568, %v1597
      %v1666 = vsub.f32 %v1569, %v1600
      %v1667 = vsub.f32 %v1570, %v1603
      %v1668 = vsub.f32 %v1571, %v1606
      %v1669 = vsub.f32 %v1572, %v1609
      %v1670 = vsub.f32 %v1573, %v1612
      %v1671 = vsub.f32 %v1574, %v1615
      %v1672 = vsub.f32 %v1575, %v1618
      %v1673 = vsub.f32 %v1576, %v1621
      %v1674 = vsub.f32 %v1577, %v1624
      %v1675 = vsub.f32 %v1578, %v1627
      %v1676 = vsub.f32 %v1579, %v1630
      %v1677 = vsub.f32 %v1580, %v1633
      %v1678 = vsub.f32 %v1581, %v1636
      %v1679 = vsub.f32 %v1582, %v1639
      %v1680 = vsub.f32 %v1583, %v1642
      %v1681 = vsub.f32 %v1584, %v1645
      %v1682 = vsub.f32 %v1585, %v1648
      %v1683 = vsub.f32 %v1586, %v1651
      %v1684 = vsub.f32 %v1587, %v1654
      %v1685 = vsub.f32 %v1588, %v1657
      %v1686 = vsub.f32 %v1589, %v1660
      %v1687 = vsub.f32 %v1590, %v1663
      %v1688 = vmul.f32 %v1664, 1.442695
      %v1689 = vpow.pop %v1688
      %v1690 = vmul.f32 %v1665, 1.442695
      %v1691 = vpow.pop %v1690
      %v1692 = vmul.f32 %v1666, 1.442695
      %v1693 = vpow.pop %v1692
      %v1694 = vmul.f32 %v1667, 1.442695
      %v1695 = vpow.pop %v1694
      %v1696 = vmul.f32 %v1668, 1.442695
      %v1697 = vpow.pop %v1696
      %v1698 = vmul.f32 %v1669, 1.442695
      %v1699 = vpow.pop %v1698
      %v1700 = vmul.f32 %v1670, 1.442695
      %v1701 = vpow.pop %v1700
      %v1702 = vmul.f32 %v1671, 1.442695
      %v1703 = vpow.pop %v1702
      %v1704 = vmul.f32 %v1672, 1.442695
      %v1705 = vpow.pop %v1704
      %v1706 = vmul.f32 %v1673, 1.442695
      %v1707 = vpow.pop %v1706
      %v1708 = vmul.f32 %v1674, 1.442695
      %v1709 = vpow.pop %v1708
      %v1710 = vmul.f32 %v1675, 1.442695
      %v1711 = vpow.pop %v1710
      %v1712 = vmul.f32 %v1676, 1.442695
      %v1713 = vpow.pop %v1712
      %v1714 = vmul.f32 %v1677, 1.442695
      %v1715 = vpow.pop %v1714
      %v1716 = vmul.f32 %v1678, 1.442695
      %v1717 = vpow.pop %v1716
      %v1718 = vmul.f32 %v1679, 1.442695
      %v1719 = vpow.pop %v1718
      %v1720 = vmul.f32 %v1680, 1.442695
      %v1721 = vpow.pop %v1720
      %v1722 = vmul.f32 %v1681, 1.442695
      %v1723 = vpow.pop %v1722
      %v1724 = vmul.f32 %v1682, 1.442695
      %v1725 = vpow.pop %v1724
      %v1726 = vmul.f32 %v1683, 1.442695
      %v1727 = vpow.pop %v1726
      %v1728 = vmul.f32 %v1684, 1.442695
      %v1729 = vpow.pop %v1728
      %v1730 = vmul.f32 %v1685, 1.442695
      %v1731 = vpow.pop %v1730
      %v1732 = vmul.f32 %v1686, 1.442695
      %v1733 = vpow.pop %v1732
      %v1734 = vmul.f32 %v1687, 1.442695
      %v1735 = vpow.pop %v1734
      %v1736 = vsel %vm1591, %v1689, 0.0
      %1737 = vadd.xlane.f32.xlu0 %v1736
      %v1738 = vpop.xlane.xlu0 %1737
      %v1739 = vsel %vm1591, %v1691, 0.0
      %1740 = vadd.xlane.f32.xlu0 %v1739
      %v1741 = vpop.xlane.xlu0 %1740
      %v1742 = vsel %vm1591, %v1693, 0.0
      %1743 = vadd.xlane.f32.xlu0 %v1742
      %v1744 = vpop.xlane.xlu0 %1743
      %v1745 = vsel %vm1591, %v1695, 0.0
      %1746 = vadd.xlane.f32.xlu0 %v1745
      %v1747 = vpop.xlane.xlu0 %1746
      %v1748 = vsel %vm1591, %v1697, 0.0
      %1749 = vadd.xlane.f32.xlu0 %v1748
      %v1750 = vpop.xlane.xlu0 %1749
      %v1751 = vsel %vm1591, %v1699, 0.0
      %1752 = vadd.xlane.f32.xlu0 %v1751
      %v1753 = vpop.xlane.xlu0 %1752
      %v1754 = vsel %vm1591, %v1701, 0.0
      %1755 = vadd.xlane.f32.xlu0 %v1754
      %v1756 = vpop.xlane.xlu0 %1755
      %v1757 = vsel %vm1591, %v1703, 0.0
      %1758 = vadd.xlane.f32.xlu0 %v1757
      %v1759 = vpop.xlane.xlu0 %1758
      %v1760 = vsel %vm1591, %v1705, 0.0
      %1761 = vadd.xlane.f32.xlu0 %v1760
      %v1762 = vpop.xlane.xlu0 %1761
      %v1763 = vsel %vm1591, %v1707, 0.0
      %1764 = vadd.xlane.f32.xlu0 %v1763
      %v1765 = vpop.xlane.xlu0 %1764
      %v1766 = vsel %vm1591, %v1709, 0.0
      %1767 = vadd.xlane.f32.xlu0 %v1766
      %v1768 = vpop.xlane.xlu0 %1767
      %v1769 = vsel %vm1591, %v1711, 0.0
      %1770 = vadd.xlane.f32.xlu0 %v1769
      %v1771 = vpop.xlane.xlu0 %1770
      %v1772 = vsel %vm1591, %v1713, 0.0
      %1773 = vadd.xlane.f32.xlu0 %v1772
      %v1774 = vpop.xlane.xlu0 %1773
      %v1775 = vsel %vm1591, %v1715, 0.0
      %1776 = vadd.xlane.f32.xlu0 %v1775
      %v1777 = vpop.xlane.xlu0 %1776
      %v1778 = vsel %vm1591, %v1717, 0.0
      %1779 = vadd.xlane.f32.xlu0 %v1778
      %v1780 = vpop.xlane.xlu0 %1779
      %v1781 = vsel %vm1591, %v1719, 0.0
      %1782 = vadd.xlane.f32.xlu0 %v1781
      %v1783 = vpop.xlane.xlu0 %1782
      %v1784 = vsel %vm1591, %v1721, 0.0
      %1785 = vadd.xlane.f32.xlu0 %v1784
      %v1786 = vpop.xlane.xlu0 %1785
      %v1787 = vsel %vm1591, %v1723, 0.0
      %1788 = vadd.xlane.f32.xlu0 %v1787
      %v1789 = vpop.xlane.xlu0 %1788
      %v1790 = vsel %vm1591, %v1725, 0.0
      %1791 = vadd.xlane.f32.xlu0 %v1790
      %v1792 = vpop.xlane.xlu0 %1791
      %v1793 = vsel %vm1591, %v1727, 0.0
      %1794 = vadd.xlane.f32.xlu0 %v1793
      %v1795 = vpop.xlane.xlu0 %1794
      %v1796 = vsel %vm1591, %v1729, 0.0
      %1797 = vadd.xlane.f32.xlu0 %v1796
      %v1798 = vpop.xlane.xlu0 %1797
      %v1799 = vsel %vm1591, %v1731, 0.0
      %1800 = vadd.xlane.f32.xlu0 %v1799
      %v1801 = vpop.xlane.xlu0 %1800
      %v1802 = vsel %vm1591, %v1733, 0.0
      %1803 = vadd.xlane.f32.xlu0 %v1802
      %v1804 = vpop.xlane.xlu0 %1803
      %v1805 = vsel %vm1591, %v1735, 0.0
      %1806 = vadd.xlane.f32.xlu0 %v1805
      %v1807 = vpop.xlane.xlu0 %1806
      %v1808 = vrcp.pop %v1738
      %v1809 = vrcp.pop %v1741
      %v1810 = vrcp.pop %v1744
      %v1811 = vrcp.pop %v1747
      %v1812 = vrcp.pop %v1750
      %v1813 = vrcp.pop %v1753
      %v1814 = vrcp.pop %v1756
      %v1815 = vrcp.pop %v1759
      %v1816 = vrcp.pop %v1762
      %v1817 = vrcp.pop %v1765
      %v1818 = vrcp.pop %v1768
      %v1819 = vrcp.pop %v1771
      %v1820 = vrcp.pop %v1774
      %v1821 = vrcp.pop %v1777
      %v1822 = vrcp.pop %v1780
      %v1823 = vrcp.pop %v1783
      %v1824 = vrcp.pop %v1786
      %v1825 = vrcp.pop %v1789
      %v1826 = vrcp.pop %v1792
      %v1827 = vrcp.pop %v1795
      %v1828 = vrcp.pop %v1798
      %v1829 = vrcp.pop %v1801
      %v1830 = vrcp.pop %v1804
      %v1831 = vrcp.pop %v1807
      %v1832 = vmul.f32 %v1689, %v1808
      %v1833 = vmul.f32 %v1691, %v1809
      %v1834 = vmul.f32 %v1693, %v1810
      %v1835 = vmul.f32 %v1695, %v1811
      %v1836 = vmul.f32 %v1697, %v1812
      %v1837 = vmul.f32 %v1699, %v1813
      %v1838 = vmul.f32 %v1701, %v1814
      %v1839 = vmul.f32 %v1703, %v1815
      %v1840 = vmul.f32 %v1705, %v1816
      %v1841 = vmul.f32 %v1707, %v1817
      %v1842 = vmul.f32 %v1709, %v1818
      %v1843 = vmul.f32 %v1711, %v1819
      %v1844 = vmul.f32 %v1713, %v1820
      %v1845 = vmul.f32 %v1715, %v1821
      %v1846 = vmul.f32 %v1717, %v1822
      %v1847 = vmul.f32 %v1719, %v1823
      %v1848 = vmul.f32 %v1721, %v1824
      %v1849 = vmul.f32 %v1723, %v1825
      %v1850 = vmul.f32 %v1725, %v1826
      %v1851 = vmul.f32 %v1727, %v1827
      %v1852 = vmul.f32 %v1729, %v1828
      %v1853 = vmul.f32 %v1731, %v1829
      %v1854 = vmul.f32 %v1733, %v1830
      %v1855 = vmul.f32 %v1735, %v1831
      %v1856 = vpack.c.bf16 %v1833, %v1832
      %v1857 = vpack.c.bf16 %v1834, %v1834
      %v1858 = vpack.c.bf16 %v1836, %v1835
      %v1859 = vpack.c.bf16 %v1837, %v1837
      %v1860 = vpack.c.bf16 %v1839, %v1838
      %v1861 = vpack.c.bf16 %v1840, %v1840
      %v1862 = vpack.c.bf16 %v1842, %v1841
      %v1863 = vpack.c.bf16 %v1843, %v1843
      %v1864 = vpack.c.bf16 %v1845, %v1844
      %v1865 = vpack.c.bf16 %v1846, %v1846
      %v1866 = vpack.c.bf16 %v1848, %v1847
      %v1867 = vpack.c.bf16 %v1849, %v1849
      %v1868 = vpack.c.bf16 %v1851, %v1850
      %v1869 = vpack.c.bf16 %v1852, %v1852
      %v1870 = vpack.c.bf16 %v1854, %v1853
      %v1871 = vpack.c.bf16 %v1855, %v1855
      %1872 = vrot.lane.b32.xlu0 %v1017, 64
      %v1873 = vpop.permute.xlu0 %1872
      %1874 = vrot.lane.b32.xlu0 %v1018, 64
      %v1875 = vpop.permute.xlu0 %1874
      %v1878 = vsel %vm1591, %v1856, 0
      %v1881 = vsel %vm1591, %v1857, 0
      %vm1883 = vcmask 1043456
      %v1885 = vsel %vm1883, %v1875, 0
      %1887 = vmatprep.subr.bf16.mxu0 0
      %1888 = vmatpush1.bf16.msra.mxu0 %v1873
      %1889 = vmatprep.subr.bf16.mxu0 0
      %1890 = vmatpush1.bf16.msra.mxu0 %v1885
      %1891 = vmatprep.subr.bf16.mxu0 0
      %1892 = vmatpush1.bf16.msra.mxu0 0
      %1893 = vmatprep.subr.bf16.mxu0 0
      %1894 = vmatpush1.bf16.msra.mxu0 0
      %1895 = vmatprep.subr.bf16.mxu0 0
      %1896 = vmatpush1.bf16.msra.mxu0 0
      %1897 = vmatprep.subr.bf16.mxu0 0
      %1898 = vmatpush1.bf16.msra.mxu0 0
      %1899 = vmatprep.subr.bf16.mxu0 0
      %1900 = vmatpush1.bf16.msra.mxu0 0
      %1901 = vmatprep.subr.bf16.mxu0 0
      %1902 = vmatpush1.bf16.msra.mxu0 0
      %1903 = vmatprep.subr.bf16.mxu0 0
      %1904 = vmatpush1.bf16.msra.mxu0 0
      %1905 = vmatprep.subr.bf16.mxu0 0
      %1906 = vmatpush1.bf16.msra.mxu0 0
      %1907 = vmatprep.subr.bf16.mxu0 0
      %1908 = vmatpush1.bf16.msra.mxu0 0
      %1909 = vmatprep.subr.bf16.mxu0 0
      %1910 = vmatpush1.bf16.msra.mxu0 0
      %1911 = vmatprep.subr.bf16.mxu0 0
      %1912 = vmatpush1.bf16.msra.mxu0 0
      %1913 = vmatprep.subr.bf16.mxu0 0
      %1914 = vmatpush1.bf16.msra.mxu0 0
      %1915 = vmatprep.subr.bf16.mxu0 0
      %1916 = vmatpush1.bf16.msra.mxu0 0
      %1917 = vmatprep.subr.bf16.mxu0 0
      %1918 = vmatpush1.bf16.msra.mxu0 0
      %1919 = vmatprep.mubr.bf16.mxu0 0
      %1920 = vmatmul.mubr.bf16.gmra.mrb[0].mxu0 %v1878
      %v1921 = vpop.f32.mrb[0].mxu0
      %v1922 = vadd.f32 0.0, %v1921
      %v1923 = vpop.f32.mrb[0].mxu0
      %v1924 = vpop.f32.mrb[0].mxu0
      %v1925 = vadd.f32 0.0, %v1924
      %v1926 = vpop.f32.mrb[0].mxu0
      %1927 = vmatprep.mubr.bf16.mxu0 0
      %1928 = vmatmul.mubr.bf16.gmra.mrb[0].mxu0 %v1881
      %v1929 = vpop.f32.mrb[0].mxu0
      %v1930 = vadd.f32 0.0, %v1929
      %v1931 = vpop.f32.mrb[0].mxu0
      %v1932 = vpop.f32.mrb[0].mxu0
      %v1933 = vpop.f32.mrb[0].mxu0
      %1934 = vdwg.mxu0
      %1935 = vrot.lane.b32.xlu0 %v1019, 64
      %v1936 = vpop.permute.xlu0 %1935
      %1937 = vrot.lane.b32.xlu0 %v1020, 64
      %v1938 = vpop.permute.xlu0 %1937
      %v1941 = vsel %vm1591, %v1858, 0
      %v1944 = vsel %vm1591, %v1859, 0
      %v1947 = vsel %vm1883, %v1938, 0
      %1949 = vmatprep.subr.bf16.mxu0 0
      %1950 = vmatpush1.bf16.msra.mxu0 %v1936
      %1951 = vmatprep.subr.bf16.mxu0 0
      %1952 = vmatpush1.bf16.msra.mxu0 %v1947
      %1953 = vmatprep.subr.bf16.mxu0 0
      %1954 = vmatpush1.bf16.msra.mxu0 0
      %1955 = vmatprep.subr.bf16.mxu0 0
      %1956 = vmatpush1.bf16.msra.mxu0 0
      %1957 = vmatprep.subr.bf16.mxu0 0
      %1958 = vmatpush1.bf16.msra.mxu0 0
      %1959 = vmatprep.subr.bf16.mxu0 0
      %1960 = vmatpush1.bf16.msra.mxu0 0
      %1961 = vmatprep.subr.bf16.mxu0 0
      %1962 = vmatpush1.bf16.msra.mxu0 0
      %1963 = vmatprep.subr.bf16.mxu0 0
      %1964 = vmatpush1.bf16.msra.mxu0 0
      %1965 = vmatprep.subr.bf16.mxu0 0
      %1966 = vmatpush1.bf16.msra.mxu0 0
      %1967 = vmatprep.subr.bf16.mxu0 0
      %1968 = vmatpush1.bf16.msra.mxu0 0
      %1969 = vmatprep.subr.bf16.mxu0 0
      %1970 = vmatpush1.bf16.msra.mxu0 0
      %1971 = vmatprep.subr.bf16.mxu0 0
      %1972 = vmatpush1.bf16.msra.mxu0 0
      %1973 = vmatprep.subr.bf16.mxu0 0
      %1974 = vmatpush1.bf16.msra.mxu0 0
      %1975 = vmatprep.subr.bf16.mxu0 0
      %1976 = vmatpush1.bf16.msra.mxu0 0
      %1977 = vmatprep.subr.bf16.mxu0 0
      %1978 = vmatpush1.bf16.msra.mxu0 0
      %1979 = vmatprep.subr.bf16.mxu0 0
      %1980 = vmatpush1.bf16.msra.mxu0 0
      %1981 = vmatprep.mubr.bf16.mxu0 0
      %1982 = vmatmul.mubr.bf16.gmra.mrb[0].mxu0 %v1941
      %v1983 = vpop.f32.mrb[0].mxu0
      %v1984 = vadd.f32 0.0, %v1983
      %v1985 = vpop.f32.mrb[0].mxu0
      %v1986 = vpop.f32.mrb[0].mxu0
      %v1987 = vadd.f32 0.0, %v1986
      %v1988 = vpop.f32.mrb[0].mxu0
      %1989 = vmatprep.mubr.bf16.mxu0 0
      %1990 = vmatmul.mubr.bf16.gmra.mrb[0].mxu0 %v1944
      %v1991 = vpop.f32.mrb[0].mxu0
      %v1992 = vadd.f32 0.0, %v1991
      %v1993 = vpop.f32.mrb[0].mxu0
      %v1994 = vpop.f32.mrb[0].mxu0
      %v1995 = vpop.f32.mrb[0].mxu0
      %1996 = vdwg.mxu0
      %1997 = vrot.lane.b32.xlu0 %v1021, 64
      %v1998 = vpop.permute.xlu0 %1997
      %1999 = vrot.lane.b32.xlu0 %v1022, 64
      %v2000 = vpop.permute.xlu0 %1999
      %v2003 = vsel %vm1591, %v1860, 0
      %v2006 = vsel %vm1591, %v1861, 0
      %v2009 = vsel %vm1883, %v2000, 0
      %2011 = vmatprep.subr.bf16.mxu0 0
      %2012 = vmatpush1.bf16.msra.mxu0 %v1998
      %2013 = vmatprep.subr.bf16.mxu0 0
      %2014 = vmatpush1.bf16.msra.mxu0 %v2009
      %2015 = vmatprep.subr.bf16.mxu0 0
      %2016 = vmatpush1.bf16.msra.mxu0 0
      %2017 = vmatprep.subr.bf16.mxu0 0
      %2018 = vmatpush1.bf16.msra.mxu0 0
      %2019 = vmatprep.subr.bf16.mxu0 0
      %2020 = vmatpush1.bf16.msra.mxu0 0
      %2021 = vmatprep.subr.bf16.mxu0 0
      %2022 = vmatpush1.bf16.msra.mxu0 0
      %2023 = vmatprep.subr.bf16.mxu0 0
      %2024 = vmatpush1.bf16.msra.mxu0 0
      %2025 = vmatprep.subr.bf16.mxu0 0
      %2026 = vmatpush1.bf16.msra.mxu0 0
      %2027 = vmatprep.subr.bf16.mxu0 0
      %2028 = vmatpush1.bf16.msra.mxu0 0
      %2029 = vmatprep.subr.bf16.mxu0 0
      %2030 = vmatpush1.bf16.msra.mxu0 0
      %2031 = vmatprep.subr.bf16.mxu0 0
      %2032 = vmatpush1.bf16.msra.mxu0 0
      %2033 = vmatprep.subr.bf16.mxu0 0
      %2034 = vmatpush1.bf16.msra.mxu0 0
      %2035 = vmatprep.subr.bf16.mxu0 0
      %2036 = vmatpush1.bf16.msra.mxu0 0
      %2037 = vmatprep.subr.bf16.mxu0 0
      %2038 = vmatpush1.bf16.msra.mxu0 0
      %2039 = vmatprep.subr.bf16.mxu0 0
      %2040 = vmatpush1.bf16.msra.mxu0 0
      %2041 = vmatprep.subr.bf16.mxu0 0
      %2042 = vmatpush1.bf16.msra.mxu0 0
      %2043 = vmatprep.mubr.bf16.mxu0 0
      %2044 = vmatmul.mubr.bf16.gmra.mrb[0].mxu0 %v2003
      %v2045 = vpop.f32.mrb[0].mxu0
      %v2046 = vadd.f32 0.0, %v2045
      %v2047 = vpop.f32.mrb[0].mxu0
      %v2048 = vpop.f32.mrb[0].mxu0
      %v2049 = vadd.f32 0.0, %v2048
      %v2050 = vpop.f32.mrb[0].mxu0
      %2051 = vmatprep.mubr.bf16.mxu0 0
      %2052 = vmatmul.mubr.bf16.gmra.mrb[0].mxu0 %v2006
      %v2053 = vpop.f32.mrb[0].mxu0
      %v2054 = vadd.f32 0.0, %v2053
      %v2055 = vpop.f32.mrb[0].mxu0
      %v2056 = vpop.f32.mrb[0].mxu0
      %v2057 = vpop.f32.mrb[0].mxu0
      %2058 = vdwg.mxu0
      %2059 = vrot.lane.b32.xlu0 %v1023, 64
      %v2060 = vpop.permute.xlu0 %2059
      %2061 = vrot.lane.b32.xlu0 %v1024, 64
      %v2062 = vpop.permute.xlu0 %2061
      %v2065 = vsel %vm1591, %v1862, 0
      %v2068 = vsel %vm1591, %v1863, 0
      %v2071 = vsel %vm1883, %v2062, 0
      %2073 = vmatprep.subr.bf16.mxu0 0
      %2074 = vmatpush1.bf16.msra.mxu0 %v2060
      %2075 = vmatprep.subr.bf16.mxu0 0
      %2076 = vmatpush1.bf16.msra.mxu0 %v2071
      %2077 = vmatprep.subr.bf16.mxu0 0
      %2078 = vmatpush1.bf16.msra.mxu0 0
      %2079 = vmatprep.subr.bf16.mxu0 0
      %2080 = vmatpush1.bf16.msra.mxu0 0
      %2081 = vmatprep.subr.bf16.mxu0 0
      %2082 = vmatpush1.bf16.msra.mxu0 0
      %2083 = vmatprep.subr.bf16.mxu0 0
      %2084 = vmatpush1.bf16.msra.mxu0 0
      %2085 = vmatprep.subr.bf16.mxu0 0
      %2086 = vmatpush1.bf16.msra.mxu0 0
      %2087 = vmatprep.subr.bf16.mxu0 0
      %2088 = vmatpush1.bf16.msra.mxu0 0
      %2089 = vmatprep.subr.bf16.mxu0 0
      %2090 = vmatpush1.bf16.msra.mxu0 0
      %2091 = vmatprep.subr.bf16.mxu0 0
      %2092 = vmatpush1.bf16.msra.mxu0 0
      %2093 = vmatprep.subr.bf16.mxu0 0
      %2094 = vmatpush1.bf16.msra.mxu0 0
      %2095 = vmatprep.subr.bf16.mxu0 0
      %2096 = vmatpush1.bf16.msra.mxu0 0
      %2097 = vmatprep.subr.bf16.mxu0 0
      %2098 = vmatpush1.bf16.msra.mxu0 0
      %2099 = vmatprep.subr.bf16.mxu0 0
      %2100 = vmatpush1.bf16.msra.mxu0 0
      %2101 = vmatprep.subr.bf16.mxu0 0
      %2102 = vmatpush1.bf16.msra.mxu0 0
      %2103 = vmatprep.subr.bf16.mxu0 0
      %2104 = vmatpush1.bf16.msra.mxu0 0
      %2105 = vmatprep.mubr.bf16.mxu0 0
      %2106 = vmatmul.mubr.bf16.gmra.mrb[0].mxu0 %v2065
      %v2107 = vpop.f32.mrb[0].mxu0
      %v2108 = vadd.f32 0.0, %v2107
      %v2109 = vpop.f32.mrb[0].mxu0
      %v2110 = vpop.f32.mrb[0].mxu0
      %v2111 = vadd.f32 0.0, %v2110
      %v2112 = vpop.f32.mrb[0].mxu0
      %2113 = vmatprep.mubr.bf16.mxu0 0
      %2114 = vmatmul.mubr.bf16.gmra.mrb[0].mxu0 %v2068
      %v2115 = vpop.f32.mrb[0].mxu0
      %v2116 = vadd.f32 0.0, %v2115
      %v2117 = vpop.f32.mrb[0].mxu0
      %v2118 = vpop.f32.mrb[0].mxu0
      %v2119 = vpop.f32.mrb[0].mxu0
      %2120 = vdwg.mxu0
      %2121 = vrot.lane.b32.xlu0 %v1025, 64
      %v2122 = vpop.permute.xlu0 %2121
      %2123 = vrot.lane.b32.xlu0 %v1026, 64
      %v2124 = vpop.permute.xlu0 %2123
      %v2127 = vsel %vm1591, %v1864, 0
      %v2130 = vsel %vm1591, %v1865, 0
      %v2133 = vsel %vm1883, %v2124, 0
      %2135 = vmatprep.subr.bf16.mxu0 0
      %2136 = vmatpush1.bf16.msra.mxu0 %v2122
      %2137 = vmatprep.subr.bf16.mxu0 0
      %2138 = vmatpush1.bf16.msra.mxu0 %v2133
      %2139 = vmatprep.subr.bf16.mxu0 0
      %2140 = vmatpush1.bf16.msra.mxu0 0
      %2141 = vmatprep.subr.bf16.mxu0 0
      %2142 = vmatpush1.bf16.msra.mxu0 0
      %2143 = vmatprep.subr.bf16.mxu0 0
      %2144 = vmatpush1.bf16.msra.mxu0 0
      %2145 = vmatprep.subr.bf16.mxu0 0
      %2146 = vmatpush1.bf16.msra.mxu0 0
      %2147 = vmatprep.subr.bf16.mxu0 0
      %2148 = vmatpush1.bf16.msra.mxu0 0
      %2149 = vmatprep.subr.bf16.mxu0 0
      %2150 = vmatpush1.bf16.msra.mxu0 0
      %2151 = vmatprep.subr.bf16.mxu0 0
      %2152 = vmatpush1.bf16.msra.mxu0 0
      %2153 = vmatprep.subr.bf16.mxu0 0
      %2154 = vmatpush1.bf16.msra.mxu0 0
      %2155 = vmatprep.subr.bf16.mxu0 0
      %2156 = vmatpush1.bf16.msra.mxu0 0
      %2157 = vmatprep.subr.bf16.mxu0 0
      %2158 = vmatpush1.bf16.msra.mxu0 0
      %2159 = vmatprep.subr.bf16.mxu0 0
      %2160 = vmatpush1.bf16.msra.mxu0 0
      %2161 = vmatprep.subr.bf16.mxu0 0
      %2162 = vmatpush1.bf16.msra.mxu0 0
      %2163 = vmatprep.subr.bf16.mxu0 0
      %2164 = vmatpush1.bf16.msra.mxu0 0
      %2165 = vmatprep.subr.bf16.mxu0 0
      %2166 = vmatpush1.bf16.msra.mxu0 0
      %2167 = vmatprep.mubr.bf16.mxu0 0
      %2168 = vmatmul.mubr.bf16.gmra.mrb[0].mxu0 %v2127
      %v2169 = vpop.f32.mrb[0].mxu0
      %v2170 = vadd.f32 0.0, %v2169
      %v2171 = vpop.f32.mrb[0].mxu0
      %v2172 = vpop.f32.mrb[0].mxu0
      %v2173 = vadd.f32 0.0, %v2172
      %v2174 = vpop.f32.mrb[0].mxu0
      %2175 = vmatprep.mubr.bf16.mxu0 0
      %2176 = vmatmul.mubr.bf16.gmra.mrb[0].mxu0 %v2130
      %v2177 = vpop.f32.mrb[0].mxu0
      %v2178 = vadd.f32 0.0, %v2177
      %v2179 = vpop.f32.mrb[0].mxu0
      %v2180 = vpop.f32.mrb[0].mxu0
      %v2181 = vpop.f32.mrb[0].mxu0
      %2182 = vdwg.mxu0
      %2183 = vrot.lane.b32.xlu0 %v1027, 64
      %v2184 = vpop.permute.xlu0 %2183
      %2185 = vrot.lane.b32.xlu0 %v1028, 64
      %v2186 = vpop.permute.xlu0 %2185
      %v2189 = vsel %vm1591, %v1866, 0
      %v2192 = vsel %vm1591, %v1867, 0
      %v2195 = vsel %vm1883, %v2186, 0
      %2197 = vmatprep.subr.bf16.mxu0 0
      %2198 = vmatpush1.bf16.msra.mxu0 %v2184
      %2199 = vmatprep.subr.bf16.mxu0 0
      %2200 = vmatpush1.bf16.msra.mxu0 %v2195
      %2201 = vmatprep.subr.bf16.mxu0 0
      %2202 = vmatpush1.bf16.msra.mxu0 0
      %2203 = vmatprep.subr.bf16.mxu0 0
      %2204 = vmatpush1.bf16.msra.mxu0 0
      %2205 = vmatprep.subr.bf16.mxu0 0
      %2206 = vmatpush1.bf16.msra.mxu0 0
      %2207 = vmatprep.subr.bf16.mxu0 0
      %2208 = vmatpush1.bf16.msra.mxu0 0
      %2209 = vmatprep.subr.bf16.mxu0 0
      %2210 = vmatpush1.bf16.msra.mxu0 0
      %2211 = vmatprep.subr.bf16.mxu0 0
      %2212 = vmatpush1.bf16.msra.mxu0 0
      %2213 = vmatprep.subr.bf16.mxu0 0
      %2214 = vmatpush1.bf16.msra.mxu0 0
      %2215 = vmatprep.subr.bf16.mxu0 0
      %2216 = vmatpush1.bf16.msra.mxu0 0
      %2217 = vmatprep.subr.bf16.mxu0 0
      %2218 = vmatpush1.bf16.msra.mxu0 0
      %2219 = vmatprep.subr.bf16.mxu0 0
      %2220 = vmatpush1.bf16.msra.mxu0 0
      %2221 = vmatprep.subr.bf16.mxu0 0
      %2222 = vmatpush1.bf16.msra.mxu0 0
      %2223 = vmatprep.subr.bf16.mxu0 0
      %2224 = vmatpush1.bf16.msra.mxu0 0
      %2225 = vmatprep.subr.bf16.mxu0 0
      %2226 = vmatpush1.bf16.msra.mxu0 0
      %2227 = vmatprep.subr.bf16.mxu0 0
      %2228 = vmatpush1.bf16.msra.mxu0 0
      %2229 = vmatprep.mubr.bf16.mxu0 0
      %2230 = vmatmul.mubr.bf16.gmra.mrb[0].mxu0 %v2189
      %v2231 = vpop.f32.mrb[0].mxu0
      %v2232 = vadd.f32 0.0, %v2231
      %v2233 = vpop.f32.mrb[0].mxu0
      %v2234 = vpop.f32.mrb[0].mxu0
      %v2235 = vadd.f32 0.0, %v2234
      %v2236 = vpop.f32.mrb[0].mxu0
      %2237 = vmatprep.mubr.bf16.mxu0 0
      %2238 = vmatmul.mubr.bf16.gmra.mrb[0].mxu0 %v2192
      %v2239 = vpop.f32.mrb[0].mxu0
      %v2240 = vadd.f32 0.0, %v2239
      %v2241 = vpop.f32.mrb[0].mxu0
      %v2242 = vpop.f32.mrb[0].mxu0
      %v2243 = vpop.f32.mrb[0].mxu0
      %2244 = vdwg.mxu0
      %2245 = vrot.lane.b32.xlu0 %v1029, 64
      %v2246 = vpop.permute.xlu0 %2245
      %2247 = vrot.lane.b32.xlu0 %v1030, 64
      %v2248 = vpop.permute.xlu0 %2247
      %v2251 = vsel %vm1591, %v1868, 0
      %v2254 = vsel %vm1591, %v1869, 0
      %v2257 = vsel %vm1883, %v2248, 0
      %2259 = vmatprep.subr.bf16.mxu0 0
      %2260 = vmatpush1.bf16.msra.mxu0 %v2246
      %2261 = vmatprep.subr.bf16.mxu0 0
      %2262 = vmatpush1.bf16.msra.mxu0 %v2257
      %2263 = vmatprep.subr.bf16.mxu0 0
      %2264 = vmatpush1.bf16.msra.mxu0 0
      %2265 = vmatprep.subr.bf16.mxu0 0
      %2266 = vmatpush1.bf16.msra.mxu0 0
      %2267 = vmatprep.subr.bf16.mxu0 0
      %2268 = vmatpush1.bf16.msra.mxu0 0
      %2269 = vmatprep.subr.bf16.mxu0 0
      %2270 = vmatpush1.bf16.msra.mxu0 0
      %2271 = vmatprep.subr.bf16.mxu0 0
      %2272 = vmatpush1.bf16.msra.mxu0 0
      %2273 = vmatprep.subr.bf16.mxu0 0
      %2274 = vmatpush1.bf16.msra.mxu0 0
      %2275 = vmatprep.subr.bf16.mxu0 0
      %2276 = vmatpush1.bf16.msra.mxu0 0
      %2277 = vmatprep.subr.bf16.mxu0 0
      %2278 = vmatpush1.bf16.msra.mxu0 0
      %2279 = vmatprep.subr.bf16.mxu0 0
      %2280 = vmatpush1.bf16.msra.mxu0 0
      %2281 = vmatprep.subr.bf16.mxu0 0
      %2282 = vmatpush1.bf16.msra.mxu0 0
      %2283 = vmatprep.subr.bf16.mxu0 0
      %2284 = vmatpush1.bf16.msra.mxu0 0
      %2285 = vmatprep.subr.bf16.mxu0 0
      %2286 = vmatpush1.bf16.msra.mxu0 0
      %2287 = vmatprep.subr.bf16.mxu0 0
      %2288 = vmatpush1.bf16.msra.mxu0 0
      %2289 = vmatprep.subr.bf16.mxu0 0
      %2290 = vmatpush1.bf16.msra.mxu0 0
      %2291 = vmatprep.mubr.bf16.mxu0 0
      %2292 = vmatmul.mubr.bf16.gmra.mrb[0].mxu0 %v2251
      %v2293 = vpop.f32.mrb[0].mxu0
      %v2294 = vadd.f32 0.0, %v2293
      %v2295 = vpop.f32.mrb[0].mxu0
      %v2296 = vpop.f32.mrb[0].mxu0
      %v2297 = vadd.f32 0.0, %v2296
      %v2298 = vpop.f32.mrb[0].mxu0
      %2299 = vmatprep.mubr.bf16.mxu0 0
      %2300 = vmatmul.mubr.bf16.gmra.mrb[0].mxu0 %v2254
      %v2301 = vpop.f32.mrb[0].mxu0
      %v2302 = vadd.f32 0.0, %v2301
      %v2303 = vpop.f32.mrb[0].mxu0
      %v2304 = vpop.f32.mrb[0].mxu0
      %v2305 = vpop.f32.mrb[0].mxu0
      %2306 = vdwg.mxu0
      %2307 = vrot.lane.b32.xlu0 %v1031, 64
      %v2308 = vpop.permute.xlu0 %2307
      %2309 = vrot.lane.b32.xlu0 %v1032, 64
      %v2310 = vpop.permute.xlu0 %2309
      %v2313 = vsel %vm1591, %v1870, 0
      %v2316 = vsel %vm1591, %v1871, 0
      %v2319 = vsel %vm1883, %v2310, 0
      %2321 = vmatprep.subr.bf16.mxu0 0
      %2322 = vmatpush1.bf16.msra.mxu0 %v2308
      %2323 = vmatprep.subr.bf16.mxu0 0
      %2324 = vmatpush1.bf16.msra.mxu0 %v2319
      %2325 = vmatprep.subr.bf16.mxu0 0
      %2326 = vmatpush1.bf16.msra.mxu0 0
      %2327 = vmatprep.subr.bf16.mxu0 0
      %2328 = vmatpush1.bf16.msra.mxu0 0
      %2329 = vmatprep.subr.bf16.mxu0 0
      %2330 = vmatpush1.bf16.msra.mxu0 0
      %2331 = vmatprep.subr.bf16.mxu0 0
      %2332 = vmatpush1.bf16.msra.mxu0 0
      %2333 = vmatprep.subr.bf16.mxu0 0
      %2334 = vmatpush1.bf16.msra.mxu0 0
      %2335 = vmatprep.subr.bf16.mxu0 0
      %2336 = vmatpush1.bf16.msra.mxu0 0
      %2337 = vmatprep.subr.bf16.mxu0 0
      %2338 = vmatpush1.bf16.msra.mxu0 0
      %2339 = vmatprep.subr.bf16.mxu0 0
      %2340 = vmatpush1.bf16.msra.mxu0 0
      %2341 = vmatprep.subr.bf16.mxu0 0
      %2342 = vmatpush1.bf16.msra.mxu0 0
      %2343 = vmatprep.subr.bf16.mxu0 0
      %2344 = vmatpush1.bf16.msra.mxu0 0
      %2345 = vmatprep.subr.bf16.mxu0 0
      %2346 = vmatpush1.bf16.msra.mxu0 0
      %2347 = vmatprep.subr.bf16.mxu0 0
      %2348 = vmatpush1.bf16.msra.mxu0 0
      %2349 = vmatprep.subr.bf16.mxu0 0
      %2350 = vmatpush1.bf16.msra.mxu0 0
      %2351 = vmatprep.subr.bf16.mxu0 0
      %2352 = vmatpush1.bf16.msra.mxu0 0
      %2353 = vmatprep.mubr.bf16.mxu0 0
      %2354 = vmatmul.mubr.bf16.gmra.mrb[0].mxu0 %v2313
      %v2355 = vpop.f32.mrb[0].mxu0
      %v2356 = vadd.f32 0.0, %v2355
      %v2357 = vpop.f32.mrb[0].mxu0
      %v2358 = vpop.f32.mrb[0].mxu0
      %v2359 = vadd.f32 0.0, %v2358
      %v2360 = vpop.f32.mrb[0].mxu0
      %2361 = vmatprep.mubr.bf16.mxu0 0
      %2362 = vmatmul.mubr.bf16.gmra.mrb[0].mxu0 %v2316
      %v2363 = vpop.f32.mrb[0].mxu0
      %v2364 = vadd.f32 0.0, %v2363
      %v2365 = vpop.f32.mrb[0].mxu0
      %v2366 = vpop.f32.mrb[0].mxu0
      %v2367 = vpop.f32.mrb[0].mxu0
      %2368 = vdwg.mxu0
      %2375 = vrot.lane.b32.xlu0 %v1984, 8
      %v2376 = vpop.permute.xlu0 %2375
      %2377 = vrot.lane.b32.xlu0 %v1987, 8
      %v2378 = vpop.permute.xlu0 %2377
      %2379 = vrot.lane.b32.xlu0 %v1992, 8
      %v2380 = vpop.permute.xlu0 %2379
      %2381 = vrot.lane.b32.xlu0 %v2232, 8
      %v2382 = vpop.permute.xlu0 %2381
      %2383 = vrot.lane.b32.xlu0 %v2235, 8
      %v2384 = vpop.permute.xlu0 %2383
      %2385 = vrot.lane.b32.xlu0 %v2240, 8
      %v2386 = vpop.permute.xlu0 %2385
      %2399 = vrot.lane.b32.xlu0 %v2046, 16
      %v2400 = vpop.permute.xlu0 %2399
      %2401 = vrot.lane.b32.xlu0 %v2049, 16
      %v2402 = vpop.permute.xlu0 %2401
      %2403 = vrot.lane.b32.xlu0 %v2054, 16
      %v2404 = vpop.permute.xlu0 %2403
      %2405 = vrot.lane.b32.xlu0 %v2294, 16
      %v2406 = vpop.permute.xlu0 %2405
      %2407 = vrot.lane.b32.xlu0 %v2297, 16
      %v2408 = vpop.permute.xlu0 %2407
      %2409 = vrot.lane.b32.xlu0 %v2302, 16
      %v2410 = vpop.permute.xlu0 %2409
      %2423 = vrot.lane.b32.xlu0 %v2108, 24
      %v2424 = vpop.permute.xlu0 %2423
      %2425 = vrot.lane.b32.xlu0 %v2111, 24
      %v2426 = vpop.permute.xlu0 %2425
      %2427 = vrot.lane.b32.xlu0 %v2116, 24
      %v2428 = vpop.permute.xlu0 %2427
      %2429 = vrot.lane.b32.xlu0 %v2356, 24
      %v2430 = vpop.permute.xlu0 %2429
      %2431 = vrot.lane.b32.xlu0 %v2359, 24
      %v2432 = vpop.permute.xlu0 %2431
      %2433 = vrot.lane.b32.xlu0 %v2364, 24
      %v2434 = vpop.permute.xlu0 %2433
      %v2441 = vsel %vm1039, %v1922, %v2376
      %v2442 = vsel %vm1039, %v1925, %v2378
      %v2443 = vsel %vm1039, %v1930, %v2380
      %v2444 = vsel %vm1039, %v2170, %v2382
      %v2445 = vsel %vm1039, %v2173, %v2384
      %v2446 = vsel %vm1039, %v2178, %v2386
      %vm2447 = vcmask 130048
      %v2448 = vsel %vm2447, %v2441, %v2400
      %v2449 = vsel %vm2447, %v2442, %v2402
      %v2450 = vsel %vm2447, %v2443, %v2404
      %v2451 = vsel %vm2447, %v2444, %v2406
      %v2452 = vsel %vm2447, %v2445, %v2408
      %v2453 = vsel %vm2447, %v2446, %v2410
      %v2454 = vsel %vm1591, %v2448, %v2424
      %v2455 = vsel %vm1591, %v2449, %v2426
      %v2456 = vsel %vm1591, %v2450, %v2428
      %v2457 = vsel %vm1591, %v2451, %v2430
      %v2458 = vsel %vm1591, %v2452, %v2432
      %v2459 = vsel %vm1591, %v2453, %v2434
      %v2460 = vpack.c.bf16 %v2455, %v2454
      %v2461 = vpack.c.bf16 %v2457, %v2456
      %v2462 = vpack.c.bf16 %v2459, %v2458
      %v2463 = vld [vmem:[%s620] sm:$0xf]
      %v2464 = vld [vmem:[%s620 + $0x4] sm:$0xf]
      %v2465 = vld [vmem:[%s620 + $0x8] sm:$0xf]
      %v2466 = vld [vmem:[%s620 + $0xc] sm:$0xf]
      %v2467 = vld [vmem:[%s623] sm:$0x1]
      %v2469 = vlaneseq
      %v2470 = vshrl.u32 %v2469, 7
      %v2471 = vsub.s32 0, %v2470
      %v2472 = vrot.slane %v2467, %v2471
      %v2478 = vunpack.c.l.b16 %v2463
      %v2479 = vunpack.c.l.b16 %v2464
      %v2480 = vunpack.c.l.b16 %v2465
      %v2481 = vunpack.c.l.b16 %v2466
      %v2482 = vpack.c.b16 %v2479, %v2478
      %v2483 = vpack.c.b16 %v2481, %v2480
      %v2487 = vsel %vm679, %v2460, 0
      %v2490 = vsel %vm679, %v2461, 0
      %v2493 = vsel %vm679, %v2462, 0
      %2495 = vmatprep.subr.bf16.mxu0 0
      %2496 = vmatpush1.bf16.msra.mxu0 %v2482
      %2497 = vmatprep.subr.bf16.mxu0 0
      %2498 = vmatpush1.bf16.msra.mxu0 %v2483
      %2499 = vmatprep.subr.bf16.mxu0 0
      %2500 = vmatpush1.bf16.msra.mxu0 0
      %2501 = vmatprep.subr.bf16.mxu0 0
      %2502 = vmatpush1.bf16.msra.mxu0 0
      %2503 = vmatprep.subr.bf16.mxu0 0
      %2504 = vmatpush1.bf16.msra.mxu0 0
      %2505 = vmatprep.subr.bf16.mxu0 0
      %2506 = vmatpush1.bf16.msra.mxu0 0
      %2507 = vmatprep.subr.bf16.mxu0 0
      %2508 = vmatpush1.bf16.msra.mxu0 0
      %2509 = vmatprep.subr.bf16.mxu0 0
      %2510 = vmatpush1.bf16.msra.mxu0 0
      %2511 = vmatprep.subr.bf16.mxu0 0
      %2512 = vmatpush1.bf16.msra.mxu0 0
      %2513 = vmatprep.subr.bf16.mxu0 0
      %2514 = vmatpush1.bf16.msra.mxu0 0
      %2515 = vmatprep.subr.bf16.mxu0 0
      %2516 = vmatpush1.bf16.msra.mxu0 0
      %2517 = vmatprep.subr.bf16.mxu0 0
      %2518 = vmatpush1.bf16.msra.mxu0 0
      %2519 = vmatprep.subr.bf16.mxu0 0
      %2520 = vmatpush1.bf16.msra.mxu0 0
      %2521 = vmatprep.subr.bf16.mxu0 0
      %2522 = vmatpush1.bf16.msra.mxu0 0
      %2523 = vmatprep.subr.bf16.mxu0 0
      %2524 = vmatpush1.bf16.msra.mxu0 0
      %2525 = vmatprep.subr.bf16.mxu0 0
      %2526 = vmatpush1.bf16.msra.mxu0 0
      %2527 = vmatprep.mubr.bf16.mxu0 0
      %2528 = vmatmul.mubr.bf16.gmra.mrb[0].mxu0 %v2487
      %v2529 = vpop.f32.mrb[0].mxu0
      %v2530 = vadd.f32 %v2472, %v2529
      %v2531 = vpop.f32.mrb[0].mxu0
      %v2532 = vpop.f32.mrb[0].mxu0
      %v2533 = vadd.f32 %v2472, %v2532
      %v2534 = vpop.f32.mrb[0].mxu0
      %2535 = vmatprep.mubr.bf16.mxu0 0
      %2536 = vmatmul.mubr.bf16.gmra.mrb[0].mxu0 %v2490
      %v2537 = vpop.f32.mrb[0].mxu0
      %v2538 = vadd.f32 %v2472, %v2537
      %v2539 = vpop.f32.mrb[0].mxu0
      %v2540 = vpop.f32.mrb[0].mxu0
      %v2541 = vadd.f32 %v2472, %v2540
      %v2542 = vpop.f32.mrb[0].mxu0
      %2543 = vmatprep.mubr.bf16.mxu0 0
      %2544 = vmatmul.mubr.bf16.gmra.mrb[0].mxu0 %v2493
      %v2545 = vpop.f32.mrb[0].mxu0
      %v2546 = vadd.f32 %v2472, %v2545
      %v2547 = vpop.f32.mrb[0].mxu0
      %v2548 = vpop.f32.mrb[0].mxu0
      %v2549 = vadd.f32 %v2472, %v2548
      %v2550 = vpop.f32.mrb[0].mxu0
      %2551 = vdwg.mxu0
      %v2552 = vadd.f32 %v671, %v2530
      %v2553 = vadd.f32 %v672, %v2533
      %v2554 = vadd.f32 %v673, %v2538
      %v2555 = vadd.f32 %v674, %v2541
      %v2556 = vadd.f32 %v675, %v2546
      %v2557 = vadd.f32 %v676, %v2549
      %v2558 = vld [vmem:[%s626] sm:$0x1]
      %v2559 = vld [vmem:[%s629] sm:$0x1]
      %v2560 = vsel %vm679, %v2552, 0.0
      %2561 = vadd.xlane.f32.xlu0 %v2560
      %v2562 = vpop.xlane.xlu0 %2561
      %v2563 = vsel %vm679, %v2553, 0.0
      %2564 = vadd.xlane.f32.xlu0 %v2563
      %v2565 = vpop.xlane.xlu0 %2564
      %v2566 = vsel %vm679, %v2554, 0.0
      %2567 = vadd.xlane.f32.xlu0 %v2566
      %v2568 = vpop.xlane.xlu0 %2567
      %v2569 = vsel %vm679, %v2555, 0.0
      %2570 = vadd.xlane.f32.xlu0 %v2569
      %v2571 = vpop.xlane.xlu0 %2570
      %v2572 = vsel %vm679, %v2556, 0.0
      %2573 = vadd.xlane.f32.xlu0 %v2572
      %v2574 = vpop.xlane.xlu0 %2573
      %v2575 = vsel %vm679, %v2557, 0.0
      %2576 = vadd.xlane.f32.xlu0 %v2575
      %v2577 = vpop.xlane.xlu0 %2576
      %v2578 = vmul.f32 %v2562, %v698
      %v2579 = vmul.f32 %v2565, %v698
      %v2580 = vmul.f32 %v2568, %v698
      %v2581 = vmul.f32 %v2571, %v698
      %v2582 = vmul.f32 %v2574, %v698
      %v2583 = vmul.f32 %v2577, %v698
      %v2584 = vsub.f32 %v2552, %v2578
      %v2585 = vsub.f32 %v2553, %v2579
      %v2586 = vsub.f32 %v2554, %v2580
      %v2587 = vsub.f32 %v2555, %v2581
      %v2588 = vsub.f32 %v2556, %v2582
      %v2589 = vsub.f32 %v2557, %v2583
      %v2590 = vmul.f32 %v2584, %v2584
      %v2591 = vmul.f32 %v2585, %v2585
      %v2592 = vmul.f32 %v2586, %v2586
      %v2593 = vmul.f32 %v2587, %v2587
      %v2594 = vmul.f32 %v2588, %v2588
      %v2595 = vmul.f32 %v2589, %v2589
      %v2596 = vsel %vm679, %v2590, 0.0
      %2597 = vadd.xlane.f32.xlu0 %v2596
      %v2598 = vpop.xlane.xlu0 %2597
      %v2599 = vsel %vm679, %v2591, 0.0
      %2600 = vadd.xlane.f32.xlu0 %v2599
      %v2601 = vpop.xlane.xlu0 %2600
      %v2602 = vsel %vm679, %v2592, 0.0
      %2603 = vadd.xlane.f32.xlu0 %v2602
      %v2604 = vpop.xlane.xlu0 %2603
      %v2605 = vsel %vm679, %v2593, 0.0
      %2606 = vadd.xlane.f32.xlu0 %v2605
      %v2607 = vpop.xlane.xlu0 %2606
      %v2608 = vsel %vm679, %v2594, 0.0
      %2609 = vadd.xlane.f32.xlu0 %v2608
      %v2610 = vpop.xlane.xlu0 %2609
      %v2611 = vsel %vm679, %v2595, 0.0
      %2612 = vadd.xlane.f32.xlu0 %v2611
      %v2613 = vpop.xlane.xlu0 %2612
      %v2614 = vmul.f32 %v2598, %v698
      %v2615 = vmul.f32 %v2601, %v698
      %v2616 = vmul.f32 %v2604, %v698
      %v2617 = vmul.f32 %v2607, %v698
      %v2618 = vmul.f32 %v2610, %v698
      %v2619 = vmul.f32 %v2613, %v698
      %v2620 = vadd.f32 %v2614, 1e-05
      %v2621 = vadd.f32 %v2615, 1e-05
      %v2622 = vadd.f32 %v2616, 1e-05
      %v2623 = vadd.f32 %v2617, 1e-05
      %v2624 = vadd.f32 %v2618, 1e-05
      %v2625 = vadd.f32 %v2619, 1e-05
      %v2626 = vrsqrt.pop %v2620
      %v2627 = vrsqrt.pop %v2621
      %v2628 = vrsqrt.pop %v2622
      %v2629 = vrsqrt.pop %v2623
      %v2630 = vrsqrt.pop %v2624
      %v2631 = vrsqrt.pop %v2625
      %v2632 = vmul.f32 %v2584, %v2626
      %v2633 = vmul.f32 %v2585, %v2627
      %v2634 = vmul.f32 %v2586, %v2628
      %v2635 = vmul.f32 %v2587, %v2629
      %v2636 = vmul.f32 %v2588, %v2630
      %v2637 = vmul.f32 %v2589, %v2631
      %v2639 = vlaneseq
      %v2640 = vshrl.u32 %v2639, 7
      %v2641 = vsub.s32 0, %v2640
      %v2642 = vrot.slane %v2558, %v2641
      %v2644 = vmul.f32 %v2632, %v2642
      %v2645 = vmul.f32 %v2633, %v2642
      %v2646 = vmul.f32 %v2634, %v2642
      %v2647 = vmul.f32 %v2635, %v2642
      %v2648 = vmul.f32 %v2636, %v2642
      %v2649 = vmul.f32 %v2637, %v2642
      %v2651 = vlaneseq
      %v2652 = vshrl.u32 %v2651, 7
      %v2653 = vsub.s32 0, %v2652
      %v2654 = vrot.slane %v2559, %v2653
      %v2656 = vadd.f32 %v2644, %v2654
      %v2657 = vadd.f32 %v2645, %v2654
      %v2658 = vadd.f32 %v2646, %v2654
      %v2659 = vadd.f32 %v2647, %v2654
      %v2660 = vadd.f32 %v2648, %v2654
      %v2661 = vadd.f32 %v2649, %v2654
      %v2662 = vpack.c.bf16 %v2657, %v2656
      %v2663 = vpack.c.bf16 %v2659, %v2658
      %v2664 = vpack.c.bf16 %v2661, %v2660
      %v2665 = vld [vmem:[%s634] sm:$0xf]
      %v2666 = vld [vmem:[%s634 + $0x4] sm:$0xf]
      %v2667 = vld [vmem:[%s634 + $0x8] sm:$0xf]
      %v2668 = vld [vmem:[%s634 + $0xc] sm:$0xf]
      %v2669 = vld [vmem:[%s637] sm:$0x1]
      %v2671 = vlaneseq
      %v2672 = vshrl.u32 %v2671, 7
      %v2673 = vsub.s32 0, %v2672
      %v2674 = vrot.slane %v2669, %v2673
      %v2680 = vunpack.c.l.b16 %v2665
      %v2681 = vunpack.c.l.b16 %v2666
      %v2682 = vunpack.c.l.b16 %v2667
      %v2683 = vunpack.c.l.b16 %v2668
      %v2684 = vpack.c.b16 %v2681, %v2680
      %v2685 = vpack.c.b16 %v2683, %v2682
      %v2689 = vsel %vm679, %v2662, 0
      %v2692 = vsel %vm679, %v2663, 0
      %v2695 = vsel %vm679, %v2664, 0
      %2697 = vmatprep.subr.bf16.mxu0 0
      %2698 = vmatpush1.bf16.msra.mxu0 %v2684
      %2699 = vmatprep.subr.bf16.mxu0 0
      %2700 = vmatpush1.bf16.msra.mxu0 %v2685
      %2701 = vmatprep.subr.bf16.mxu0 0
      %2702 = vmatpush1.bf16.msra.mxu0 0
      %2703 = vmatprep.subr.bf16.mxu0 0
      %2704 = vmatpush1.bf16.msra.mxu0 0
      %2705 = vmatprep.subr.bf16.mxu0 0
      %2706 = vmatpush1.bf16.msra.mxu0 0
      %2707 = vmatprep.subr.bf16.mxu0 0
      %2708 = vmatpush1.bf16.msra.mxu0 0
      %2709 = vmatprep.subr.bf16.mxu0 0
      %2710 = vmatpush1.bf16.msra.mxu0 0
      %2711 = vmatprep.subr.bf16.mxu0 0
      %2712 = vmatpush1.bf16.msra.mxu0 0
      %2713 = vmatprep.subr.bf16.mxu0 0
      %2714 = vmatpush1.bf16.msra.mxu0 0
      %2715 = vmatprep.subr.bf16.mxu0 0
      %2716 = vmatpush1.bf16.msra.mxu0 0
      %2717 = vmatprep.subr.bf16.mxu0 0
      %2718 = vmatpush1.bf16.msra.mxu0 0
      %2719 = vmatprep.subr.bf16.mxu0 0
      %2720 = vmatpush1.bf16.msra.mxu0 0
      %2721 = vmatprep.subr.bf16.mxu0 0
      %2722 = vmatpush1.bf16.msra.mxu0 0
      %2723 = vmatprep.subr.bf16.mxu0 0
      %2724 = vmatpush1.bf16.msra.mxu0 0
      %2725 = vmatprep.subr.bf16.mxu0 0
      %2726 = vmatpush1.bf16.msra.mxu0 0
      %2727 = vmatprep.subr.bf16.mxu0 0
      %2728 = vmatpush1.bf16.msra.mxu0 0
      %2729 = vmatprep.mubr.bf16.mxu0 0
      %2730 = vmatmul.mubr.bf16.gmra.mrb[0].mxu0 %v2689
      %v2731 = vpop.f32.mrb[0].mxu0
      %v2732 = vadd.f32 %v2674, %v2731
      %v2733 = vpop.f32.mrb[0].mxu0
      %v2734 = vpop.f32.mrb[0].mxu0
      %v2735 = vadd.f32 %v2674, %v2734
      %v2736 = vpop.f32.mrb[0].mxu0
      %2737 = vmatprep.mubr.bf16.mxu0 0
      %2738 = vmatmul.mubr.bf16.gmra.mrb[0].mxu0 %v2692
      %v2739 = vpop.f32.mrb[0].mxu0
      %v2740 = vadd.f32 %v2674, %v2739
      %v2741 = vpop.f32.mrb[0].mxu0
      %v2742 = vpop.f32.mrb[0].mxu0
      %v2743 = vadd.f32 %v2674, %v2742
      %v2744 = vpop.f32.mrb[0].mxu0
      %2745 = vmatprep.mubr.bf16.mxu0 0
      %2746 = vmatmul.mubr.bf16.gmra.mrb[0].mxu0 %v2695
      %v2747 = vpop.f32.mrb[0].mxu0
      %v2748 = vadd.f32 %v2674, %v2747
      %v2749 = vpop.f32.mrb[0].mxu0
      %v2750 = vpop.f32.mrb[0].mxu0
      %v2751 = vadd.f32 %v2674, %v2750
      %v2752 = vpop.f32.mrb[0].mxu0
      %2753 = vdwg.mxu0
      %v2754 = vmax.f32 %v2732, 0.0
      %v2755 = vmax.f32 %v2735, 0.0
      %v2756 = vmax.f32 %v2740, 0.0
      %v2757 = vmax.f32 %v2743, 0.0
      %v2758 = vmax.f32 %v2748, 0.0
      %v2759 = vmax.f32 %v2751, 0.0
      %v2760 = vpack.c.bf16 %v2755, %v2754
      %v2761 = vpack.c.bf16 %v2757, %v2756
      %v2762 = vpack.c.bf16 %v2759, %v2758
      %v2763 = vld [vmem:[%s642] sm:$0xf]
      %v2764 = vld [vmem:[%s642 + $0x4] sm:$0xf]
      %v2765 = vld [vmem:[%s642 + $0x8] sm:$0xf]
      %v2766 = vld [vmem:[%s642 + $0xc] sm:$0xf]
      %v2767 = vld [vmem:[%s642 + $0x10] sm:$0xf]
      %v2768 = vld [vmem:[%s642 + $0x14] sm:$0xf]
      %v2769 = vld [vmem:[%s642 + $0x18] sm:$0xf]
      %v2770 = vld [vmem:[%s642 + $0x1c] sm:$0xf]
      %v2771 = vld [vmem:[%s645] sm:$0x1]
      %v2773 = vlaneseq
      %v2774 = vshrl.u32 %v2773, 7
      %v2775 = vsub.s32 0, %v2774
      %v2776 = vrot.slane %v2771, %v2775
      %v2786 = vunpack.c.l.b16 %v2763
      %v2787 = vunpack.c.l.b16 %v2764
      %v2788 = vunpack.c.l.b16 %v2765
      %v2789 = vunpack.c.l.b16 %v2766
      %v2790 = vunpack.c.l.b16 %v2767
      %v2791 = vunpack.c.l.b16 %v2768
      %v2792 = vunpack.c.l.b16 %v2769
      %v2793 = vunpack.c.l.b16 %v2770
      %v2794 = vpack.c.b16 %v2787, %v2786
      %v2795 = vpack.c.b16 %v2789, %v2788
      %v2796 = vpack.c.b16 %v2791, %v2790
      %v2797 = vpack.c.b16 %v2793, %v2792
      %vm2802 = vcmask 523264
      %v2804 = vsel %vm2802, %v2760, 0
      %v2807 = vsel %vm2802, %v2761, 0
      %v2810 = vsel %vm2802, %v2762, 0
      %2812 = vmatprep.subr.bf16.mxu0 0
      %2813 = vmatpush1.bf16.msra.mxu0 %v2794
      %2814 = vmatprep.subr.bf16.mxu0 0
      %2815 = vmatpush1.bf16.msra.mxu0 %v2795
      %2816 = vmatprep.subr.bf16.mxu0 0
      %2817 = vmatpush1.bf16.msra.mxu0 %v2796
      %2818 = vmatprep.subr.bf16.mxu0 0
      %2819 = vmatpush1.bf16.msra.mxu0 %v2797
      %2820 = vmatprep.subr.bf16.mxu0 0
      %2821 = vmatpush1.bf16.msra.mxu0 0
      %2822 = vmatprep.subr.bf16.mxu0 0
      %2823 = vmatpush1.bf16.msra.mxu0 0
      %2824 = vmatprep.subr.bf16.mxu0 0
      %2825 = vmatpush1.bf16.msra.mxu0 0
      %2826 = vmatprep.subr.bf16.mxu0 0
      %2827 = vmatpush1.bf16.msra.mxu0 0
      %2828 = vmatprep.subr.bf16.mxu0 0
      %2829 = vmatpush1.bf16.msra.mxu0 0
      %2830 = vmatprep.subr.bf16.mxu0 0
      %2831 = vmatpush1.bf16.msra.mxu0 0
      %2832 = vmatprep.subr.bf16.mxu0 0
      %2833 = vmatpush1.bf16.msra.mxu0 0
      %2834 = vmatprep.subr.bf16.mxu0 0
      %2835 = vmatpush1.bf16.msra.mxu0 0
      %2836 = vmatprep.subr.bf16.mxu0 0
      %2837 = vmatpush1.bf16.msra.mxu0 0
      %2838 = vmatprep.subr.bf16.mxu0 0
      %2839 = vmatpush1.bf16.msra.mxu0 0
      %2840 = vmatprep.subr.bf16.mxu0 0
      %2841 = vmatpush1.bf16.msra.mxu0 0
      %2842 = vmatprep.subr.bf16.mxu0 0
      %2843 = vmatpush1.bf16.msra.mxu0 0
      %2844 = vmatprep.mubr.bf16.mxu0 0
      %2845 = vmatmul.mubr.bf16.gmra.mrb[0].mxu0 %v2804
      %v2846 = vpop.f32.mrb[0].mxu0
      %v2847 = vadd.f32 %v2776, %v2846
      %v2848 = vpop.f32.mrb[0].mxu0
      %v2849 = vpop.f32.mrb[0].mxu0
      %v2850 = vadd.f32 %v2776, %v2849
      %v2851 = vpop.f32.mrb[0].mxu0
      %2852 = vmatprep.mubr.bf16.mxu0 0
      %2853 = vmatmul.mubr.bf16.gmra.mrb[0].mxu0 %v2807
      %v2854 = vpop.f32.mrb[0].mxu0
      %v2855 = vadd.f32 %v2776, %v2854
      %v2856 = vpop.f32.mrb[0].mxu0
      %v2857 = vpop.f32.mrb[0].mxu0
      %v2858 = vadd.f32 %v2776, %v2857
      %v2859 = vpop.f32.mrb[0].mxu0
      %2860 = vmatprep.mubr.bf16.mxu0 0
      %2861 = vmatmul.mubr.bf16.gmra.mrb[0].mxu0 %v2810
      %v2862 = vpop.f32.mrb[0].mxu0
      %v2863 = vadd.f32 %v2776, %v2862
      %v2864 = vpop.f32.mrb[0].mxu0
      %v2865 = vpop.f32.mrb[0].mxu0
      %v2866 = vadd.f32 %v2776, %v2865
      %v2867 = vpop.f32.mrb[0].mxu0
      %2868 = vdwg.mxu0
      %v2869 = vadd.f32 %v2552, %v2847
      %v2870 = vadd.f32 %v2553, %v2850
      %v2871 = vadd.f32 %v2554, %v2855
      %v2872 = vadd.f32 %v2555, %v2858
      %v2873 = vadd.f32 %v2556, %v2863
      %v2874 = vadd.f32 %v2557, %v2866
      %2875 = vst.msk [vmem:[%s651] sm:$0xff] %vm679, %v2869
      %2876 = vst.msk [vmem:[%s651 + $0x8] sm:$0xff] %vm679, %v2870
      %2877 = vst.msk [vmem:[%s651 + $0x10] sm:$0xff] %vm679, %v2871
      %2878 = vst.msk [vmem:[%s651 + $0x18] sm:$0xff] %vm679, %v2872
      %2879 = vst.msk [vmem:[%s651 + $0x20] sm:$0xff] %vm679, %v2873
      %2880 = vst.msk [vmem:[%s651 + $0x28] sm:$0xff] %vm679, %v2874
      %s2881 = smul.u32 2, %s28
      %p2882 = scmp.lt.s32.totalorder %s2881, 1
      %s2883 = scalar_select %p2882, %s2881, 1
      %s2884 = smul.addr %s2883, 3
      %s2885 = smul.addr %s2884, 8
      %s2886 = scalar_lea.vmem %s13, %s2885
      // Predicated region
      $region77: #{_lambda_.4} parent=71 // pred_check
        %p2887 = pneg %p392
      $region78: #{_lambda_.4} parent=71 // pred_check_branch
        %2889 = sbr.rel (%p2887) target = $region80
      $region79: #{_lambda_.4} parent=71 // pred_region
        %s2890 = smul.u32 2, %s28
      $region80: #{_lambda_.4} parent=71 // pred_fallthru
        _
      // Predicated region
      $region81: #{_lambda_.4} parent=71 // pred_check
        %p2891 = pneg %p392
      $region82: #{_lambda_.4} parent=71 // pred_check_branch
        %2893 = sbr.rel (%p2891) target = $region84
      $region83: #{_lambda_.4} parent=71 // pred_region
        %s2894 = smul.u32 2, %s28
        %p2895 = scmp.lt.s32.totalorder %s2894, 1
        %s2896 = scalar_select %p2895, %s2894, 1
        %s2897 = smul.addr %s2896, 3
        %s2898 = smul.addr %s2897, 8
        %s2899 = scalar_lea.vmem %s13, %s2898
      $region84: #{_lambda_.4} parent=71 // pred_fallthru
        _
    $region72: #{_lambda_.4} parent=5 // pred_fallthru
      _
    %p2900 = scmp.le.s32.totalorder 2, %s19
    // Predicated region
    $region85: #{_lambda_.4} parent=5 // pred_check
      %p2901 = pneg %p2900
    $region86: #{_lambda_.4} parent=5 // pred_check_branch
      %2903 = sbr.rel (%p2901) target = $region88
    $region87: #{_lambda_.4} parent=5 // pred_region
      %s2904 = ssub.s32 %s19, 2
    $region88: #{_lambda_.4} parent=5 // pred_fallthru
      _
  $region6: #{_lambda_.4} parent=0 // loop_footer
    %s23 = sadd.s32 1, %s19
  $region7: #{_lambda_.4} parent=0 // loop_footer_branch
    %18 = sbr.rel target = $region3
  $region8: #{_lambda_.4} parent=0 // loop_exit
    _

</llo_original>
